<compile_context>
chip_gen: v6e
topology: v6e:2x2x1
jax: 0.10.0
libtpu: 0.0.40
codegen_flags: <defaults>
</compile_context>

<pallas_src>
import functools

import jax
import jax.numpy as jnp
from jax import lax
from jax.experimental import pallas as pl
from jax.experimental.pallas import tpu as pltpu

F32 = jnp.float32
BF16 = jnp.bfloat16

FEAT = 1000        # backbone feature dim
FEAT_PAD = 1024    # padded to a multiple of 128 lanes
HID = 512          # MLP hidden dim
EMB = 64           # attention embedding dim
LANE = 128
NUM_CLASS = 2
CLS_PAD = 8        # classifier rows padded to a sublane-dense 8


def _deit_attn1_kernel(nv, ni,
                       x_cat_ref, w1_ref, b1_ref, w2_ref, b2_ref,
                       video_v_ref, cl_wt_ref, cl_b_ref, out_ref):
    # ---- Layer 1 of both MLP branches fused into one matmul --------------
    # x_cat = [video_q ; img_k]   (bf16, [Nv+Ni, 1024])
    # w1    = [vq_w1 | ik_w1]     (bf16, [1024, 1024])
    h = jnp.dot(x_cat_ref[...], w1_ref[...], preferred_element_type=F32)
    h = jnp.maximum(h + b1_ref[...], 0.0).astype(BF16)        # [Nv+Ni, 1024]

    # ---- Layer 2 via block-diagonal weight (zeros kill cross terms) ------
    # w2 = [[vq_w2, 0], [0, ik_w2]]   (bf16, [1024, 128])
    h2 = jnp.dot(h, w2_ref[...], preferred_element_type=F32)  # [Nv+Ni, 128]
    q = h2[:nv, 0:EMB] + b2_ref[:, 0:EMB]                     # [Nv, 64]
    k = h2[nv:nv + ni, EMB:2 * EMB] + b2_ref[:, EMB:2 * EMB]  # [Ni, 64]

    # ---- A = mean_rows(K @ Q^T) == mean_rows(K) @ Q^T ; softmax over Nv --
    k_mean = jnp.mean(k, axis=0, keepdims=True)               # [1, 64]
    a = jnp.dot(k_mean, q.T, preferred_element_type=F32)      # [1, Nv]
    a = jnp.exp(a - jnp.max(a, axis=1, keepdims=True))
    a_soft = (a / jnp.sum(a, axis=1, keepdims=True)).astype(BF16)  # [1, Nv]

    # ---- out = softmax(A) @ (V @ Wc + bc) == (softmax(A) @ V) @ Wc + bc --
    v_mix = jnp.dot(a_soft, video_v_ref[...],
                    preferred_element_type=F32)               # [1, 1024]
    # cl_wt is the transposed classifier weight, zero-padded: bf16 [8, 1024].
    out = lax.dot_general(v_mix.astype(BF16), cl_wt_ref[...],
                          dimension_numbers=(((1,), (1,)), ((), ())),
                          preferred_element_type=F32)         # [1, 8]
    out_ref[...] = out + cl_b_ref[...]


def prepare_params(params):
    """One-time weight re-layout: pad, fuse, transpose, cast to bf16.

    Called once (outside the per-call path) so every forward call only
    streams the already-packed bf16 slabs from HBM.
    """
    w1 = jnp.zeros((FEAT_PAD, 2 * HID), F32)
    w1 = w1.at[:FEAT, :HID].set(params["vq_w1"])
    w1 = w1.at[:FEAT, HID:].set(params["ik_w1"]).astype(BF16)       # [1024,1024]
    b1 = jnp.concatenate([params["vq_b1"], params["ik_b1"]],
                         axis=1).astype(F32)                         # [1, 1024]

    w2 = jnp.zeros((2 * HID, LANE), F32)
    w2 = w2.at[:HID, :EMB].set(params["vq_w2"])
    w2 = w2.at[HID:, EMB:2 * EMB].set(params["ik_w2"]).astype(BF16)  # [1024,128]
    b2 = jnp.concatenate([params["vq_b2"], params["ik_b2"]],
                         axis=1).astype(F32)                         # [1, 128]

    # Transposed, zero-padded classifier weight: [8, 1024] bf16 (rows 0:2 real).
    cl_wt = jnp.zeros((CLS_PAD, FEAT_PAD), F32)
    cl_wt = cl_wt.at[:NUM_CLASS, :FEAT].set(params["cl_w"].T).astype(BF16)
    cl_b = jnp.zeros((1, CLS_PAD), F32).at[:, :NUM_CLASS].set(params["cl_b"])

    return {"w1": w1, "b1": b1, "w2": w2, "b2": b2,
            "cl_wt": cl_wt, "cl_b": cl_b}


@jax.jit
def deit_attn1(video_v, video_q, img_k, prep):
    """Run the fused attention-head kernel on pre-packed params. Returns [1, 2]."""
    nv = video_q.shape[0]
    ni = img_k.shape[0]

    def pad_feat(x):
        return jnp.pad(x, ((0, 0), (0, FEAT_PAD - FEAT)))

    # Per-call activation plumbing only (tiny: ~(Nv+Ni)*1024 bf16 each).
    x_cat = jnp.concatenate([pad_feat(video_q), pad_feat(img_k)],
                            axis=0).astype(BF16)               # [Nv+Ni, 1024]
    v_pad = pad_feat(video_v).astype(BF16)                     # [Nv, 1024]

    kernel = functools.partial(_deit_attn1_kernel, nv, ni)
    args = (x_cat, prep["w1"], prep["b1"], prep["w2"], prep["b2"],
            v_pad, prep["cl_wt"], prep["cl_b"])

    bytes_accessed = sum(a.size * a.dtype.itemsize for a in args) + CLS_PAD * 4
    flops = 2 * (nv + ni) * FEAT_PAD * (2 * HID)      \
        + 2 * (nv + ni) * (2 * HID) * LANE            \
        + 2 * nv * EMB                                \
        + 2 * nv * FEAT_PAD                           \
        + 2 * FEAT_PAD * CLS_PAD

    # Everything fits comfortably in VMEM (~2.5 MB); single un-gridded kernel
    # with whole-array VMEM-resident blocks.
    out = pl.pallas_call(
        kernel,
        out_shape=jax.ShapeDtypeStruct((1, CLS_PAD), F32),
        in_specs=[pl.BlockSpec(memory_space=pltpu.MemorySpace.VMEM)] * len(args),
        out_specs=pl.BlockSpec(memory_space=pltpu.MemorySpace.VMEM),
        cost_estimate=pl.CostEstimate(flops=flops, transcendentals=nv,
                                      bytes_accessed=bytes_accessed),
    )(*args)
    return out[:, :NUM_CLASS]


def _reference(video_v, video_q, img_k, p):
    """Original (unfused) op order, with the same bf16 rounding points."""
    bf = lambda x: x.astype(BF16).astype(F32)
    q_h = jnp.maximum(bf(video_q) @ bf(p["vq_w1"]) + p["vq_b1"], 0.0)
    q = bf(q_h) @ bf(p["vq_w2"]) + p["vq_b2"]
    k_h = jnp.maximum(bf(img_k) @ bf(p["ik_w1"]) + p["ik_b1"], 0.0)
    k = bf(k_h) @ bf(p["ik_w2"]) + p["ik_b2"]
    a = (k @ q.T).mean(axis=0, keepdims=True)
    a = jax.nn.softmax(a, axis=1)
    prob = video_v @ bf(p["cl_w"]) + p["cl_b"]
    return a @ prob


def make_params(key):
    ks = jax.random.split(key, 6)
    s = 0.02
    return {
        # video_query: Linear(1000,512) -> ReLU -> Linear(512,64)
        "vq_w1": s * jax.random.normal(ks[0], (FEAT, HID), F32),
        "vq_b1": jnp.zeros((1, HID), F32),
        "vq_w2": s * jax.random.normal(ks[1], (HID, EMB), F32),
        "vq_b2": jnp.zeros((1, EMB), F32),
        # img_key: Linear(1000,512) -> ReLU -> Linear(512,64)
        "ik_w1": s * jax.random.normal(ks[2], (FEAT, HID), F32),
        "ik_b1": jnp.zeros((1, HID), F32),
        "ik_w2": s * jax.random.normal(ks[3], (HID, EMB), F32),
        "ik_b2": jnp.zeros((1, EMB), F32),
        # classifier: Linear(1000, 2)
        "cl_w": s * jax.random.normal(ks[4], (FEAT, NUM_CLASS), F32),
        "cl_b": jnp.zeros((1, NUM_CLASS), F32),
    }


if __name__ == "__main__":
    key = jax.random.PRNGKey(0)
    k_vv, k_vq, k_ik, k_p = jax.random.split(key, 4)

    Nv = 8   # number of video frames (after squeeze(0))
    Ni = 4   # number of images (after squeeze(0))

    # Backbone feature outputs (stand-ins for DeiT-tiny distilled heads, 1000-dim).
    video_v = jax.random.normal(k_vv, (Nv, FEAT), F32)
    video_q = jax.random.normal(k_vq, (Nv, FEAT), F32)
    img_k = jax.random.normal(k_ik, (Ni, FEAT), F32)

    params = make_params(k_p)
    prep = jax.tree_util.tree_map(jax.block_until_ready,
                                  prepare_params(params))   # one-time re-layout

    out = jax.block_until_ready(deit_attn1(video_v, video_q, img_k, prep))
    ref = _reference(video_v, video_q, img_k, params)

    assert out.shape == (1, NUM_CLASS), out.shape
    assert jnp.allclose(out, ref, atol=1e-2, rtol=1e-2), (out, ref)

    print("KERNEL_OK")
</pallas_src>

<mosaic_0001>
module attributes {stable_mosaic.version = 11 : i64} {
  func.func @_deit_attn1_kernel(%arg0: memref<12x1024xbf16, #tpu.memory_space<vmem>>, %arg1: memref<1024x1024xbf16, #tpu.memory_space<vmem>>, %arg2: memref<1x1024xf32, #tpu.memory_space<vmem>>, %arg3: memref<1024x128xbf16, #tpu.memory_space<vmem>>, %arg4: memref<1x128xf32, #tpu.memory_space<vmem>>, %arg5: memref<8x1024xbf16, #tpu.memory_space<vmem>>, %arg6: memref<8x1024xbf16, #tpu.memory_space<vmem>>, %arg7: memref<1x8xf32, #tpu.memory_space<vmem>>, %arg8: memref<1x8xf32, #tpu.memory_space<vmem>>) attributes {dimension_semantics = [], scalar_prefetch = 0 : i64, scratch_operands = 0 : i64, tpu.core_type = #tpu.core_type<tc>} {
    %c0 = arith.constant 0 : index
    %c0_0 = arith.constant 0 : index
    %0 = vector.load %arg0[%c0, %c0_0] : memref<12x1024xbf16, #tpu.memory_space<vmem>>, vector<12x1024xbf16>
    %c0_1 = arith.constant 0 : index
    %c0_2 = arith.constant 0 : index
    %1 = vector.load %arg1[%c0_1, %c0_2] : memref<1024x1024xbf16, #tpu.memory_space<vmem>>, vector<1024x1024xbf16>
    %cst = arith.constant dense<0.000000e+00> : vector<12x1024xf32>
    %2 = tpu.matmul %0, %1, %cst {dimension_numbers = #tpu.dot_dimension_numbers<[1], [0], [0], [1], [0, 0, 1, 1], [], []>} : vector<12x1024xbf16>, vector<1024x1024xbf16>, vector<12x1024xf32> -> vector<12x1024xf32>
    %c0_3 = arith.constant 0 : index
    %c0_4 = arith.constant 0 : index
    %3 = vector.load %arg2[%c0_3, %c0_4] : memref<1x1024xf32, #tpu.memory_space<vmem>>, vector<1x1024xf32>
    %4 = vector.broadcast %3 : vector<1x1024xf32> to vector<12x1024xf32>
    %5 = arith.addf %2, %4 : vector<12x1024xf32>
    %cst_5 = arith.constant 0.000000e+00 : f32
    %6 = vector.broadcast %cst_5 : f32 to vector<12x1024xf32>
    %7 = arith.maximumf %5, %6 : vector<12x1024xf32>
    %8 = arith.truncf %7 : vector<12x1024xf32> to vector<12x1024xbf16>
    %c0_6 = arith.constant 0 : index
    %c0_7 = arith.constant 0 : index
    %9 = vector.load %arg3[%c0_6, %c0_7] : memref<1024x128xbf16, #tpu.memory_space<vmem>>, vector<1024x128xbf16>
    %cst_8 = arith.constant dense<0.000000e+00> : vector<12x128xf32>
    %10 = tpu.matmul %8, %9, %cst_8 {dimension_numbers = #tpu.dot_dimension_numbers<[1], [0], [0], [1], [0, 0, 1, 1], [], []>} : vector<12x1024xbf16>, vector<1024x128xbf16>, vector<12x128xf32> -> vector<12x128xf32>
    %11 = vector.extract_strided_slice %10 {offsets = [0, 0], sizes = [8, 64], strides = [1, 1]} : vector<12x128xf32> to vector<8x64xf32>
    %c0_9 = arith.constant 0 : index
    %c0_10 = arith.constant 0 : index
    %12 = vector.load %arg4[%c0_9, %c0_10] : memref<1x128xf32, #tpu.memory_space<vmem>>, vector<1x64xf32>
    %13 = vector.broadcast %12 : vector<1x64xf32> to vector<8x64xf32>
    %14 = arith.addf %11, %13 : vector<8x64xf32>
    %15 = vector.extract_strided_slice %10 {offsets = [8, 64], sizes = [4, 64], strides = [1, 1]} : vector<12x128xf32> to vector<4x64xf32>
    %c0_11 = arith.constant 0 : index
    %c64 = arith.constant 64 : index
    %16 = vector.load %arg4[%c0_11, %c64] : memref<1x128xf32, #tpu.memory_space<vmem>>, vector<1x64xf32>
    %17 = vector.broadcast %16 : vector<1x64xf32> to vector<4x64xf32>
    %18 = arith.addf %15, %17 : vector<4x64xf32>
    %cst_12 = arith.constant dense<0.000000e+00> : vector<64xf32>
    %19 = vector.multi_reduction <add>, %18, %cst_12 [0] : vector<4x64xf32> to vector<64xf32>
    %20 = vector.shape_cast %19 : vector<64xf32> to vector<1x64xf32>
    %cst_13 = arith.constant 4.000000e+00 : f32
    %21 = vector.broadcast %cst_13 : f32 to vector<1x64xf32>
    %22 = arith.divf %20, %21 : vector<1x64xf32>
    %23 = tpu.transpose %14, [1, 0] : vector<8x64xf32> -> vector<64x8xf32>
    %cst_14 = arith.constant dense<0.000000e+00> : vector<1x8xf32>
    %24 = tpu.matmul %22, %23, %cst_14 {dimension_numbers = #tpu.dot_dimension_numbers<[1], [0], [0], [1], [0, 0, 1, 1], [], []>} : vector<1x64xf32>, vector<64x8xf32>, vector<1x8xf32> -> vector<1x8xf32>
    %cst_15 = arith.constant dense<0xFF800000> : vector<1xf32>
    %25 = vector.multi_reduction <maximumf>, %24, %cst_15 [1] : vector<1x8xf32> to vector<1xf32>
    %26 = vector.shape_cast %25 : vector<1xf32> to vector<1x1xf32>
    %27 = vector.broadcast %26 : vector<1x1xf32> to vector<1x8xf32>
    %28 = arith.subf %24, %27 : vector<1x8xf32>
    %29 = math.exp %28 : vector<1x8xf32>
    %cst_16 = arith.constant dense<0.000000e+00> : vector<1xf32>
    %30 = vector.multi_reduction <add>, %29, %cst_16 [1] : vector<1x8xf32> to vector<1xf32>
    %31 = vector.shape_cast %30 : vector<1xf32> to vector<1x1xf32>
    %32 = vector.broadcast %31 : vector<1x1xf32> to vector<1x8xf32>
    %33 = arith.divf %29, %32 : vector<1x8xf32>
    %34 = arith.truncf %33 : vector<1x8xf32> to vector<1x8xbf16>
    %c0_17 = arith.constant 0 : index
    %c0_18 = arith.constant 0 : index
    %35 = vector.load %arg5[%c0_17, %c0_18] : memref<8x1024xbf16, #tpu.memory_space<vmem>>, vector<8x1024xbf16>
    %cst_19 = arith.constant dense<0.000000e+00> : vector<1x1024xf32>
    %36 = tpu.matmul %34, %35, %cst_19 {dimension_numbers = #tpu.dot_dimension_numbers<[1], [0], [0], [1], [0, 0, 1, 1], [], []>} : vector<1x8xbf16>, vector<8x1024xbf16>, vector<1x1024xf32> -> vector<1x1024xf32>
    %37 = arith.truncf %36 : vector<1x1024xf32> to vector<1x1024xbf16>
    %c0_20 = arith.constant 0 : index
    %c0_21 = arith.constant 0 : index
    %38 = vector.load %arg6[%c0_20, %c0_21] : memref<8x1024xbf16, #tpu.memory_space<vmem>>, vector<8x1024xbf16>
    %cst_22 = arith.constant dense<0.000000e+00> : vector<1x8xf32>
    %39 = tpu.matmul %37, %38, %cst_22 {dimension_numbers = #tpu.dot_dimension_numbers<[1], [1], [0], [0], [0, 0, 1, 0], [], []>} : vector<1x1024xbf16>, vector<8x1024xbf16>, vector<1x8xf32> -> vector<1x8xf32>
    %c0_23 = arith.constant 0 : index
    %c0_24 = arith.constant 0 : index
    %40 = vector.load %arg7[%c0_23, %c0_24] : memref<1x8xf32, #tpu.memory_space<vmem>>, vector<1x8xf32>
    %41 = arith.addf %39, %40 : vector<1x8xf32>
    %c0_25 = arith.constant 0 : index
    %c0_26 = arith.constant 0 : index
    %42 = vector.load %arg8[%c0_25, %c0_26] : memref<1x8xf32, #tpu.memory_space<vmem>>, vector<1x8xf32>
    tpu.vector_store %arg8[%c0_25, %c0_26], %41 {strides = array<i32>} : memref<1x8xf32, #tpu.memory_space<vmem>>, vector<1x8xf32>,
    return
  }
}

</mosaic_0001>

<llo_original>
// kernel: deit_attn1.1
$region0: #{deit_attn1.1}
  #allocation0 [shape = 'u32[]', space=smem, size = 0x4, offset = 0x4, fixed_abs, tag = 'smem constant byte address 0x4 - core index']
  #allocation1 [shape = 'u32[144,128]{1,0:T(1,128)}', space=vmem, size = 0x12000, scoped, tag = 'internal scratch']
  %s0 = inlined_call_operand.vmem [shape: bf16[12,1024], index: 0, kind: input, shape index: {}]
  %s1 = inlined_call_operand.hbm [shape: bf16[1024,1024], index: 1, kind: input, shape index: {}]
  %s2 = inlined_call_operand.hbm [shape: f32[1,1024], index: 2, kind: input, shape index: {}]
  %s3 = inlined_call_operand.hbm [shape: bf16[1024,128], index: 3, kind: input, shape index: {}]
  %s4 = inlined_call_operand.hbm [shape: f32[1,128], index: 4, kind: input, shape index: {}]
  %s5 = inlined_call_operand.vmem [shape: bf16[8,1024], index: 5, kind: input, shape index: {}]
  %s6 = inlined_call_operand.hbm [shape: bf16[8,1024], index: 6, kind: input, shape index: {}]
  %s7 = inlined_call_operand.hbm [shape: f32[1,8], index: 7, kind: input, shape index: {}]
  %s8 = inlined_call_operand.hbm [shape: f32[1,8], index: 8, kind: output, shape index: {}]
  %s9 = sld [smem:[#allocation0]]
  $region66: #{deit_attn1.1} parent=0
    _
  %s11 = ssub.s32 1, %s9
  %s12 = scalar_select 0, %s11, %s9
  $region1: #{deit_attn1.1} parent=0
    #allocation2 [shape = 'u8[2097152]{0}', space=vmem, size = 0x200000, scoped, tag = 'input window, operand 1, single buffered']
    #allocation3 [shape = 's32[1]{0}', space=sflag, size = 0x4, scoped, tag = 'scoped memory for deit_attn1.1']
    #allocation4 [shape = 's32[1]{0}', space=sflag, size = 0x4, scoped, tag = 'scoped memory for deit_attn1.1']
    #allocation5 [shape = 'u8[4096]{0}', space=vmem, size = 0x1000, scoped, tag = 'input window, operand 2, single buffered']
    #allocation6 [shape = 's32[1]{0}', space=sflag, size = 0x4, scoped, tag = 'scoped memory for deit_attn1.1']
    #allocation7 [shape = 'u8[262144]{0}', space=vmem, size = 0x40000, scoped, tag = 'input window, operand 3, single buffered']
    #allocation8 [shape = 'u8[512]{0}', space=vmem, size = 0x400, scoped, tag = 'input window, operand 4, single buffered']
    #allocation9 [shape = 's32[1]{0}', space=sflag, size = 0x4, scoped, tag = 'scoped memory for deit_attn1.1']
    #allocation10 [shape = 'u8[16384]{0}', space=vmem, size = 0x4000, scoped, tag = 'input window, operand 6, single buffered']
    #allocation11 [shape = 'u8[512]{0}', space=vmem, size = 0x400, scoped, tag = 'input window, operand 7, single buffered']
    #allocation12 [shape = 's32[1]{0}', space=sflag, size = 0x4, scoped, tag = 'scoped memory for deit_attn1.1']
    #allocation13 [shape = 'u8[512]{0}', space=vmem, size = 0x400, scoped, tag = 'output window, operand 0, single buffered']
    %13 = vsyncpa [#allocation3], 0
    %14 = vsyncpa [#allocation6], 0
    %15 = vsyncpa [#allocation9], 0
    %16 = vsyncpa [#allocation12], 0
    %17 = vsyncpa [#allocation4], 0
    // Predicated region
    $region2: #{deit_attn1.1} parent=1 // pred_check
      _
    $region3: #{deit_attn1.1} parent=1 // pred_check_branch
      %19 = sbr.rel (0) target = $region5
    $region4: #{deit_attn1.1} parent=1 // pred_region
      _
    $region5: #{deit_attn1.1} parent=1 // pred_fallthru
      _
    // Predicated region
    $region6: #{deit_attn1.1} parent=1 // pred_check
      _
    $region7: #{deit_attn1.1} parent=1 // pred_check_branch
      %21 = sbr.rel (0) target = $region9
    $region8: #{deit_attn1.1} parent=1 // pred_region
      %s23 = ssub.s32 65536, 65536
      %24 = vsyncadd [#allocation3], %s23
      %s25 = sshll.u32 [#allocation2], 4
      %s26 = int_to_ptr.vmem [resolvable:$true] %s25
      %31 = dma.hbm_to_vmem [thread:$0]  %s1, 65536, %s26, [#allocation3], 512, 512, 32
    $region9: #{deit_attn1.1} parent=1 // pred_fallthru
      _
    // Predicated region
    $region10: #{deit_attn1.1} parent=1 // pred_check
      _
    $region11: #{deit_attn1.1} parent=1 // pred_check_branch
      %33 = sbr.rel (0) target = $region13
    $region12: #{deit_attn1.1} parent=1 // pred_region
      %s35 = ssub.s32 128, 128
      %36 = vsyncadd [#allocation6], %s35
      %s38 = sshll.u32 [#allocation5], 4
      %s39 = int_to_ptr.vmem [resolvable:$true] %s38
      %41 = dma.hbm_to_vmem [thread:$0]  %s2, 128, %s39, [#allocation6]
    $region13: #{deit_attn1.1} parent=1 // pred_fallthru
      _
    // Predicated region
    $region14: #{deit_attn1.1} parent=1 // pred_check
      _
    $region15: #{deit_attn1.1} parent=1 // pred_check_branch
      %43 = sbr.rel (0) target = $region17
    $region16: #{deit_attn1.1} parent=1 // pred_region
      %s45 = ssub.s32 8192, 8192
      %46 = vsyncadd [#allocation6], %s45
      %s47 = sshll.u32 [#allocation7], 4
      %s48 = int_to_ptr.vmem [resolvable:$true] %s47
      %53 = dma.hbm_to_vmem [thread:$0]  %s3, 8192, %s48, [#allocation6], 64, 64, 4
    $region17: #{deit_attn1.1} parent=1 // pred_fallthru
      _
    // Predicated region
    $region18: #{deit_attn1.1} parent=1 // pred_check
      _
    $region19: #{deit_attn1.1} parent=1 // pred_check_branch
      %55 = sbr.rel (0) target = $region21
    $region20: #{deit_attn1.1} parent=1 // pred_region
      %s57 = ssub.s32 16, 16
      %58 = vsyncadd [#allocation9], %s57
      %s60 = sshll.u32 [#allocation8], 4
      %s61 = int_to_ptr.vmem [resolvable:$true] %s60
      %63 = dma.hbm_to_vmem [thread:$0]  %s4, 16, %s61, [#allocation9]
    $region21: #{deit_attn1.1} parent=1 // pred_fallthru
      _
    // Predicated region
    $region22: #{deit_attn1.1} parent=1 // pred_check
      _
    $region23: #{deit_attn1.1} parent=1 // pred_check_branch
      %65 = sbr.rel (0) target = $region25
    $region24: #{deit_attn1.1} parent=1 // pred_region
      _
    $region25: #{deit_attn1.1} parent=1 // pred_fallthru
      _
    // Predicated region
    $region26: #{deit_attn1.1} parent=1 // pred_check
      _
    $region27: #{deit_attn1.1} parent=1 // pred_check_branch
      %67 = sbr.rel (0) target = $region29
    $region28: #{deit_attn1.1} parent=1 // pred_region
      %s69 = ssub.s32 512, 512
      %70 = vsyncadd [#allocation9], %s69
      %s72 = sshll.u32 [#allocation10], 4
      %s73 = int_to_ptr.vmem [resolvable:$true] %s72
      %75 = dma.hbm_to_vmem [thread:$0]  %s6, 512, %s73, [#allocation9]
    $region29: #{deit_attn1.1} parent=1 // pred_fallthru
      _
    // Predicated region
    $region30: #{deit_attn1.1} parent=1 // pred_check
      _
    $region31: #{deit_attn1.1} parent=1 // pred_check_branch
      %77 = sbr.rel (0) target = $region33
    $region32: #{deit_attn1.1} parent=1 // pred_region
      %s79 = ssub.s32 16, 16
      %80 = vsyncadd [#allocation12], %s79
      %s82 = sshll.u32 [#allocation11], 4
      %s83 = int_to_ptr.vmem [resolvable:$true] %s82
      %85 = dma.hbm_to_vmem [thread:$0]  %s7, 16, %s83, [#allocation12]
    $region33: #{deit_attn1.1} parent=1 // pred_fallthru
      _
    // Predicated region
    $region34: #{deit_attn1.1} parent=1 // pred_check
      _
    $region35: #{deit_attn1.1} parent=1 // pred_check_branch
      %87 = sbr.rel (0) target = $region37
    $region36: #{deit_attn1.1} parent=1 // pred_region
      %88 = dma.done [#allocation3], 65536
    $region37: #{deit_attn1.1} parent=1 // pred_fallthru
      _
    // Predicated region
    $region38: #{deit_attn1.1} parent=1 // pred_check
      _
    $region39: #{deit_attn1.1} parent=1 // pred_check_branch
      %90 = sbr.rel (0) target = $region41
    $region40: #{deit_attn1.1} parent=1 // pred_region
      %91 = dma.done [#allocation6], 128
    $region41: #{deit_attn1.1} parent=1 // pred_fallthru
      _
    // Predicated region
    $region42: #{deit_attn1.1} parent=1 // pred_check
      _
    $region43: #{deit_attn1.1} parent=1 // pred_check_branch
      %93 = sbr.rel (0) target = $region45
    $region44: #{deit_attn1.1} parent=1 // pred_region
      %94 = dma.done [#allocation6], 8192
    $region45: #{deit_attn1.1} parent=1 // pred_fallthru
      _
    // Predicated region
    $region46: #{deit_attn1.1} parent=1 // pred_check
      _
    $region47: #{deit_attn1.1} parent=1 // pred_check_branch
      %96 = sbr.rel (0) target = $region49
    $region48: #{deit_attn1.1} parent=1 // pred_region
      %97 = dma.done [#allocation9], 16
    $region49: #{deit_attn1.1} parent=1 // pred_fallthru
      _
    // Predicated region
    $region50: #{deit_attn1.1} parent=1 // pred_check
      _
    $region51: #{deit_attn1.1} parent=1 // pred_check_branch
      %99 = sbr.rel (0) target = $region53
    $region52: #{deit_attn1.1} parent=1 // pred_region
      %100 = dma.done [#allocation9], 512
    $region53: #{deit_attn1.1} parent=1 // pred_fallthru
      _
    // Predicated region
    $region54: #{deit_attn1.1} parent=1 // pred_check
      _
    $region55: #{deit_attn1.1} parent=1 // pred_check_branch
      %102 = sbr.rel (0) target = $region57
    $region56: #{deit_attn1.1} parent=1 // pred_region
      %103 = dma.done [#allocation12], 16
    $region57: #{deit_attn1.1} parent=1 // pred_fallthru
      _
    %v105 = vld [vmem:[%s0] sm:$0xff]
    %v106 = vld [vmem:[%s0 + $0x8] sm:$0xff]
    %v107 = vld [vmem:[%s0 + $0x10] sm:$0xff]
    %v108 = vld [vmem:[%s0 + $0x18] sm:$0xff]
    %v109 = vld [vmem:[%s0 + $0x20] sm:$0x33]
    %v110 = vld [vmem:[%s0 + $0x28] sm:$0x33]
    %v111 = vld [vmem:[%s0 + $0x30] sm:$0x33]
    %v112 = vld [vmem:[%s0 + $0x38] sm:$0x33]
    %v113 = vld [vmem:[#allocation2] sm:$0xff]
    %v114 = vld [vmem:[#allocation2 + $0x8] sm:$0xff]
    %v115 = vld [vmem:[#allocation2 + $0x10] sm:$0xff]
    %v116 = vld [vmem:[#allocation2 + $0x18] sm:$0xff]
    %v117 = vld [vmem:[#allocation2 + $0x20] sm:$0xff]
    %v118 = vld [vmem:[#allocation2 + $0x28] sm:$0xff]
    %v119 = vld [vmem:[#allocation2 + $0x30] sm:$0xff]
    %v120 = vld [vmem:[#allocation2 + $0x38] sm:$0xff]
    %v121 = vld [vmem:[#allocation2 + $0x40] sm:$0xff]
    %v122 = vld [vmem:[#allocation2 + $0x48] sm:$0xff]
    %v123 = vld [vmem:[#allocation2 + $0x50] sm:$0xff]
    %v124 = vld [vmem:[#allocation2 + $0x58] sm:$0xff]
    %v125 = vld [vmem:[#allocation2 + $0x60] sm:$0xff]
    %v126 = vld [vmem:[#allocation2 + $0x68] sm:$0xff]
    %v127 = vld [vmem:[#allocation2 + $0x70] sm:$0xff]
    %v128 = vld [vmem:[#allocation2 + $0x78] sm:$0xff]
    %v129 = vld [vmem:[#allocation2 + $0x80] sm:$0xff]
    %v130 = vld [vmem:[#allocation2 + $0x88] sm:$0xff]
    %v131 = vld [vmem:[#allocation2 + $0x90] sm:$0xff]
    %v132 = vld [vmem:[#allocation2 + $0x98] sm:$0xff]
    %v133 = vld [vmem:[#allocation2 + $0xa0] sm:$0xff]
    %v134 = vld [vmem:[#allocation2 + $0xa8] sm:$0xff]
    %v135 = vld [vmem:[#allocation2 + $0xb0] sm:$0xff]
    %v136 = vld [vmem:[#allocation2 + $0xb8] sm:$0xff]
    %v137 = vld [vmem:[#allocation2 + $0xc0] sm:$0xff]
    %v138 = vld [vmem:[#allocation2 + $0xc8] sm:$0xff]
    %v139 = vld [vmem:[#allocation2 + $0xd0] sm:$0xff]
    %v140 = vld [vmem:[#allocation2 + $0xd8] sm:$0xff]
    %v141 = vld [vmem:[#allocation2 + $0xe0] sm:$0xff]
    %v142 = vld [vmem:[#allocation2 + $0xe8] sm:$0xff]
    %v143 = vld [vmem:[#allocation2 + $0xf0] sm:$0xff]
    %v144 = vld [vmem:[#allocation2 + $0xf8] sm:$0xff]
    %v145 = vld [vmem:[#allocation2 + $0x100] sm:$0xff]
    %v146 = vld [vmem:[#allocation2 + $0x108] sm:$0xff]
    %v147 = vld [vmem:[#allocation2 + $0x110] sm:$0xff]
    %v148 = vld [vmem:[#allocation2 + $0x118] sm:$0xff]
    %v149 = vld [vmem:[#allocation2 + $0x120] sm:$0xff]
    %v150 = vld [vmem:[#allocation2 + $0x128] sm:$0xff]
    %v151 = vld [vmem:[#allocation2 + $0x130] sm:$0xff]
    %v152 = vld [vmem:[#allocation2 + $0x138] sm:$0xff]
    %v153 = vld [vmem:[#allocation2 + $0x140] sm:$0xff]
    %v154 = vld [vmem:[#allocation2 + $0x148] sm:$0xff]
    %v155 = vld [vmem:[#allocation2 + $0x150] sm:$0xff]
    %v156 = vld [vmem:[#allocation2 + $0x158] sm:$0xff]
    %v157 = vld [vmem:[#allocation2 + $0x160] sm:$0xff]
    %v158 = vld [vmem:[#allocation2 + $0x168] sm:$0xff]
    %v159 = vld [vmem:[#allocation2 + $0x170] sm:$0xff]
    %v160 = vld [vmem:[#allocation2 + $0x178] sm:$0xff]
    %v161 = vld [vmem:[#allocation2 + $0x180] sm:$0xff]
    %v162 = vld [vmem:[#allocation2 + $0x188] sm:$0xff]
    %v163 = vld [vmem:[#allocation2 + $0x190] sm:$0xff]
    %v164 = vld [vmem:[#allocation2 + $0x198] sm:$0xff]
    %v165 = vld [vmem:[#allocation2 + $0x1a0] sm:$0xff]
    %v166 = vld [vmem:[#allocation2 + $0x1a8] sm:$0xff]
    %v167 = vld [vmem:[#allocation2 + $0x1b0] sm:$0xff]
    %v168 = vld [vmem:[#allocation2 + $0x1b8] sm:$0xff]
    %v169 = vld [vmem:[#allocation2 + $0x1c0] sm:$0xff]
    %v170 = vld [vmem:[#allocation2 + $0x1c8] sm:$0xff]
    %v171 = vld [vmem:[#allocation2 + $0x1d0] sm:$0xff]
    %v172 = vld [vmem:[#allocation2 + $0x1d8] sm:$0xff]
    %v173 = vld [vmem:[#allocation2 + $0x1e0] sm:$0xff]
    %v174 = vld [vmem:[#allocation2 + $0x1e8] sm:$0xff]
    %v175 = vld [vmem:[#allocation2 + $0x1f0] sm:$0xff]
    %v176 = vld [vmem:[#allocation2 + $0x1f8] sm:$0xff]
    %v177 = vld [vmem:[#allocation2 + $0x200] sm:$0xff]
    %v178 = vld [vmem:[#allocation2 + $0x208] sm:$0xff]
    %v179 = vld [vmem:[#allocation2 + $0x210] sm:$0xff]
    %v180 = vld [vmem:[#allocation2 + $0x218] sm:$0xff]
    %v181 = vld [vmem:[#allocation2 + $0x220] sm:$0xff]
    %v182 = vld [vmem:[#allocation2 + $0x228] sm:$0xff]
    %v183 = vld [vmem:[#allocation2 + $0x230] sm:$0xff]
    %v184 = vld [vmem:[#allocation2 + $0x238] sm:$0xff]
    %v185 = vld [vmem:[#allocation2 + $0x240] sm:$0xff]
    %v186 = vld [vmem:[#allocation2 + $0x248] sm:$0xff]
    %v187 = vld [vmem:[#allocation2 + $0x250] sm:$0xff]
    %v188 = vld [vmem:[#allocation2 + $0x258] sm:$0xff]
    %v189 = vld [vmem:[#allocation2 + $0x260] sm:$0xff]
    %v190 = vld [vmem:[#allocation2 + $0x268] sm:$0xff]
    %v191 = vld [vmem:[#allocation2 + $0x270] sm:$0xff]
    %v192 = vld [vmem:[#allocation2 + $0x278] sm:$0xff]
    %v193 = vld [vmem:[#allocation2 + $0x280] sm:$0xff]
    %v194 = vld [vmem:[#allocation2 + $0x288] sm:$0xff]
    %v195 = vld [vmem:[#allocation2 + $0x290] sm:$0xff]
    %v196 = vld [vmem:[#allocation2 + $0x298] sm:$0xff]
    %v197 = vld [vmem:[#allocation2 + $0x2a0] sm:$0xff]
    %v198 = vld [vmem:[#allocation2 + $0x2a8] sm:$0xff]
    %v199 = vld [vmem:[#allocation2 + $0x2b0] sm:$0xff]
    %v200 = vld [vmem:[#allocation2 + $0x2b8] sm:$0xff]
    %v201 = vld [vmem:[#allocation2 + $0x2c0] sm:$0xff]
    %v202 = vld [vmem:[#allocation2 + $0x2c8] sm:$0xff]
    %v203 = vld [vmem:[#allocation2 + $0x2d0] sm:$0xff]
    %v204 = vld [vmem:[#allocation2 + $0x2d8] sm:$0xff]
    %v205 = vld [vmem:[#allocation2 + $0x2e0] sm:$0xff]
    %v206 = vld [vmem:[#allocation2 + $0x2e8] sm:$0xff]
    %v207 = vld [vmem:[#allocation2 + $0x2f0] sm:$0xff]
    %v208 = vld [vmem:[#allocation2 + $0x2f8] sm:$0xff]
    %v209 = vld [vmem:[#allocation2 + $0x300] sm:$0xff]
    %v210 = vld [vmem:[#allocation2 + $0x308] sm:$0xff]
    %v211 = vld [vmem:[#allocation2 + $0x310] sm:$0xff]
    %v212 = vld [vmem:[#allocation2 + $0x318] sm:$0xff]
    %v213 = vld [vmem:[#allocation2 + $0x320] sm:$0xff]
    %v214 = vld [vmem:[#allocation2 + $0x328] sm:$0xff]
    %v215 = vld [vmem:[#allocation2 + $0x330] sm:$0xff]
    %v216 = vld [vmem:[#allocation2 + $0x338] sm:$0xff]
    %v217 = vld [vmem:[#allocation2 + $0x340] sm:$0xff]
    %v218 = vld [vmem:[#allocation2 + $0x348] sm:$0xff]
    %v219 = vld [vmem:[#allocation2 + $0x350] sm:$0xff]
    %v220 = vld [vmem:[#allocation2 + $0x358] sm:$0xff]
    %v221 = vld [vmem:[#allocation2 + $0x360] sm:$0xff]
    %v222 = vld [vmem:[#allocation2 + $0x368] sm:$0xff]
    %v223 = vld [vmem:[#allocation2 + $0x370] sm:$0xff]
    %v224 = vld [vmem:[#allocation2 + $0x378] sm:$0xff]
    %v225 = vld [vmem:[#allocation2 + $0x380] sm:$0xff]
    %v226 = vld [vmem:[#allocation2 + $0x388] sm:$0xff]
    %v227 = vld [vmem:[#allocation2 + $0x390] sm:$0xff]
    %v228 = vld [vmem:[#allocation2 + $0x398] sm:$0xff]
    %v229 = vld [vmem:[#allocation2 + $0x3a0] sm:$0xff]
    %v230 = vld [vmem:[#allocation2 + $0x3a8] sm:$0xff]
    %v231 = vld [vmem:[#allocation2 + $0x3b0] sm:$0xff]
    %v232 = vld [vmem:[#allocation2 + $0x3b8] sm:$0xff]
    %v233 = vld [vmem:[#allocation2 + $0x3c0] sm:$0xff]
    %v234 = vld [vmem:[#allocation2 + $0x3c8] sm:$0xff]
    %v235 = vld [vmem:[#allocation2 + $0x3d0] sm:$0xff]
    %v236 = vld [vmem:[#allocation2 + $0x3d8] sm:$0xff]
    %v237 = vld [vmem:[#allocation2 + $0x3e0] sm:$0xff]
    %v238 = vld [vmem:[#allocation2 + $0x3e8] sm:$0xff]
    %v239 = vld [vmem:[#allocation2 + $0x3f0] sm:$0xff]
    %v240 = vld [vmem:[#allocation2 + $0x3f8] sm:$0xff]
    %v241 = vld [vmem:[#allocation2 + $0x400] sm:$0xff]
    %v242 = vld [vmem:[#allocation2 + $0x408] sm:$0xff]
    %v243 = vld [vmem:[#allocation2 + $0x410] sm:$0xff]
    %v244 = vld [vmem:[#allocation2 + $0x418] sm:$0xff]
    %v245 = vld [vmem:[#allocation2 + $0x420] sm:$0xff]
    %v246 = vld [vmem:[#allocation2 + $0x428] sm:$0xff]
    %v247 = vld [vmem:[#allocation2 + $0x430] sm:$0xff]
    %v248 = vld [vmem:[#allocation2 + $0x438] sm:$0xff]
    %v249 = vld [vmem:[#allocation2 + $0x440] sm:$0xff]
    %v250 = vld [vmem:[#allocation2 + $0x448] sm:$0xff]
    %v251 = vld [vmem:[#allocation2 + $0x450] sm:$0xff]
    %v252 = vld [vmem:[#allocation2 + $0x458] sm:$0xff]
    %v253 = vld [vmem:[#allocation2 + $0x460] sm:$0xff]
    %v254 = vld [vmem:[#allocation2 + $0x468] sm:$0xff]
    %v255 = vld [vmem:[#allocation2 + $0x470] sm:$0xff]
    %v256 = vld [vmem:[#allocation2 + $0x478] sm:$0xff]
    %v257 = vld [vmem:[#allocation2 + $0x480] sm:$0xff]
    %v258 = vld [vmem:[#allocation2 + $0x488] sm:$0xff]
    %v259 = vld [vmem:[#allocation2 + $0x490] sm:$0xff]
    %v260 = vld [vmem:[#allocation2 + $0x498] sm:$0xff]
    %v261 = vld [vmem:[#allocation2 + $0x4a0] sm:$0xff]
    %v262 = vld [vmem:[#allocation2 + $0x4a8] sm:$0xff]
    %v263 = vld [vmem:[#allocation2 + $0x4b0] sm:$0xff]
    %v264 = vld [vmem:[#allocation2 + $0x4b8] sm:$0xff]
    %v265 = vld [vmem:[#allocation2 + $0x4c0] sm:$0xff]
    %v266 = vld [vmem:[#allocation2 + $0x4c8] sm:$0xff]
    %v267 = vld [vmem:[#allocation2 + $0x4d0] sm:$0xff]
    %v268 = vld [vmem:[#allocation2 + $0x4d8] sm:$0xff]
    %v269 = vld [vmem:[#allocation2 + $0x4e0] sm:$0xff]
    %v270 = vld [vmem:[#allocation2 + $0x4e8] sm:$0xff]
    %v271 = vld [vmem:[#allocation2 + $0x4f0] sm:$0xff]
    %v272 = vld [vmem:[#allocation2 + $0x4f8] sm:$0xff]
    %v273 = vld [vmem:[#allocation2 + $0x500] sm:$0xff]
    %v274 = vld [vmem:[#allocation2 + $0x508] sm:$0xff]
    %v275 = vld [vmem:[#allocation2 + $0x510] sm:$0xff]
    %v276 = vld [vmem:[#allocation2 + $0x518] sm:$0xff]
    %v277 = vld [vmem:[#allocation2 + $0x520] sm:$0xff]
    %v278 = vld [vmem:[#allocation2 + $0x528] sm:$0xff]
    %v279 = vld [vmem:[#allocation2 + $0x530] sm:$0xff]
    %v280 = vld [vmem:[#allocation2 + $0x538] sm:$0xff]
    %v281 = vld [vmem:[#allocation2 + $0x540] sm:$0xff]
    %v282 = vld [vmem:[#allocation2 + $0x548] sm:$0xff]
    %v283 = vld [vmem:[#allocation2 + $0x550] sm:$0xff]
    %v284 = vld [vmem:[#allocation2 + $0x558] sm:$0xff]
    %v285 = vld [vmem:[#allocation2 + $0x560] sm:$0xff]
    %v286 = vld [vmem:[#allocation2 + $0x568] sm:$0xff]
    %v287 = vld [vmem:[#allocation2 + $0x570] sm:$0xff]
    %v288 = vld [vmem:[#allocation2 + $0x578] sm:$0xff]
    %v289 = vld [vmem:[#allocation2 + $0x580] sm:$0xff]
    %v290 = vld [vmem:[#allocation2 + $0x588] sm:$0xff]
    %v291 = vld [vmem:[#allocation2 + $0x590] sm:$0xff]
    %v292 = vld [vmem:[#allocation2 + $0x598] sm:$0xff]
    %v293 = vld [vmem:[#allocation2 + $0x5a0] sm:$0xff]
    %v294 = vld [vmem:[#allocation2 + $0x5a8] sm:$0xff]
    %v295 = vld [vmem:[#allocation2 + $0x5b0] sm:$0xff]
    %v296 = vld [vmem:[#allocation2 + $0x5b8] sm:$0xff]
    %v297 = vld [vmem:[#allocation2 + $0x5c0] sm:$0xff]
    %v298 = vld [vmem:[#allocation2 + $0x5c8] sm:$0xff]
    %v299 = vld [vmem:[#allocation2 + $0x5d0] sm:$0xff]
    %v300 = vld [vmem:[#allocation2 + $0x5d8] sm:$0xff]
    %v301 = vld [vmem:[#allocation2 + $0x5e0] sm:$0xff]
    %v302 = vld [vmem:[#allocation2 + $0x5e8] sm:$0xff]
    %v303 = vld [vmem:[#allocation2 + $0x5f0] sm:$0xff]
    %v304 = vld [vmem:[#allocation2 + $0x5f8] sm:$0xff]
    %v305 = vld [vmem:[#allocation2 + $0x600] sm:$0xff]
    %v306 = vld [vmem:[#allocation2 + $0x608] sm:$0xff]
    %v307 = vld [vmem:[#allocation2 + $0x610] sm:$0xff]
    %v308 = vld [vmem:[#allocation2 + $0x618] sm:$0xff]
    %v309 = vld [vmem:[#allocation2 + $0x620] sm:$0xff]
    %v310 = vld [vmem:[#allocation2 + $0x628] sm:$0xff]
    %v311 = vld [vmem:[#allocation2 + $0x630] sm:$0xff]
    %v312 = vld [vmem:[#allocation2 + $0x638] sm:$0xff]
    %v313 = vld [vmem:[#allocation2 + $0x640] sm:$0xff]
    %v314 = vld [vmem:[#allocation2 + $0x648] sm:$0xff]
    %v315 = vld [vmem:[#allocation2 + $0x650] sm:$0xff]
    %v316 = vld [vmem:[#allocation2 + $0x658] sm:$0xff]
    %v317 = vld [vmem:[#allocation2 + $0x660] sm:$0xff]
    %v318 = vld [vmem:[#allocation2 + $0x668] sm:$0xff]
    %v319 = vld [vmem:[#allocation2 + $0x670] sm:$0xff]
    %v320 = vld [vmem:[#allocation2 + $0x678] sm:$0xff]
    %v321 = vld [vmem:[#allocation2 + $0x680] sm:$0xff]
    %v322 = vld [vmem:[#allocation2 + $0x688] sm:$0xff]
    %v323 = vld [vmem:[#allocation2 + $0x690] sm:$0xff]
    %v324 = vld [vmem:[#allocation2 + $0x698] sm:$0xff]
    %v325 = vld [vmem:[#allocation2 + $0x6a0] sm:$0xff]
    %v326 = vld [vmem:[#allocation2 + $0x6a8] sm:$0xff]
    %v327 = vld [vmem:[#allocation2 + $0x6b0] sm:$0xff]
    %v328 = vld [vmem:[#allocation2 + $0x6b8] sm:$0xff]
    %v329 = vld [vmem:[#allocation2 + $0x6c0] sm:$0xff]
    %v330 = vld [vmem:[#allocation2 + $0x6c8] sm:$0xff]
    %v331 = vld [vmem:[#allocation2 + $0x6d0] sm:$0xff]
    %v332 = vld [vmem:[#allocation2 + $0x6d8] sm:$0xff]
    %v333 = vld [vmem:[#allocation2 + $0x6e0] sm:$0xff]
    %v334 = vld [vmem:[#allocation2 + $0x6e8] sm:$0xff]
    %v335 = vld [vmem:[#allocation2 + $0x6f0] sm:$0xff]
    %v336 = vld [vmem:[#allocation2 + $0x6f8] sm:$0xff]
    %v337 = vld [vmem:[#allocation2 + $0x700] sm:$0xff]
    %v338 = vld [vmem:[#allocation2 + $0x708] sm:$0xff]
    %v339 = vld [vmem:[#allocation2 + $0x710] sm:$0xff]
    %v340 = vld [vmem:[#allocation2 + $0x718] sm:$0xff]
    %v341 = vld [vmem:[#allocation2 + $0x720] sm:$0xff]
    %v342 = vld [vmem:[#allocation2 + $0x728] sm:$0xff]
    %v343 = vld [vmem:[#allocation2 + $0x730] sm:$0xff]
    %v344 = vld [vmem:[#allocation2 + $0x738] sm:$0xff]
    %v345 = vld [vmem:[#allocation2 + $0x740] sm:$0xff]
    %v346 = vld [vmem:[#allocation2 + $0x748] sm:$0xff]
    %v347 = vld [vmem:[#allocation2 + $0x750] sm:$0xff]
    %v348 = vld [vmem:[#allocation2 + $0x758] sm:$0xff]
    %v349 = vld [vmem:[#allocation2 + $0x760] sm:$0xff]
    %v350 = vld [vmem:[#allocation2 + $0x768] sm:$0xff]
    %v351 = vld [vmem:[#allocation2 + $0x770] sm:$0xff]
    %v352 = vld [vmem:[#allocation2 + $0x778] sm:$0xff]
    %v353 = vld [vmem:[#allocation2 + $0x780] sm:$0xff]
    %v354 = vld [vmem:[#allocation2 + $0x788] sm:$0xff]
    %v355 = vld [vmem:[#allocation2 + $0x790] sm:$0xff]
    %v356 = vld [vmem:[#allocation2 + $0x798] sm:$0xff]
    %v357 = vld [vmem:[#allocation2 + $0x7a0] sm:$0xff]
    %v358 = vld [vmem:[#allocation2 + $0x7a8] sm:$0xff]
    %v359 = vld [vmem:[#allocation2 + $0x7b0] sm:$0xff]
    %v360 = vld [vmem:[#allocation2 + $0x7b8] sm:$0xff]
    %v361 = vld [vmem:[#allocation2 + $0x7c0] sm:$0xff]
    %v362 = vld [vmem:[#allocation2 + $0x7c8] sm:$0xff]
    %v363 = vld [vmem:[#allocation2 + $0x7d0] sm:$0xff]
    %v364 = vld [vmem:[#allocation2 + $0x7d8] sm:$0xff]
    %v365 = vld [vmem:[#allocation2 + $0x7e0] sm:$0xff]
    %v366 = vld [vmem:[#allocation2 + $0x7e8] sm:$0xff]
    %v367 = vld [vmem:[#allocation2 + $0x7f0] sm:$0xff]
    %v368 = vld [vmem:[#allocation2 + $0x7f8] sm:$0xff]
    %v369 = vld [vmem:[#allocation2 + $0x800] sm:$0xff]
    %v370 = vld [vmem:[#allocation2 + $0x808] sm:$0xff]
    %v371 = vld [vmem:[#allocation2 + $0x810] sm:$0xff]
    %v372 = vld [vmem:[#allocation2 + $0x818] sm:$0xff]
    %v373 = vld [vmem:[#allocation2 + $0x820] sm:$0xff]
    %v374 = vld [vmem:[#allocation2 + $0x828] sm:$0xff]
    %v375 = vld [vmem:[#allocation2 + $0x830] sm:$0xff]
    %v376 = vld [vmem:[#allocation2 + $0x838] sm:$0xff]
    %v377 = vld [vmem:[#allocation2 + $0x840] sm:$0xff]
    %v378 = vld [vmem:[#allocation2 + $0x848] sm:$0xff]
    %v379 = vld [vmem:[#allocation2 + $0x850] sm:$0xff]
    %v380 = vld [vmem:[#allocation2 + $0x858] sm:$0xff]
    %v381 = vld [vmem:[#allocation2 + $0x860] sm:$0xff]
    %v382 = vld [vmem:[#allocation2 + $0x868] sm:$0xff]
    %v383 = vld [vmem:[#allocation2 + $0x870] sm:$0xff]
    %v384 = vld [vmem:[#allocation2 + $0x878] sm:$0xff]
    %v385 = vld [vmem:[#allocation2 + $0x880] sm:$0xff]
    %v386 = vld [vmem:[#allocation2 + $0x888] sm:$0xff]
    %v387 = vld [vmem:[#allocation2 + $0x890] sm:$0xff]
    %v388 = vld [vmem:[#allocation2 + $0x898] sm:$0xff]
    %v389 = vld [vmem:[#allocation2 + $0x8a0] sm:$0xff]
    %v390 = vld [vmem:[#allocation2 + $0x8a8] sm:$0xff]
    %v391 = vld [vmem:[#allocation2 + $0x8b0] sm:$0xff]
    %v392 = vld [vmem:[#allocation2 + $0x8b8] sm:$0xff]
    %v393 = vld [vmem:[#allocation2 + $0x8c0] sm:$0xff]
    %v394 = vld [vmem:[#allocation2 + $0x8c8] sm:$0xff]
    %v395 = vld [vmem:[#allocation2 + $0x8d0] sm:$0xff]
    %v396 = vld [vmem:[#allocation2 + $0x8d8] sm:$0xff]
    %v397 = vld [vmem:[#allocation2 + $0x8e0] sm:$0xff]
    %v398 = vld [vmem:[#allocation2 + $0x8e8] sm:$0xff]
    %v399 = vld [vmem:[#allocation2 + $0x8f0] sm:$0xff]
    %v400 = vld [vmem:[#allocation2 + $0x8f8] sm:$0xff]
    %v401 = vld [vmem:[#allocation2 + $0x900] sm:$0xff]
    %v402 = vld [vmem:[#allocation2 + $0x908] sm:$0xff]
    %v403 = vld [vmem:[#allocation2 + $0x910] sm:$0xff]
    %v404 = vld [vmem:[#allocation2 + $0x918] sm:$0xff]
    %v405 = vld [vmem:[#allocation2 + $0x920] sm:$0xff]
    %v406 = vld [vmem:[#allocation2 + $0x928] sm:$0xff]
    %v407 = vld [vmem:[#allocation2 + $0x930] sm:$0xff]
    %v408 = vld [vmem:[#allocation2 + $0x938] sm:$0xff]
    %v409 = vld [vmem:[#allocation2 + $0x940] sm:$0xff]
    %v410 = vld [vmem:[#allocation2 + $0x948] sm:$0xff]
    %v411 = vld [vmem:[#allocation2 + $0x950] sm:$0xff]
    %v412 = vld [vmem:[#allocation2 + $0x958] sm:$0xff]
    %v413 = vld [vmem:[#allocation2 + $0x960] sm:$0xff]
    %v414 = vld [vmem:[#allocation2 + $0x968] sm:$0xff]
    %v415 = vld [vmem:[#allocation2 + $0x970] sm:$0xff]
    %v416 = vld [vmem:[#allocation2 + $0x978] sm:$0xff]
    %v417 = vld [vmem:[#allocation2 + $0x980] sm:$0xff]
    %v418 = vld [vmem:[#allocation2 + $0x988] sm:$0xff]
    %v419 = vld [vmem:[#allocation2 + $0x990] sm:$0xff]
    %v420 = vld [vmem:[#allocation2 + $0x998] sm:$0xff]
    %v421 = vld [vmem:[#allocation2 + $0x9a0] sm:$0xff]
    %v422 = vld [vmem:[#allocation2 + $0x9a8] sm:$0xff]
    %v423 = vld [vmem:[#allocation2 + $0x9b0] sm:$0xff]
    %v424 = vld [vmem:[#allocation2 + $0x9b8] sm:$0xff]
    %v425 = vld [vmem:[#allocation2 + $0x9c0] sm:$0xff]
    %v426 = vld [vmem:[#allocation2 + $0x9c8] sm:$0xff]
    %v427 = vld [vmem:[#allocation2 + $0x9d0] sm:$0xff]
    %v428 = vld [vmem:[#allocation2 + $0x9d8] sm:$0xff]
    %v429 = vld [vmem:[#allocation2 + $0x9e0] sm:$0xff]
    %v430 = vld [vmem:[#allocation2 + $0x9e8] sm:$0xff]
    %v431 = vld [vmem:[#allocation2 + $0x9f0] sm:$0xff]
    %v432 = vld [vmem:[#allocation2 + $0x9f8] sm:$0xff]
    %v433 = vld [vmem:[#allocation2 + $0xa00] sm:$0xff]
    %v434 = vld [vmem:[#allocation2 + $0xa08] sm:$0xff]
    %v435 = vld [vmem:[#allocation2 + $0xa10] sm:$0xff]
    %v436 = vld [vmem:[#allocation2 + $0xa18] sm:$0xff]
    %v437 = vld [vmem:[#allocation2 + $0xa20] sm:$0xff]
    %v438 = vld [vmem:[#allocation2 + $0xa28] sm:$0xff]
    %v439 = vld [vmem:[#allocation2 + $0xa30] sm:$0xff]
    %v440 = vld [vmem:[#allocation2 + $0xa38] sm:$0xff]
    %v441 = vld [vmem:[#allocation2 + $0xa40] sm:$0xff]
    %v442 = vld [vmem:[#allocation2 + $0xa48] sm:$0xff]
    %v443 = vld [vmem:[#allocation2 + $0xa50] sm:$0xff]
    %v444 = vld [vmem:[#allocation2 + $0xa58] sm:$0xff]
    %v445 = vld [vmem:[#allocation2 + $0xa60] sm:$0xff]
    %v446 = vld [vmem:[#allocation2 + $0xa68] sm:$0xff]
    %v447 = vld [vmem:[#allocation2 + $0xa70] sm:$0xff]
    %v448 = vld [vmem:[#allocation2 + $0xa78] sm:$0xff]
    %v449 = vld [vmem:[#allocation2 + $0xa80] sm:$0xff]
    %v450 = vld [vmem:[#allocation2 + $0xa88] sm:$0xff]
    %v451 = vld [vmem:[#allocation2 + $0xa90] sm:$0xff]
    %v452 = vld [vmem:[#allocation2 + $0xa98] sm:$0xff]
    %v453 = vld [vmem:[#allocation2 + $0xaa0] sm:$0xff]
    %v454 = vld [vmem:[#allocation2 + $0xaa8] sm:$0xff]
    %v455 = vld [vmem:[#allocation2 + $0xab0] sm:$0xff]
    %v456 = vld [vmem:[#allocation2 + $0xab8] sm:$0xff]
    %v457 = vld [vmem:[#allocation2 + $0xac0] sm:$0xff]
    %v458 = vld [vmem:[#allocation2 + $0xac8] sm:$0xff]
    %v459 = vld [vmem:[#allocation2 + $0xad0] sm:$0xff]
    %v460 = vld [vmem:[#allocation2 + $0xad8] sm:$0xff]
    %v461 = vld [vmem:[#allocation2 + $0xae0] sm:$0xff]
    %v462 = vld [vmem:[#allocation2 + $0xae8] sm:$0xff]
    %v463 = vld [vmem:[#allocation2 + $0xaf0] sm:$0xff]
    %v464 = vld [vmem:[#allocation2 + $0xaf8] sm:$0xff]
    %v465 = vld [vmem:[#allocation2 + $0xb00] sm:$0xff]
    %v466 = vld [vmem:[#allocation2 + $0xb08] sm:$0xff]
    %v467 = vld [vmem:[#allocation2 + $0xb10] sm:$0xff]
    %v468 = vld [vmem:[#allocation2 + $0xb18] sm:$0xff]
    %v469 = vld [vmem:[#allocation2 + $0xb20] sm:$0xff]
    %v470 = vld [vmem:[#allocation2 + $0xb28] sm:$0xff]
    %v471 = vld [vmem:[#allocation2 + $0xb30] sm:$0xff]
    %v472 = vld [vmem:[#allocation2 + $0xb38] sm:$0xff]
    %v473 = vld [vmem:[#allocation2 + $0xb40] sm:$0xff]
    %v474 = vld [vmem:[#allocation2 + $0xb48] sm:$0xff]
    %v475 = vld [vmem:[#allocation2 + $0xb50] sm:$0xff]
    %v476 = vld [vmem:[#allocation2 + $0xb58] sm:$0xff]
    %v477 = vld [vmem:[#allocation2 + $0xb60] sm:$0xff]
    %v478 = vld [vmem:[#allocation2 + $0xb68] sm:$0xff]
    %v479 = vld [vmem:[#allocation2 + $0xb70] sm:$0xff]
    %v480 = vld [vmem:[#allocation2 + $0xb78] sm:$0xff]
    %v481 = vld [vmem:[#allocation2 + $0xb80] sm:$0xff]
    %v482 = vld [vmem:[#allocation2 + $0xb88] sm:$0xff]
    %v483 = vld [vmem:[#allocation2 + $0xb90] sm:$0xff]
    %v484 = vld [vmem:[#allocation2 + $0xb98] sm:$0xff]
    %v485 = vld [vmem:[#allocation2 + $0xba0] sm:$0xff]
    %v486 = vld [vmem:[#allocation2 + $0xba8] sm:$0xff]
    %v487 = vld [vmem:[#allocation2 + $0xbb0] sm:$0xff]
    %v488 = vld [vmem:[#allocation2 + $0xbb8] sm:$0xff]
    %v489 = vld [vmem:[#allocation2 + $0xbc0] sm:$0xff]
    %v490 = vld [vmem:[#allocation2 + $0xbc8] sm:$0xff]
    %v491 = vld [vmem:[#allocation2 + $0xbd0] sm:$0xff]
    %v492 = vld [vmem:[#allocation2 + $0xbd8] sm:$0xff]
    %v493 = vld [vmem:[#allocation2 + $0xbe0] sm:$0xff]
    %v494 = vld [vmem:[#allocation2 + $0xbe8] sm:$0xff]
    %v495 = vld [vmem:[#allocation2 + $0xbf0] sm:$0xff]
    %v496 = vld [vmem:[#allocation2 + $0xbf8] sm:$0xff]
    %v497 = vld [vmem:[#allocation2 + $0xc00] sm:$0xff]
    %v498 = vld [vmem:[#allocation2 + $0xc08] sm:$0xff]
    %v499 = vld [vmem:[#allocation2 + $0xc10] sm:$0xff]
    %v500 = vld [vmem:[#allocation2 + $0xc18] sm:$0xff]
    %v501 = vld [vmem:[#allocation2 + $0xc20] sm:$0xff]
    %v502 = vld [vmem:[#allocation2 + $0xc28] sm:$0xff]
    %v503 = vld [vmem:[#allocation2 + $0xc30] sm:$0xff]
    %v504 = vld [vmem:[#allocation2 + $0xc38] sm:$0xff]
    %v505 = vld [vmem:[#allocation2 + $0xc40] sm:$0xff]
    %v506 = vld [vmem:[#allocation2 + $0xc48] sm:$0xff]
    %v507 = vld [vmem:[#allocation2 + $0xc50] sm:$0xff]
    %v508 = vld [vmem:[#allocation2 + $0xc58] sm:$0xff]
    %v509 = vld [vmem:[#allocation2 + $0xc60] sm:$0xff]
    %v510 = vld [vmem:[#allocation2 + $0xc68] sm:$0xff]
    %v511 = vld [vmem:[#allocation2 + $0xc70] sm:$0xff]
    %v512 = vld [vmem:[#allocation2 + $0xc78] sm:$0xff]
    %v513 = vld [vmem:[#allocation2 + $0xc80] sm:$0xff]
    %v514 = vld [vmem:[#allocation2 + $0xc88] sm:$0xff]
    %v515 = vld [vmem:[#allocation2 + $0xc90] sm:$0xff]
    %v516 = vld [vmem:[#allocation2 + $0xc98] sm:$0xff]
    %v517 = vld [vmem:[#allocation2 + $0xca0] sm:$0xff]
    %v518 = vld [vmem:[#allocation2 + $0xca8] sm:$0xff]
    %v519 = vld [vmem:[#allocation2 + $0xcb0] sm:$0xff]
    %v520 = vld [vmem:[#allocation2 + $0xcb8] sm:$0xff]
    %v521 = vld [vmem:[#allocation2 + $0xcc0] sm:$0xff]
    %v522 = vld [vmem:[#allocation2 + $0xcc8] sm:$0xff]
    %v523 = vld [vmem:[#allocation2 + $0xcd0] sm:$0xff]
    %v524 = vld [vmem:[#allocation2 + $0xcd8] sm:$0xff]
    %v525 = vld [vmem:[#allocation2 + $0xce0] sm:$0xff]
    %v526 = vld [vmem:[#allocation2 + $0xce8] sm:$0xff]
    %v527 = vld [vmem:[#allocation2 + $0xcf0] sm:$0xff]
    %v528 = vld [vmem:[#allocation2 + $0xcf8] sm:$0xff]
    %v529 = vld [vmem:[#allocation2 + $0xd00] sm:$0xff]
    %v530 = vld [vmem:[#allocation2 + $0xd08] sm:$0xff]
    %v531 = vld [vmem:[#allocation2 + $0xd10] sm:$0xff]
    %v532 = vld [vmem:[#allocation2 + $0xd18] sm:$0xff]
    %v533 = vld [vmem:[#allocation2 + $0xd20] sm:$0xff]
    %v534 = vld [vmem:[#allocation2 + $0xd28] sm:$0xff]
    %v535 = vld [vmem:[#allocation2 + $0xd30] sm:$0xff]
    %v536 = vld [vmem:[#allocation2 + $0xd38] sm:$0xff]
    %v537 = vld [vmem:[#allocation2 + $0xd40] sm:$0xff]
    %v538 = vld [vmem:[#allocation2 + $0xd48] sm:$0xff]
    %v539 = vld [vmem:[#allocation2 + $0xd50] sm:$0xff]
    %v540 = vld [vmem:[#allocation2 + $0xd58] sm:$0xff]
    %v541 = vld [vmem:[#allocation2 + $0xd60] sm:$0xff]
    %v542 = vld [vmem:[#allocation2 + $0xd68] sm:$0xff]
    %v543 = vld [vmem:[#allocation2 + $0xd70] sm:$0xff]
    %v544 = vld [vmem:[#allocation2 + $0xd78] sm:$0xff]
    %v545 = vld [vmem:[#allocation2 + $0xd80] sm:$0xff]
    %v546 = vld [vmem:[#allocation2 + $0xd88] sm:$0xff]
    %v547 = vld [vmem:[#allocation2 + $0xd90] sm:$0xff]
    %v548 = vld [vmem:[#allocation2 + $0xd98] sm:$0xff]
    %v549 = vld [vmem:[#allocation2 + $0xda0] sm:$0xff]
    %v550 = vld [vmem:[#allocation2 + $0xda8] sm:$0xff]
    %v551 = vld [vmem:[#allocation2 + $0xdb0] sm:$0xff]
    %v552 = vld [vmem:[#allocation2 + $0xdb8] sm:$0xff]
    %v553 = vld [vmem:[#allocation2 + $0xdc0] sm:$0xff]
    %v554 = vld [vmem:[#allocation2 + $0xdc8] sm:$0xff]
    %v555 = vld [vmem:[#allocation2 + $0xdd0] sm:$0xff]
    %v556 = vld [vmem:[#allocation2 + $0xdd8] sm:$0xff]
    %v557 = vld [vmem:[#allocation2 + $0xde0] sm:$0xff]
    %v558 = vld [vmem:[#allocation2 + $0xde8] sm:$0xff]
    %v559 = vld [vmem:[#allocation2 + $0xdf0] sm:$0xff]
    %v560 = vld [vmem:[#allocation2 + $0xdf8] sm:$0xff]
    %v561 = vld [vmem:[#allocation2 + $0xe00] sm:$0xff]
    %v562 = vld [vmem:[#allocation2 + $0xe08] sm:$0xff]
    %v563 = vld [vmem:[#allocation2 + $0xe10] sm:$0xff]
    %v564 = vld [vmem:[#allocation2 + $0xe18] sm:$0xff]
    %v565 = vld [vmem:[#allocation2 + $0xe20] sm:$0xff]
    %v566 = vld [vmem:[#allocation2 + $0xe28] sm:$0xff]
    %v567 = vld [vmem:[#allocation2 + $0xe30] sm:$0xff]
    %v568 = vld [vmem:[#allocation2 + $0xe38] sm:$0xff]
    %v569 = vld [vmem:[#allocation2 + $0xe40] sm:$0xff]
    %v570 = vld [vmem:[#allocation2 + $0xe48] sm:$0xff]
    %v571 = vld [vmem:[#allocation2 + $0xe50] sm:$0xff]
    %v572 = vld [vmem:[#allocation2 + $0xe58] sm:$0xff]
    %v573 = vld [vmem:[#allocation2 + $0xe60] sm:$0xff]
    %v574 = vld [vmem:[#allocation2 + $0xe68] sm:$0xff]
    %v575 = vld [vmem:[#allocation2 + $0xe70] sm:$0xff]
    %v576 = vld [vmem:[#allocation2 + $0xe78] sm:$0xff]
    %v577 = vld [vmem:[#allocation2 + $0xe80] sm:$0xff]
    %v578 = vld [vmem:[#allocation2 + $0xe88] sm:$0xff]
    %v579 = vld [vmem:[#allocation2 + $0xe90] sm:$0xff]
    %v580 = vld [vmem:[#allocation2 + $0xe98] sm:$0xff]
    %v581 = vld [vmem:[#allocation2 + $0xea0] sm:$0xff]
    %v582 = vld [vmem:[#allocation2 + $0xea8] sm:$0xff]
    %v583 = vld [vmem:[#allocation2 + $0xeb0] sm:$0xff]
    %v584 = vld [vmem:[#allocation2 + $0xeb8] sm:$0xff]
    %v585 = vld [vmem:[#allocation2 + $0xec0] sm:$0xff]
    %v586 = vld [vmem:[#allocation2 + $0xec8] sm:$0xff]
    %v587 = vld [vmem:[#allocation2 + $0xed0] sm:$0xff]
    %v588 = vld [vmem:[#allocation2 + $0xed8] sm:$0xff]
    %v589 = vld [vmem:[#allocation2 + $0xee0] sm:$0xff]
    %v590 = vld [vmem:[#allocation2 + $0xee8] sm:$0xff]
    %v591 = vld [vmem:[#allocation2 + $0xef0] sm:$0xff]
    %v592 = vld [vmem:[#allocation2 + $0xef8] sm:$0xff]
    %v593 = vld [vmem:[#allocation2 + $0xf00] sm:$0xff]
    %v594 = vld [vmem:[#allocation2 + $0xf08] sm:$0xff]
    %v595 = vld [vmem:[#allocation2 + $0xf10] sm:$0xff]
    %v596 = vld [vmem:[#allocation2 + $0xf18] sm:$0xff]
    %v597 = vld [vmem:[#allocation2 + $0xf20] sm:$0xff]
    %v598 = vld [vmem:[#allocation2 + $0xf28] sm:$0xff]
    %v599 = vld [vmem:[#allocation2 + $0xf30] sm:$0xff]
    %v600 = vld [vmem:[#allocation2 + $0xf38] sm:$0xff]
    %v601 = vld [vmem:[#allocation2 + $0xf40] sm:$0xff]
    %v602 = vld [vmem:[#allocation2 + $0xf48] sm:$0xff]
    %v603 = vld [vmem:[#allocation2 + $0xf50] sm:$0xff]
    %v604 = vld [vmem:[#allocation2 + $0xf58] sm:$0xff]
    %v605 = vld [vmem:[#allocation2 + $0xf60] sm:$0xff]
    %v606 = vld [vmem:[#allocation2 + $0xf68] sm:$0xff]
    %v607 = vld [vmem:[#allocation2 + $0xf70] sm:$0xff]
    %v608 = vld [vmem:[#allocation2 + $0xf78] sm:$0xff]
    %v609 = vld [vmem:[#allocation2 + $0xf80] sm:$0xff]
    %v610 = vld [vmem:[#allocation2 + $0xf88] sm:$0xff]
    %v611 = vld [vmem:[#allocation2 + $0xf90] sm:$0xff]
    %v612 = vld [vmem:[#allocation2 + $0xf98] sm:$0xff]
    %v613 = vld [vmem:[#allocation2 + $0xfa0] sm:$0xff]
    %v614 = vld [vmem:[#allocation2 + $0xfa8] sm:$0xff]
    %v615 = vld [vmem:[#allocation2 + $0xfb0] sm:$0xff]
    %v616 = vld [vmem:[#allocation2 + $0xfb8] sm:$0xff]
    %v617 = vld [vmem:[#allocation2 + $0xfc0] sm:$0xff]
    %v618 = vld [vmem:[#allocation2 + $0xfc8] sm:$0xff]
    %v619 = vld [vmem:[#allocation2 + $0xfd0] sm:$0xff]
    %v620 = vld [vmem:[#allocation2 + $0xfd8] sm:$0xff]
    %v621 = vld [vmem:[#allocation2 + $0xfe0] sm:$0xff]
    %v622 = vld [vmem:[#allocation2 + $0xfe8] sm:$0xff]
    %v623 = vld [vmem:[#allocation2 + $0xff0] sm:$0xff]
    %v624 = vld [vmem:[#allocation2 + $0xff8] sm:$0xff]
    %v625 = vld [vmem:[#allocation5] sm:$0xff]
    %v627 = vlaneseq
    %v628 = vshrl.u32 %v627, 7
    %v629 = vsub.s32 0, %v628
    %v630 = vrot.slane %v625, %v629
    %v631 = vlaneseq
    %v632 = vshrl.u32 %v631, 7
    %v633 = vsub.s32 1, %v632
    %v634 = vrot.slane %v625, %v633
    %v635 = vlaneseq
    %v636 = vshrl.u32 %v635, 7
    %v637 = vsub.s32 2, %v636
    %v638 = vrot.slane %v625, %v637
    %v639 = vlaneseq
    %v640 = vshrl.u32 %v639, 7
    %v641 = vsub.s32 3, %v640
    %v642 = vrot.slane %v625, %v641
    %v643 = vlaneseq
    %v644 = vshrl.u32 %v643, 7
    %v645 = vsub.s32 4, %v644
    %v646 = vrot.slane %v625, %v645
    %v647 = vlaneseq
    %v648 = vshrl.u32 %v647, 7
    %v649 = vsub.s32 5, %v648
    %v650 = vrot.slane %v625, %v649
    %v651 = vlaneseq
    %v652 = vshrl.u32 %v651, 7
    %v653 = vsub.s32 6, %v652
    %v654 = vrot.slane %v625, %v653
    %v655 = vlaneseq
    %v656 = vshrl.u32 %v655, 7
    %v657 = vsub.s32 7, %v656
    %v658 = vrot.slane %v625, %v657
    %v675 = vunpack.c.l.b16 %v105
    %v676 = vunpack.c.h.b16 %v105
    %v677 = vunpack.c.l.b16 %v106
    %v678 = vunpack.c.h.b16 %v106
    %v679 = vunpack.c.l.b16 %v107
    %v680 = vunpack.c.h.b16 %v107
    %v681 = vunpack.c.l.b16 %v108
    %v682 = vunpack.c.h.b16 %v108
    %v683 = vunpack.c.l.b16 %v109
    %v684 = vunpack.c.h.b16 %v109
    %v685 = vunpack.c.l.b16 %v110
    %v686 = vunpack.c.h.b16 %v110
    %v687 = vunpack.c.l.b16 %v111
    %v688 = vunpack.c.h.b16 %v111
    %v689 = vunpack.c.l.b16 %v112
    %v690 = vunpack.c.h.b16 %v112
    %v691 = vpack.c.b16 %v683, %v675
    %v692 = vpack.c.b16 %v684, %v676
    %v693 = vpack.c.b16 %v685, %v677
    %v694 = vpack.c.b16 %v686, %v678
    %v695 = vpack.c.b16 %v687, %v679
    %v696 = vpack.c.b16 %v688, %v680
    %v697 = vpack.c.b16 %v689, %v681
    %v698 = vpack.c.b16 %v690, %v682
    %v1219 = vunpack.c.l.b16 %v113
    %v1220 = vunpack.c.h.b16 %v113
    %v1221 = vunpack.c.l.b16 %v114
    %v1222 = vunpack.c.h.b16 %v114
    %v1223 = vunpack.c.l.b16 %v115
    %v1224 = vunpack.c.h.b16 %v115
    %v1225 = vunpack.c.l.b16 %v116
    %v1226 = vunpack.c.h.b16 %v116
    %v1227 = vunpack.c.l.b16 %v117
    %v1228 = vunpack.c.h.b16 %v117
    %v1229 = vunpack.c.l.b16 %v118
    %v1230 = vunpack.c.h.b16 %v118
    %v1231 = vunpack.c.l.b16 %v119
    %v1232 = vunpack.c.h.b16 %v119
    %v1233 = vunpack.c.l.b16 %v120
    %v1234 = vunpack.c.h.b16 %v120
    %v1235 = vunpack.c.l.b16 %v121
    %v1236 = vunpack.c.h.b16 %v121
    %v1237 = vunpack.c.l.b16 %v122
    %v1238 = vunpack.c.h.b16 %v122
    %v1239 = vunpack.c.l.b16 %v123
    %v1240 = vunpack.c.h.b16 %v123
    %v1241 = vunpack.c.l.b16 %v124
    %v1242 = vunpack.c.h.b16 %v124
    %v1243 = vunpack.c.l.b16 %v125
    %v1244 = vunpack.c.h.b16 %v125
    %v1245 = vunpack.c.l.b16 %v126
    %v1246 = vunpack.c.h.b16 %v126
    %v1247 = vunpack.c.l.b16 %v127
    %v1248 = vunpack.c.h.b16 %v127
    %v1249 = vunpack.c.l.b16 %v128
    %v1250 = vunpack.c.h.b16 %v128
    %v1251 = vunpack.c.l.b16 %v129
    %v1252 = vunpack.c.h.b16 %v129
    %v1253 = vunpack.c.l.b16 %v130
    %v1254 = vunpack.c.h.b16 %v130
    %v1255 = vunpack.c.l.b16 %v131
    %v1256 = vunpack.c.h.b16 %v131
    %v1257 = vunpack.c.l.b16 %v132
    %v1258 = vunpack.c.h.b16 %v132
    %v1259 = vunpack.c.l.b16 %v133
    %v1260 = vunpack.c.h.b16 %v133
    %v1261 = vunpack.c.l.b16 %v134
    %v1262 = vunpack.c.h.b16 %v134
    %v1263 = vunpack.c.l.b16 %v135
    %v1264 = vunpack.c.h.b16 %v135
    %v1265 = vunpack.c.l.b16 %v136
    %v1266 = vunpack.c.h.b16 %v136
    %v1267 = vunpack.c.l.b16 %v137
    %v1268 = vunpack.c.h.b16 %v137
    %v1269 = vunpack.c.l.b16 %v138
    %v1270 = vunpack.c.h.b16 %v138
    %v1271 = vunpack.c.l.b16 %v139
    %v1272 = vunpack.c.h.b16 %v139
    %v1273 = vunpack.c.l.b16 %v140
    %v1274 = vunpack.c.h.b16 %v140
    %v1275 = vunpack.c.l.b16 %v141
    %v1276 = vunpack.c.h.b16 %v141
    %v1277 = vunpack.c.l.b16 %v142
    %v1278 = vunpack.c.h.b16 %v142
    %v1279 = vunpack.c.l.b16 %v143
    %v1280 = vunpack.c.h.b16 %v143
    %v1281 = vunpack.c.l.b16 %v144
    %v1282 = vunpack.c.h.b16 %v144
    %v1283 = vunpack.c.l.b16 %v145
    %v1284 = vunpack.c.h.b16 %v145
    %v1285 = vunpack.c.l.b16 %v146
    %v1286 = vunpack.c.h.b16 %v146
    %v1287 = vunpack.c.l.b16 %v147
    %v1288 = vunpack.c.h.b16 %v147
    %v1289 = vunpack.c.l.b16 %v148
    %v1290 = vunpack.c.h.b16 %v148
    %v1291 = vunpack.c.l.b16 %v149
    %v1292 = vunpack.c.h.b16 %v149
    %v1293 = vunpack.c.l.b16 %v150
    %v1294 = vunpack.c.h.b16 %v150
    %v1295 = vunpack.c.l.b16 %v151
    %v1296 = vunpack.c.h.b16 %v151
    %v1297 = vunpack.c.l.b16 %v152
    %v1298 = vunpack.c.h.b16 %v152
    %v1299 = vunpack.c.l.b16 %v153
    %v1300 = vunpack.c.h.b16 %v153
    %v1301 = vunpack.c.l.b16 %v154
    %v1302 = vunpack.c.h.b16 %v154
    %v1303 = vunpack.c.l.b16 %v155
    %v1304 = vunpack.c.h.b16 %v155
    %v1305 = vunpack.c.l.b16 %v156
    %v1306 = vunpack.c.h.b16 %v156
    %v1307 = vunpack.c.l.b16 %v157
    %v1308 = vunpack.c.h.b16 %v157
    %v1309 = vunpack.c.l.b16 %v158
    %v1310 = vunpack.c.h.b16 %v158
    %v1311 = vunpack.c.l.b16 %v159
    %v1312 = vunpack.c.h.b16 %v159
    %v1313 = vunpack.c.l.b16 %v160
    %v1314 = vunpack.c.h.b16 %v160
    %v1315 = vunpack.c.l.b16 %v161
    %v1316 = vunpack.c.h.b16 %v161
    %v1317 = vunpack.c.l.b16 %v162
    %v1318 = vunpack.c.h.b16 %v162
    %v1319 = vunpack.c.l.b16 %v163
    %v1320 = vunpack.c.h.b16 %v163
    %v1321 = vunpack.c.l.b16 %v164
    %v1322 = vunpack.c.h.b16 %v164
    %v1323 = vunpack.c.l.b16 %v165
    %v1324 = vunpack.c.h.b16 %v165
    %v1325 = vunpack.c.l.b16 %v166
    %v1326 = vunpack.c.h.b16 %v166
    %v1327 = vunpack.c.l.b16 %v167
    %v1328 = vunpack.c.h.b16 %v167
    %v1329 = vunpack.c.l.b16 %v168
    %v1330 = vunpack.c.h.b16 %v168
    %v1331 = vunpack.c.l.b16 %v169
    %v1332 = vunpack.c.h.b16 %v169
    %v1333 = vunpack.c.l.b16 %v170
    %v1334 = vunpack.c.h.b16 %v170
    %v1335 = vunpack.c.l.b16 %v171
    %v1336 = vunpack.c.h.b16 %v171
    %v1337 = vunpack.c.l.b16 %v172
    %v1338 = vunpack.c.h.b16 %v172
    %v1339 = vunpack.c.l.b16 %v173
    %v1340 = vunpack.c.h.b16 %v173
    %v1341 = vunpack.c.l.b16 %v174
    %v1342 = vunpack.c.h.b16 %v174
    %v1343 = vunpack.c.l.b16 %v175
    %v1344 = vunpack.c.h.b16 %v175
    %v1345 = vunpack.c.l.b16 %v176
    %v1346 = vunpack.c.h.b16 %v176
    %v1347 = vunpack.c.l.b16 %v177
    %v1348 = vunpack.c.h.b16 %v177
    %v1349 = vunpack.c.l.b16 %v178
    %v1350 = vunpack.c.h.b16 %v178
    %v1351 = vunpack.c.l.b16 %v179
    %v1352 = vunpack.c.h.b16 %v179
    %v1353 = vunpack.c.l.b16 %v180
    %v1354 = vunpack.c.h.b16 %v180
    %v1355 = vunpack.c.l.b16 %v181
    %v1356 = vunpack.c.h.b16 %v181
    %v1357 = vunpack.c.l.b16 %v182
    %v1358 = vunpack.c.h.b16 %v182
    %v1359 = vunpack.c.l.b16 %v183
    %v1360 = vunpack.c.h.b16 %v183
    %v1361 = vunpack.c.l.b16 %v184
    %v1362 = vunpack.c.h.b16 %v184
    %v1363 = vunpack.c.l.b16 %v185
    %v1364 = vunpack.c.h.b16 %v185
    %v1365 = vunpack.c.l.b16 %v186
    %v1366 = vunpack.c.h.b16 %v186
    %v1367 = vunpack.c.l.b16 %v187
    %v1368 = vunpack.c.h.b16 %v187
    %v1369 = vunpack.c.l.b16 %v188
    %v1370 = vunpack.c.h.b16 %v188
    %v1371 = vunpack.c.l.b16 %v189
    %v1372 = vunpack.c.h.b16 %v189
    %v1373 = vunpack.c.l.b16 %v190
    %v1374 = vunpack.c.h.b16 %v190
    %v1375 = vunpack.c.l.b16 %v191
    %v1376 = vunpack.c.h.b16 %v191
    %v1377 = vunpack.c.l.b16 %v192
    %v1378 = vunpack.c.h.b16 %v192
    %v1379 = vunpack.c.l.b16 %v193
    %v1380 = vunpack.c.h.b16 %v193
    %v1381 = vunpack.c.l.b16 %v194
    %v1382 = vunpack.c.h.b16 %v194
    %v1383 = vunpack.c.l.b16 %v195
    %v1384 = vunpack.c.h.b16 %v195
    %v1385 = vunpack.c.l.b16 %v196
    %v1386 = vunpack.c.h.b16 %v196
    %v1387 = vunpack.c.l.b16 %v197
    %v1388 = vunpack.c.h.b16 %v197
    %v1389 = vunpack.c.l.b16 %v198
    %v1390 = vunpack.c.h.b16 %v198
    %v1391 = vunpack.c.l.b16 %v199
    %v1392 = vunpack.c.h.b16 %v199
    %v1393 = vunpack.c.l.b16 %v200
    %v1394 = vunpack.c.h.b16 %v200
    %v1395 = vunpack.c.l.b16 %v201
    %v1396 = vunpack.c.h.b16 %v201
    %v1397 = vunpack.c.l.b16 %v202
    %v1398 = vunpack.c.h.b16 %v202
    %v1399 = vunpack.c.l.b16 %v203
    %v1400 = vunpack.c.h.b16 %v203
    %v1401 = vunpack.c.l.b16 %v204
    %v1402 = vunpack.c.h.b16 %v204
    %v1403 = vunpack.c.l.b16 %v205
    %v1404 = vunpack.c.h.b16 %v205
    %v1405 = vunpack.c.l.b16 %v206
    %v1406 = vunpack.c.h.b16 %v206
    %v1407 = vunpack.c.l.b16 %v207
    %v1408 = vunpack.c.h.b16 %v207
    %v1409 = vunpack.c.l.b16 %v208
    %v1410 = vunpack.c.h.b16 %v208
    %v1411 = vunpack.c.l.b16 %v209
    %v1412 = vunpack.c.h.b16 %v209
    %v1413 = vunpack.c.l.b16 %v210
    %v1414 = vunpack.c.h.b16 %v210
    %v1415 = vunpack.c.l.b16 %v211
    %v1416 = vunpack.c.h.b16 %v211
    %v1417 = vunpack.c.l.b16 %v212
    %v1418 = vunpack.c.h.b16 %v212
    %v1419 = vunpack.c.l.b16 %v213
    %v1420 = vunpack.c.h.b16 %v213
    %v1421 = vunpack.c.l.b16 %v214
    %v1422 = vunpack.c.h.b16 %v214
    %v1423 = vunpack.c.l.b16 %v215
    %v1424 = vunpack.c.h.b16 %v215
    %v1425 = vunpack.c.l.b16 %v216
    %v1426 = vunpack.c.h.b16 %v216
    %v1427 = vunpack.c.l.b16 %v217
    %v1428 = vunpack.c.h.b16 %v217
    %v1429 = vunpack.c.l.b16 %v218
    %v1430 = vunpack.c.h.b16 %v218
    %v1431 = vunpack.c.l.b16 %v219
    %v1432 = vunpack.c.h.b16 %v219
    %v1433 = vunpack.c.l.b16 %v220
    %v1434 = vunpack.c.h.b16 %v220
    %v1435 = vunpack.c.l.b16 %v221
    %v1436 = vunpack.c.h.b16 %v221
    %v1437 = vunpack.c.l.b16 %v222
    %v1438 = vunpack.c.h.b16 %v222
    %v1439 = vunpack.c.l.b16 %v223
    %v1440 = vunpack.c.h.b16 %v223
    %v1441 = vunpack.c.l.b16 %v224
    %v1442 = vunpack.c.h.b16 %v224
    %v1443 = vunpack.c.l.b16 %v225
    %v1444 = vunpack.c.h.b16 %v225
    %v1445 = vunpack.c.l.b16 %v226
    %v1446 = vunpack.c.h.b16 %v226
    %v1447 = vunpack.c.l.b16 %v227
    %v1448 = vunpack.c.h.b16 %v227
    %v1449 = vunpack.c.l.b16 %v228
    %v1450 = vunpack.c.h.b16 %v228
    %v1451 = vunpack.c.l.b16 %v229
    %v1452 = vunpack.c.h.b16 %v229
    %v1453 = vunpack.c.l.b16 %v230
    %v1454 = vunpack.c.h.b16 %v230
    %v1455 = vunpack.c.l.b16 %v231
    %v1456 = vunpack.c.h.b16 %v231
    %v1457 = vunpack.c.l.b16 %v232
    %v1458 = vunpack.c.h.b16 %v232
    %v1459 = vunpack.c.l.b16 %v233
    %v1460 = vunpack.c.h.b16 %v233
    %v1461 = vunpack.c.l.b16 %v234
    %v1462 = vunpack.c.h.b16 %v234
    %v1463 = vunpack.c.l.b16 %v235
    %v1464 = vunpack.c.h.b16 %v235
    %v1465 = vunpack.c.l.b16 %v236
    %v1466 = vunpack.c.h.b16 %v236
    %v1467 = vunpack.c.l.b16 %v237
    %v1468 = vunpack.c.h.b16 %v237
    %v1469 = vunpack.c.l.b16 %v238
    %v1470 = vunpack.c.h.b16 %v238
    %v1471 = vunpack.c.l.b16 %v239
    %v1472 = vunpack.c.h.b16 %v239
    %v1473 = vunpack.c.l.b16 %v240
    %v1474 = vunpack.c.h.b16 %v240
    %v1475 = vunpack.c.l.b16 %v241
    %v1476 = vunpack.c.h.b16 %v241
    %v1477 = vunpack.c.l.b16 %v242
    %v1478 = vunpack.c.h.b16 %v242
    %v1479 = vunpack.c.l.b16 %v243
    %v1480 = vunpack.c.h.b16 %v243
    %v1481 = vunpack.c.l.b16 %v244
    %v1482 = vunpack.c.h.b16 %v244
    %v1483 = vunpack.c.l.b16 %v245
    %v1484 = vunpack.c.h.b16 %v245
    %v1485 = vunpack.c.l.b16 %v246
    %v1486 = vunpack.c.h.b16 %v246
    %v1487 = vunpack.c.l.b16 %v247
    %v1488 = vunpack.c.h.b16 %v247
    %v1489 = vunpack.c.l.b16 %v248
    %v1490 = vunpack.c.h.b16 %v248
    %v1491 = vunpack.c.l.b16 %v249
    %v1492 = vunpack.c.h.b16 %v249
    %v1493 = vunpack.c.l.b16 %v250
    %v1494 = vunpack.c.h.b16 %v250
    %v1495 = vunpack.c.l.b16 %v251
    %v1496 = vunpack.c.h.b16 %v251
    %v1497 = vunpack.c.l.b16 %v252
    %v1498 = vunpack.c.h.b16 %v252
    %v1499 = vunpack.c.l.b16 %v253
    %v1500 = vunpack.c.h.b16 %v253
    %v1501 = vunpack.c.l.b16 %v254
    %v1502 = vunpack.c.h.b16 %v254
    %v1503 = vunpack.c.l.b16 %v255
    %v1504 = vunpack.c.h.b16 %v255
    %v1505 = vunpack.c.l.b16 %v256
    %v1506 = vunpack.c.h.b16 %v256
    %v1507 = vunpack.c.l.b16 %v257
    %v1508 = vunpack.c.h.b16 %v257
    %v1509 = vunpack.c.l.b16 %v258
    %v1510 = vunpack.c.h.b16 %v258
    %v1511 = vunpack.c.l.b16 %v259
    %v1512 = vunpack.c.h.b16 %v259
    %v1513 = vunpack.c.l.b16 %v260
    %v1514 = vunpack.c.h.b16 %v260
    %v1515 = vunpack.c.l.b16 %v261
    %v1516 = vunpack.c.h.b16 %v261
    %v1517 = vunpack.c.l.b16 %v262
    %v1518 = vunpack.c.h.b16 %v262
    %v1519 = vunpack.c.l.b16 %v263
    %v1520 = vunpack.c.h.b16 %v263
    %v1521 = vunpack.c.l.b16 %v264
    %v1522 = vunpack.c.h.b16 %v264
    %v1523 = vunpack.c.l.b16 %v265
    %v1524 = vunpack.c.h.b16 %v265
    %v1525 = vunpack.c.l.b16 %v266
    %v1526 = vunpack.c.h.b16 %v266
    %v1527 = vunpack.c.l.b16 %v267
    %v1528 = vunpack.c.h.b16 %v267
    %v1529 = vunpack.c.l.b16 %v268
    %v1530 = vunpack.c.h.b16 %v268
    %v1531 = vunpack.c.l.b16 %v269
    %v1532 = vunpack.c.h.b16 %v269
    %v1533 = vunpack.c.l.b16 %v270
    %v1534 = vunpack.c.h.b16 %v270
    %v1535 = vunpack.c.l.b16 %v271
    %v1536 = vunpack.c.h.b16 %v271
    %v1537 = vunpack.c.l.b16 %v272
    %v1538 = vunpack.c.h.b16 %v272
    %v1539 = vunpack.c.l.b16 %v273
    %v1540 = vunpack.c.h.b16 %v273
    %v1541 = vunpack.c.l.b16 %v274
    %v1542 = vunpack.c.h.b16 %v274
    %v1543 = vunpack.c.l.b16 %v275
    %v1544 = vunpack.c.h.b16 %v275
    %v1545 = vunpack.c.l.b16 %v276
    %v1546 = vunpack.c.h.b16 %v276
    %v1547 = vunpack.c.l.b16 %v277
    %v1548 = vunpack.c.h.b16 %v277
    %v1549 = vunpack.c.l.b16 %v278
    %v1550 = vunpack.c.h.b16 %v278
    %v1551 = vunpack.c.l.b16 %v279
    %v1552 = vunpack.c.h.b16 %v279
    %v1553 = vunpack.c.l.b16 %v280
    %v1554 = vunpack.c.h.b16 %v280
    %v1555 = vunpack.c.l.b16 %v281
    %v1556 = vunpack.c.h.b16 %v281
    %v1557 = vunpack.c.l.b16 %v282
    %v1558 = vunpack.c.h.b16 %v282
    %v1559 = vunpack.c.l.b16 %v283
    %v1560 = vunpack.c.h.b16 %v283
    %v1561 = vunpack.c.l.b16 %v284
    %v1562 = vunpack.c.h.b16 %v284
    %v1563 = vunpack.c.l.b16 %v285
    %v1564 = vunpack.c.h.b16 %v285
    %v1565 = vunpack.c.l.b16 %v286
    %v1566 = vunpack.c.h.b16 %v286
    %v1567 = vunpack.c.l.b16 %v287
    %v1568 = vunpack.c.h.b16 %v287
    %v1569 = vunpack.c.l.b16 %v288
    %v1570 = vunpack.c.h.b16 %v288
    %v1571 = vunpack.c.l.b16 %v289
    %v1572 = vunpack.c.h.b16 %v289
    %v1573 = vunpack.c.l.b16 %v290
    %v1574 = vunpack.c.h.b16 %v290
    %v1575 = vunpack.c.l.b16 %v291
    %v1576 = vunpack.c.h.b16 %v291
    %v1577 = vunpack.c.l.b16 %v292
    %v1578 = vunpack.c.h.b16 %v292
    %v1579 = vunpack.c.l.b16 %v293
    %v1580 = vunpack.c.h.b16 %v293
    %v1581 = vunpack.c.l.b16 %v294
    %v1582 = vunpack.c.h.b16 %v294
    %v1583 = vunpack.c.l.b16 %v295
    %v1584 = vunpack.c.h.b16 %v295
    %v1585 = vunpack.c.l.b16 %v296
    %v1586 = vunpack.c.h.b16 %v296
    %v1587 = vunpack.c.l.b16 %v297
    %v1588 = vunpack.c.h.b16 %v297
    %v1589 = vunpack.c.l.b16 %v298
    %v1590 = vunpack.c.h.b16 %v298
    %v1591 = vunpack.c.l.b16 %v299
    %v1592 = vunpack.c.h.b16 %v299
    %v1593 = vunpack.c.l.b16 %v300
    %v1594 = vunpack.c.h.b16 %v300
    %v1595 = vunpack.c.l.b16 %v301
    %v1596 = vunpack.c.h.b16 %v301
    %v1597 = vunpack.c.l.b16 %v302
    %v1598 = vunpack.c.h.b16 %v302
    %v1599 = vunpack.c.l.b16 %v303
    %v1600 = vunpack.c.h.b16 %v303
    %v1601 = vunpack.c.l.b16 %v304
    %v1602 = vunpack.c.h.b16 %v304
    %v1603 = vunpack.c.l.b16 %v305
    %v1604 = vunpack.c.h.b16 %v305
    %v1605 = vunpack.c.l.b16 %v306
    %v1606 = vunpack.c.h.b16 %v306
    %v1607 = vunpack.c.l.b16 %v307
    %v1608 = vunpack.c.h.b16 %v307
    %v1609 = vunpack.c.l.b16 %v308
    %v1610 = vunpack.c.h.b16 %v308
    %v1611 = vunpack.c.l.b16 %v309
    %v1612 = vunpack.c.h.b16 %v309
    %v1613 = vunpack.c.l.b16 %v310
    %v1614 = vunpack.c.h.b16 %v310
    %v1615 = vunpack.c.l.b16 %v311
    %v1616 = vunpack.c.h.b16 %v311
    %v1617 = vunpack.c.l.b16 %v312
    %v1618 = vunpack.c.h.b16 %v312
    %v1619 = vunpack.c.l.b16 %v313
    %v1620 = vunpack.c.h.b16 %v313
    %v1621 = vunpack.c.l.b16 %v314
    %v1622 = vunpack.c.h.b16 %v314
    %v1623 = vunpack.c.l.b16 %v315
    %v1624 = vunpack.c.h.b16 %v315
    %v1625 = vunpack.c.l.b16 %v316
    %v1626 = vunpack.c.h.b16 %v316
    %v1627 = vunpack.c.l.b16 %v317
    %v1628 = vunpack.c.h.b16 %v317
    %v1629 = vunpack.c.l.b16 %v318
    %v1630 = vunpack.c.h.b16 %v318
    %v1631 = vunpack.c.l.b16 %v319
    %v1632 = vunpack.c.h.b16 %v319
    %v1633 = vunpack.c.l.b16 %v320
    %v1634 = vunpack.c.h.b16 %v320
    %v1635 = vunpack.c.l.b16 %v321
    %v1636 = vunpack.c.h.b16 %v321
    %v1637 = vunpack.c.l.b16 %v322
    %v1638 = vunpack.c.h.b16 %v322
    %v1639 = vunpack.c.l.b16 %v323
    %v1640 = vunpack.c.h.b16 %v323
    %v1641 = vunpack.c.l.b16 %v324
    %v1642 = vunpack.c.h.b16 %v324
    %v1643 = vunpack.c.l.b16 %v325
    %v1644 = vunpack.c.h.b16 %v325
    %v1645 = vunpack.c.l.b16 %v326
    %v1646 = vunpack.c.h.b16 %v326
    %v1647 = vunpack.c.l.b16 %v327
    %v1648 = vunpack.c.h.b16 %v327
    %v1649 = vunpack.c.l.b16 %v328
    %v1650 = vunpack.c.h.b16 %v328
    %v1651 = vunpack.c.l.b16 %v329
    %v1652 = vunpack.c.h.b16 %v329
    %v1653 = vunpack.c.l.b16 %v330
    %v1654 = vunpack.c.h.b16 %v330
    %v1655 = vunpack.c.l.b16 %v331
    %v1656 = vunpack.c.h.b16 %v331
    %v1657 = vunpack.c.l.b16 %v332
    %v1658 = vunpack.c.h.b16 %v332
    %v1659 = vunpack.c.l.b16 %v333
    %v1660 = vunpack.c.h.b16 %v333
    %v1661 = vunpack.c.l.b16 %v334
    %v1662 = vunpack.c.h.b16 %v334
    %v1663 = vunpack.c.l.b16 %v335
    %v1664 = vunpack.c.h.b16 %v335
    %v1665 = vunpack.c.l.b16 %v336
    %v1666 = vunpack.c.h.b16 %v336
    %v1667 = vunpack.c.l.b16 %v337
    %v1668 = vunpack.c.h.b16 %v337
    %v1669 = vunpack.c.l.b16 %v338
    %v1670 = vunpack.c.h.b16 %v338
    %v1671 = vunpack.c.l.b16 %v339
    %v1672 = vunpack.c.h.b16 %v339
    %v1673 = vunpack.c.l.b16 %v340
    %v1674 = vunpack.c.h.b16 %v340
    %v1675 = vunpack.c.l.b16 %v341
    %v1676 = vunpack.c.h.b16 %v341
    %v1677 = vunpack.c.l.b16 %v342
    %v1678 = vunpack.c.h.b16 %v342
    %v1679 = vunpack.c.l.b16 %v343
    %v1680 = vunpack.c.h.b16 %v343
    %v1681 = vunpack.c.l.b16 %v344
    %v1682 = vunpack.c.h.b16 %v344
    %v1683 = vunpack.c.l.b16 %v345
    %v1684 = vunpack.c.h.b16 %v345
    %v1685 = vunpack.c.l.b16 %v346
    %v1686 = vunpack.c.h.b16 %v346
    %v1687 = vunpack.c.l.b16 %v347
    %v1688 = vunpack.c.h.b16 %v347
    %v1689 = vunpack.c.l.b16 %v348
    %v1690 = vunpack.c.h.b16 %v348
    %v1691 = vunpack.c.l.b16 %v349
    %v1692 = vunpack.c.h.b16 %v349
    %v1693 = vunpack.c.l.b16 %v350
    %v1694 = vunpack.c.h.b16 %v350
    %v1695 = vunpack.c.l.b16 %v351
    %v1696 = vunpack.c.h.b16 %v351
    %v1697 = vunpack.c.l.b16 %v352
    %v1698 = vunpack.c.h.b16 %v352
    %v1699 = vunpack.c.l.b16 %v353
    %v1700 = vunpack.c.h.b16 %v353
    %v1701 = vunpack.c.l.b16 %v354
    %v1702 = vunpack.c.h.b16 %v354
    %v1703 = vunpack.c.l.b16 %v355
    %v1704 = vunpack.c.h.b16 %v355
    %v1705 = vunpack.c.l.b16 %v356
    %v1706 = vunpack.c.h.b16 %v356
    %v1707 = vunpack.c.l.b16 %v357
    %v1708 = vunpack.c.h.b16 %v357
    %v1709 = vunpack.c.l.b16 %v358
    %v1710 = vunpack.c.h.b16 %v358
    %v1711 = vunpack.c.l.b16 %v359
    %v1712 = vunpack.c.h.b16 %v359
    %v1713 = vunpack.c.l.b16 %v360
    %v1714 = vunpack.c.h.b16 %v360
    %v1715 = vunpack.c.l.b16 %v361
    %v1716 = vunpack.c.h.b16 %v361
    %v1717 = vunpack.c.l.b16 %v362
    %v1718 = vunpack.c.h.b16 %v362
    %v1719 = vunpack.c.l.b16 %v363
    %v1720 = vunpack.c.h.b16 %v363
    %v1721 = vunpack.c.l.b16 %v364
    %v1722 = vunpack.c.h.b16 %v364
    %v1723 = vunpack.c.l.b16 %v365
    %v1724 = vunpack.c.h.b16 %v365
    %v1725 = vunpack.c.l.b16 %v366
    %v1726 = vunpack.c.h.b16 %v366
    %v1727 = vunpack.c.l.b16 %v367
    %v1728 = vunpack.c.h.b16 %v367
    %v1729 = vunpack.c.l.b16 %v368
    %v1730 = vunpack.c.h.b16 %v368
    %v1731 = vunpack.c.l.b16 %v369
    %v1732 = vunpack.c.h.b16 %v369
    %v1733 = vunpack.c.l.b16 %v370
    %v1734 = vunpack.c.h.b16 %v370
    %v1735 = vunpack.c.l.b16 %v371
    %v1736 = vunpack.c.h.b16 %v371
    %v1737 = vunpack.c.l.b16 %v372
    %v1738 = vunpack.c.h.b16 %v372
    %v1739 = vunpack.c.l.b16 %v373
    %v1740 = vunpack.c.h.b16 %v373
    %v1741 = vunpack.c.l.b16 %v374
    %v1742 = vunpack.c.h.b16 %v374
    %v1743 = vunpack.c.l.b16 %v375
    %v1744 = vunpack.c.h.b16 %v375
    %v1745 = vunpack.c.l.b16 %v376
    %v1746 = vunpack.c.h.b16 %v376
    %v1747 = vunpack.c.l.b16 %v377
    %v1748 = vunpack.c.h.b16 %v377
    %v1749 = vunpack.c.l.b16 %v378
    %v1750 = vunpack.c.h.b16 %v378
    %v1751 = vunpack.c.l.b16 %v379
    %v1752 = vunpack.c.h.b16 %v379
    %v1753 = vunpack.c.l.b16 %v380
    %v1754 = vunpack.c.h.b16 %v380
    %v1755 = vunpack.c.l.b16 %v381
    %v1756 = vunpack.c.h.b16 %v381
    %v1757 = vunpack.c.l.b16 %v382
    %v1758 = vunpack.c.h.b16 %v382
    %v1759 = vunpack.c.l.b16 %v383
    %v1760 = vunpack.c.h.b16 %v383
    %v1761 = vunpack.c.l.b16 %v384
    %v1762 = vunpack.c.h.b16 %v384
    %v1763 = vunpack.c.l.b16 %v385
    %v1764 = vunpack.c.h.b16 %v385
    %v1765 = vunpack.c.l.b16 %v386
    %v1766 = vunpack.c.h.b16 %v386
    %v1767 = vunpack.c.l.b16 %v387
    %v1768 = vunpack.c.h.b16 %v387
    %v1769 = vunpack.c.l.b16 %v388
    %v1770 = vunpack.c.h.b16 %v388
    %v1771 = vunpack.c.l.b16 %v389
    %v1772 = vunpack.c.h.b16 %v389
    %v1773 = vunpack.c.l.b16 %v390
    %v1774 = vunpack.c.h.b16 %v390
    %v1775 = vunpack.c.l.b16 %v391
    %v1776 = vunpack.c.h.b16 %v391
    %v1777 = vunpack.c.l.b16 %v392
    %v1778 = vunpack.c.h.b16 %v392
    %v1779 = vunpack.c.l.b16 %v393
    %v1780 = vunpack.c.h.b16 %v393
    %v1781 = vunpack.c.l.b16 %v394
    %v1782 = vunpack.c.h.b16 %v394
    %v1783 = vunpack.c.l.b16 %v395
    %v1784 = vunpack.c.h.b16 %v395
    %v1785 = vunpack.c.l.b16 %v396
    %v1786 = vunpack.c.h.b16 %v396
    %v1787 = vunpack.c.l.b16 %v397
    %v1788 = vunpack.c.h.b16 %v397
    %v1789 = vunpack.c.l.b16 %v398
    %v1790 = vunpack.c.h.b16 %v398
    %v1791 = vunpack.c.l.b16 %v399
    %v1792 = vunpack.c.h.b16 %v399
    %v1793 = vunpack.c.l.b16 %v400
    %v1794 = vunpack.c.h.b16 %v400
    %v1795 = vunpack.c.l.b16 %v401
    %v1796 = vunpack.c.h.b16 %v401
    %v1797 = vunpack.c.l.b16 %v402
    %v1798 = vunpack.c.h.b16 %v402
    %v1799 = vunpack.c.l.b16 %v403
    %v1800 = vunpack.c.h.b16 %v403
    %v1801 = vunpack.c.l.b16 %v404
    %v1802 = vunpack.c.h.b16 %v404
    %v1803 = vunpack.c.l.b16 %v405
    %v1804 = vunpack.c.h.b16 %v405
    %v1805 = vunpack.c.l.b16 %v406
    %v1806 = vunpack.c.h.b16 %v406
    %v1807 = vunpack.c.l.b16 %v407
    %v1808 = vunpack.c.h.b16 %v407
    %v1809 = vunpack.c.l.b16 %v408
    %v1810 = vunpack.c.h.b16 %v408
    %v1811 = vunpack.c.l.b16 %v409
    %v1812 = vunpack.c.h.b16 %v409
    %v1813 = vunpack.c.l.b16 %v410
    %v1814 = vunpack.c.h.b16 %v410
    %v1815 = vunpack.c.l.b16 %v411
    %v1816 = vunpack.c.h.b16 %v411
    %v1817 = vunpack.c.l.b16 %v412
    %v1818 = vunpack.c.h.b16 %v412
    %v1819 = vunpack.c.l.b16 %v413
    %v1820 = vunpack.c.h.b16 %v413
    %v1821 = vunpack.c.l.b16 %v414
    %v1822 = vunpack.c.h.b16 %v414
    %v1823 = vunpack.c.l.b16 %v415
    %v1824 = vunpack.c.h.b16 %v415
    %v1825 = vunpack.c.l.b16 %v416
    %v1826 = vunpack.c.h.b16 %v416
    %v1827 = vunpack.c.l.b16 %v417
    %v1828 = vunpack.c.h.b16 %v417
    %v1829 = vunpack.c.l.b16 %v418
    %v1830 = vunpack.c.h.b16 %v418
    %v1831 = vunpack.c.l.b16 %v419
    %v1832 = vunpack.c.h.b16 %v419
    %v1833 = vunpack.c.l.b16 %v420
    %v1834 = vunpack.c.h.b16 %v420
    %v1835 = vunpack.c.l.b16 %v421
    %v1836 = vunpack.c.h.b16 %v421
    %v1837 = vunpack.c.l.b16 %v422
    %v1838 = vunpack.c.h.b16 %v422
    %v1839 = vunpack.c.l.b16 %v423
    %v1840 = vunpack.c.h.b16 %v423
    %v1841 = vunpack.c.l.b16 %v424
    %v1842 = vunpack.c.h.b16 %v424
    %v1843 = vunpack.c.l.b16 %v425
    %v1844 = vunpack.c.h.b16 %v425
    %v1845 = vunpack.c.l.b16 %v426
    %v1846 = vunpack.c.h.b16 %v426
    %v1847 = vunpack.c.l.b16 %v427
    %v1848 = vunpack.c.h.b16 %v427
    %v1849 = vunpack.c.l.b16 %v428
    %v1850 = vunpack.c.h.b16 %v428
    %v1851 = vunpack.c.l.b16 %v429
    %v1852 = vunpack.c.h.b16 %v429
    %v1853 = vunpack.c.l.b16 %v430
    %v1854 = vunpack.c.h.b16 %v430
    %v1855 = vunpack.c.l.b16 %v431
    %v1856 = vunpack.c.h.b16 %v431
    %v1857 = vunpack.c.l.b16 %v432
    %v1858 = vunpack.c.h.b16 %v432
    %v1859 = vunpack.c.l.b16 %v433
    %v1860 = vunpack.c.h.b16 %v433
    %v1861 = vunpack.c.l.b16 %v434
    %v1862 = vunpack.c.h.b16 %v434
    %v1863 = vunpack.c.l.b16 %v435
    %v1864 = vunpack.c.h.b16 %v435
    %v1865 = vunpack.c.l.b16 %v436
    %v1866 = vunpack.c.h.b16 %v436
    %v1867 = vunpack.c.l.b16 %v437
    %v1868 = vunpack.c.h.b16 %v437
    %v1869 = vunpack.c.l.b16 %v438
    %v1870 = vunpack.c.h.b16 %v438
    %v1871 = vunpack.c.l.b16 %v439
    %v1872 = vunpack.c.h.b16 %v439
    %v1873 = vunpack.c.l.b16 %v440
    %v1874 = vunpack.c.h.b16 %v440
    %v1875 = vunpack.c.l.b16 %v441
    %v1876 = vunpack.c.h.b16 %v441
    %v1877 = vunpack.c.l.b16 %v442
    %v1878 = vunpack.c.h.b16 %v442
    %v1879 = vunpack.c.l.b16 %v443
    %v1880 = vunpack.c.h.b16 %v443
    %v1881 = vunpack.c.l.b16 %v444
    %v1882 = vunpack.c.h.b16 %v444
    %v1883 = vunpack.c.l.b16 %v445
    %v1884 = vunpack.c.h.b16 %v445
    %v1885 = vunpack.c.l.b16 %v446
    %v1886 = vunpack.c.h.b16 %v446
    %v1887 = vunpack.c.l.b16 %v447
    %v1888 = vunpack.c.h.b16 %v447
    %v1889 = vunpack.c.l.b16 %v448
    %v1890 = vunpack.c.h.b16 %v448
    %v1891 = vunpack.c.l.b16 %v449
    %v1892 = vunpack.c.h.b16 %v449
    %v1893 = vunpack.c.l.b16 %v450
    %v1894 = vunpack.c.h.b16 %v450
    %v1895 = vunpack.c.l.b16 %v451
    %v1896 = vunpack.c.h.b16 %v451
    %v1897 = vunpack.c.l.b16 %v452
    %v1898 = vunpack.c.h.b16 %v452
    %v1899 = vunpack.c.l.b16 %v453
    %v1900 = vunpack.c.h.b16 %v453
    %v1901 = vunpack.c.l.b16 %v454
    %v1902 = vunpack.c.h.b16 %v454
    %v1903 = vunpack.c.l.b16 %v455
    %v1904 = vunpack.c.h.b16 %v455
    %v1905 = vunpack.c.l.b16 %v456
    %v1906 = vunpack.c.h.b16 %v456
    %v1907 = vunpack.c.l.b16 %v457
    %v1908 = vunpack.c.h.b16 %v457
    %v1909 = vunpack.c.l.b16 %v458
    %v1910 = vunpack.c.h.b16 %v458
    %v1911 = vunpack.c.l.b16 %v459
    %v1912 = vunpack.c.h.b16 %v459
    %v1913 = vunpack.c.l.b16 %v460
    %v1914 = vunpack.c.h.b16 %v460
    %v1915 = vunpack.c.l.b16 %v461
    %v1916 = vunpack.c.h.b16 %v461
    %v1917 = vunpack.c.l.b16 %v462
    %v1918 = vunpack.c.h.b16 %v462
    %v1919 = vunpack.c.l.b16 %v463
    %v1920 = vunpack.c.h.b16 %v463
    %v1921 = vunpack.c.l.b16 %v464
    %v1922 = vunpack.c.h.b16 %v464
    %v1923 = vunpack.c.l.b16 %v465
    %v1924 = vunpack.c.h.b16 %v465
    %v1925 = vunpack.c.l.b16 %v466
    %v1926 = vunpack.c.h.b16 %v466
    %v1927 = vunpack.c.l.b16 %v467
    %v1928 = vunpack.c.h.b16 %v467
    %v1929 = vunpack.c.l.b16 %v468
    %v1930 = vunpack.c.h.b16 %v468
    %v1931 = vunpack.c.l.b16 %v469
    %v1932 = vunpack.c.h.b16 %v469
    %v1933 = vunpack.c.l.b16 %v470
    %v1934 = vunpack.c.h.b16 %v470
    %v1935 = vunpack.c.l.b16 %v471
    %v1936 = vunpack.c.h.b16 %v471
    %v1937 = vunpack.c.l.b16 %v472
    %v1938 = vunpack.c.h.b16 %v472
    %v1939 = vunpack.c.l.b16 %v473
    %v1940 = vunpack.c.h.b16 %v473
    %v1941 = vunpack.c.l.b16 %v474
    %v1942 = vunpack.c.h.b16 %v474
    %v1943 = vunpack.c.l.b16 %v475
    %v1944 = vunpack.c.h.b16 %v475
    %v1945 = vunpack.c.l.b16 %v476
    %v1946 = vunpack.c.h.b16 %v476
    %v1947 = vunpack.c.l.b16 %v477
    %v1948 = vunpack.c.h.b16 %v477
    %v1949 = vunpack.c.l.b16 %v478
    %v1950 = vunpack.c.h.b16 %v478
    %v1951 = vunpack.c.l.b16 %v479
    %v1952 = vunpack.c.h.b16 %v479
    %v1953 = vunpack.c.l.b16 %v480
    %v1954 = vunpack.c.h.b16 %v480
    %v1955 = vunpack.c.l.b16 %v481
    %v1956 = vunpack.c.h.b16 %v481
    %v1957 = vunpack.c.l.b16 %v482
    %v1958 = vunpack.c.h.b16 %v482
    %v1959 = vunpack.c.l.b16 %v483
    %v1960 = vunpack.c.h.b16 %v483
    %v1961 = vunpack.c.l.b16 %v484
    %v1962 = vunpack.c.h.b16 %v484
    %v1963 = vunpack.c.l.b16 %v485
    %v1964 = vunpack.c.h.b16 %v485
    %v1965 = vunpack.c.l.b16 %v486
    %v1966 = vunpack.c.h.b16 %v486
    %v1967 = vunpack.c.l.b16 %v487
    %v1968 = vunpack.c.h.b16 %v487
    %v1969 = vunpack.c.l.b16 %v488
    %v1970 = vunpack.c.h.b16 %v488
    %v1971 = vunpack.c.l.b16 %v489
    %v1972 = vunpack.c.h.b16 %v489
    %v1973 = vunpack.c.l.b16 %v490
    %v1974 = vunpack.c.h.b16 %v490
    %v1975 = vunpack.c.l.b16 %v491
    %v1976 = vunpack.c.h.b16 %v491
    %v1977 = vunpack.c.l.b16 %v492
    %v1978 = vunpack.c.h.b16 %v492
    %v1979 = vunpack.c.l.b16 %v493
    %v1980 = vunpack.c.h.b16 %v493
    %v1981 = vunpack.c.l.b16 %v494
    %v1982 = vunpack.c.h.b16 %v494
    %v1983 = vunpack.c.l.b16 %v495
    %v1984 = vunpack.c.h.b16 %v495
    %v1985 = vunpack.c.l.b16 %v496
    %v1986 = vunpack.c.h.b16 %v496
    %v1987 = vunpack.c.l.b16 %v497
    %v1988 = vunpack.c.h.b16 %v497
    %v1989 = vunpack.c.l.b16 %v498
    %v1990 = vunpack.c.h.b16 %v498
    %v1991 = vunpack.c.l.b16 %v499
    %v1992 = vunpack.c.h.b16 %v499
    %v1993 = vunpack.c.l.b16 %v500
    %v1994 = vunpack.c.h.b16 %v500
    %v1995 = vunpack.c.l.b16 %v501
    %v1996 = vunpack.c.h.b16 %v501
    %v1997 = vunpack.c.l.b16 %v502
    %v1998 = vunpack.c.h.b16 %v502
    %v1999 = vunpack.c.l.b16 %v503
    %v2000 = vunpack.c.h.b16 %v503
    %v2001 = vunpack.c.l.b16 %v504
    %v2002 = vunpack.c.h.b16 %v504
    %v2003 = vunpack.c.l.b16 %v505
    %v2004 = vunpack.c.h.b16 %v505
    %v2005 = vunpack.c.l.b16 %v506
    %v2006 = vunpack.c.h.b16 %v506
    %v2007 = vunpack.c.l.b16 %v507
    %v2008 = vunpack.c.h.b16 %v507
    %v2009 = vunpack.c.l.b16 %v508
    %v2010 = vunpack.c.h.b16 %v508
    %v2011 = vunpack.c.l.b16 %v509
    %v2012 = vunpack.c.h.b16 %v509
    %v2013 = vunpack.c.l.b16 %v510
    %v2014 = vunpack.c.h.b16 %v510
    %v2015 = vunpack.c.l.b16 %v511
    %v2016 = vunpack.c.h.b16 %v511
    %v2017 = vunpack.c.l.b16 %v512
    %v2018 = vunpack.c.h.b16 %v512
    %v2019 = vunpack.c.l.b16 %v513
    %v2020 = vunpack.c.h.b16 %v513
    %v2021 = vunpack.c.l.b16 %v514
    %v2022 = vunpack.c.h.b16 %v514
    %v2023 = vunpack.c.l.b16 %v515
    %v2024 = vunpack.c.h.b16 %v515
    %v2025 = vunpack.c.l.b16 %v516
    %v2026 = vunpack.c.h.b16 %v516
    %v2027 = vunpack.c.l.b16 %v517
    %v2028 = vunpack.c.h.b16 %v517
    %v2029 = vunpack.c.l.b16 %v518
    %v2030 = vunpack.c.h.b16 %v518
    %v2031 = vunpack.c.l.b16 %v519
    %v2032 = vunpack.c.h.b16 %v519
    %v2033 = vunpack.c.l.b16 %v520
    %v2034 = vunpack.c.h.b16 %v520
    %v2035 = vunpack.c.l.b16 %v521
    %v2036 = vunpack.c.h.b16 %v521
    %v2037 = vunpack.c.l.b16 %v522
    %v2038 = vunpack.c.h.b16 %v522
    %v2039 = vunpack.c.l.b16 %v523
    %v2040 = vunpack.c.h.b16 %v523
    %v2041 = vunpack.c.l.b16 %v524
    %v2042 = vunpack.c.h.b16 %v524
    %v2043 = vunpack.c.l.b16 %v525
    %v2044 = vunpack.c.h.b16 %v525
    %v2045 = vunpack.c.l.b16 %v526
    %v2046 = vunpack.c.h.b16 %v526
    %v2047 = vunpack.c.l.b16 %v527
    %v2048 = vunpack.c.h.b16 %v527
    %v2049 = vunpack.c.l.b16 %v528
    %v2050 = vunpack.c.h.b16 %v528
    %v2051 = vunpack.c.l.b16 %v529
    %v2052 = vunpack.c.h.b16 %v529
    %v2053 = vunpack.c.l.b16 %v530
    %v2054 = vunpack.c.h.b16 %v530
    %v2055 = vunpack.c.l.b16 %v531
    %v2056 = vunpack.c.h.b16 %v531
    %v2057 = vunpack.c.l.b16 %v532
    %v2058 = vunpack.c.h.b16 %v532
    %v2059 = vunpack.c.l.b16 %v533
    %v2060 = vunpack.c.h.b16 %v533
    %v2061 = vunpack.c.l.b16 %v534
    %v2062 = vunpack.c.h.b16 %v534
    %v2063 = vunpack.c.l.b16 %v535
    %v2064 = vunpack.c.h.b16 %v535
    %v2065 = vunpack.c.l.b16 %v536
    %v2066 = vunpack.c.h.b16 %v536
    %v2067 = vunpack.c.l.b16 %v537
    %v2068 = vunpack.c.h.b16 %v537
    %v2069 = vunpack.c.l.b16 %v538
    %v2070 = vunpack.c.h.b16 %v538
    %v2071 = vunpack.c.l.b16 %v539
    %v2072 = vunpack.c.h.b16 %v539
    %v2073 = vunpack.c.l.b16 %v540
    %v2074 = vunpack.c.h.b16 %v540
    %v2075 = vunpack.c.l.b16 %v541
    %v2076 = vunpack.c.h.b16 %v541
    %v2077 = vunpack.c.l.b16 %v542
    %v2078 = vunpack.c.h.b16 %v542
    %v2079 = vunpack.c.l.b16 %v543
    %v2080 = vunpack.c.h.b16 %v543
    %v2081 = vunpack.c.l.b16 %v544
    %v2082 = vunpack.c.h.b16 %v544
    %v2083 = vunpack.c.l.b16 %v545
    %v2084 = vunpack.c.h.b16 %v545
    %v2085 = vunpack.c.l.b16 %v546
    %v2086 = vunpack.c.h.b16 %v546
    %v2087 = vunpack.c.l.b16 %v547
    %v2088 = vunpack.c.h.b16 %v547
    %v2089 = vunpack.c.l.b16 %v548
    %v2090 = vunpack.c.h.b16 %v548
    %v2091 = vunpack.c.l.b16 %v549
    %v2092 = vunpack.c.h.b16 %v549
    %v2093 = vunpack.c.l.b16 %v550
    %v2094 = vunpack.c.h.b16 %v550
    %v2095 = vunpack.c.l.b16 %v551
    %v2096 = vunpack.c.h.b16 %v551
    %v2097 = vunpack.c.l.b16 %v552
    %v2098 = vunpack.c.h.b16 %v552
    %v2099 = vunpack.c.l.b16 %v553
    %v2100 = vunpack.c.h.b16 %v553
    %v2101 = vunpack.c.l.b16 %v554
    %v2102 = vunpack.c.h.b16 %v554
    %v2103 = vunpack.c.l.b16 %v555
    %v2104 = vunpack.c.h.b16 %v555
    %v2105 = vunpack.c.l.b16 %v556
    %v2106 = vunpack.c.h.b16 %v556
    %v2107 = vunpack.c.l.b16 %v557
    %v2108 = vunpack.c.h.b16 %v557
    %v2109 = vunpack.c.l.b16 %v558
    %v2110 = vunpack.c.h.b16 %v558
    %v2111 = vunpack.c.l.b16 %v559
    %v2112 = vunpack.c.h.b16 %v559
    %v2113 = vunpack.c.l.b16 %v560
    %v2114 = vunpack.c.h.b16 %v560
    %v2115 = vunpack.c.l.b16 %v561
    %v2116 = vunpack.c.h.b16 %v561
    %v2117 = vunpack.c.l.b16 %v562
    %v2118 = vunpack.c.h.b16 %v562
    %v2119 = vunpack.c.l.b16 %v563
    %v2120 = vunpack.c.h.b16 %v563
    %v2121 = vunpack.c.l.b16 %v564
    %v2122 = vunpack.c.h.b16 %v564
    %v2123 = vunpack.c.l.b16 %v565
    %v2124 = vunpack.c.h.b16 %v565
    %v2125 = vunpack.c.l.b16 %v566
    %v2126 = vunpack.c.h.b16 %v566
    %v2127 = vunpack.c.l.b16 %v567
    %v2128 = vunpack.c.h.b16 %v567
    %v2129 = vunpack.c.l.b16 %v568
    %v2130 = vunpack.c.h.b16 %v568
    %v2131 = vunpack.c.l.b16 %v569
    %v2132 = vunpack.c.h.b16 %v569
    %v2133 = vunpack.c.l.b16 %v570
    %v2134 = vunpack.c.h.b16 %v570
    %v2135 = vunpack.c.l.b16 %v571
    %v2136 = vunpack.c.h.b16 %v571
    %v2137 = vunpack.c.l.b16 %v572
    %v2138 = vunpack.c.h.b16 %v572
    %v2139 = vunpack.c.l.b16 %v573
    %v2140 = vunpack.c.h.b16 %v573
    %v2141 = vunpack.c.l.b16 %v574
    %v2142 = vunpack.c.h.b16 %v574
    %v2143 = vunpack.c.l.b16 %v575
    %v2144 = vunpack.c.h.b16 %v575
    %v2145 = vunpack.c.l.b16 %v576
    %v2146 = vunpack.c.h.b16 %v576
    %v2147 = vunpack.c.l.b16 %v577
    %v2148 = vunpack.c.h.b16 %v577
    %v2149 = vunpack.c.l.b16 %v578
    %v2150 = vunpack.c.h.b16 %v578
    %v2151 = vunpack.c.l.b16 %v579
    %v2152 = vunpack.c.h.b16 %v579
    %v2153 = vunpack.c.l.b16 %v580
    %v2154 = vunpack.c.h.b16 %v580
    %v2155 = vunpack.c.l.b16 %v581
    %v2156 = vunpack.c.h.b16 %v581
    %v2157 = vunpack.c.l.b16 %v582
    %v2158 = vunpack.c.h.b16 %v582
    %v2159 = vunpack.c.l.b16 %v583
    %v2160 = vunpack.c.h.b16 %v583
    %v2161 = vunpack.c.l.b16 %v584
    %v2162 = vunpack.c.h.b16 %v584
    %v2163 = vunpack.c.l.b16 %v585
    %v2164 = vunpack.c.h.b16 %v585
    %v2165 = vunpack.c.l.b16 %v586
    %v2166 = vunpack.c.h.b16 %v586
    %v2167 = vunpack.c.l.b16 %v587
    %v2168 = vunpack.c.h.b16 %v587
    %v2169 = vunpack.c.l.b16 %v588
    %v2170 = vunpack.c.h.b16 %v588
    %v2171 = vunpack.c.l.b16 %v589
    %v2172 = vunpack.c.h.b16 %v589
    %v2173 = vunpack.c.l.b16 %v590
    %v2174 = vunpack.c.h.b16 %v590
    %v2175 = vunpack.c.l.b16 %v591
    %v2176 = vunpack.c.h.b16 %v591
    %v2177 = vunpack.c.l.b16 %v592
    %v2178 = vunpack.c.h.b16 %v592
    %v2179 = vunpack.c.l.b16 %v593
    %v2180 = vunpack.c.h.b16 %v593
    %v2181 = vunpack.c.l.b16 %v594
    %v2182 = vunpack.c.h.b16 %v594
    %v2183 = vunpack.c.l.b16 %v595
    %v2184 = vunpack.c.h.b16 %v595
    %v2185 = vunpack.c.l.b16 %v596
    %v2186 = vunpack.c.h.b16 %v596
    %v2187 = vunpack.c.l.b16 %v597
    %v2188 = vunpack.c.h.b16 %v597
    %v2189 = vunpack.c.l.b16 %v598
    %v2190 = vunpack.c.h.b16 %v598
    %v2191 = vunpack.c.l.b16 %v599
    %v2192 = vunpack.c.h.b16 %v599
    %v2193 = vunpack.c.l.b16 %v600
    %v2194 = vunpack.c.h.b16 %v600
    %v2195 = vunpack.c.l.b16 %v601
    %v2196 = vunpack.c.h.b16 %v601
    %v2197 = vunpack.c.l.b16 %v602
    %v2198 = vunpack.c.h.b16 %v602
    %v2199 = vunpack.c.l.b16 %v603
    %v2200 = vunpack.c.h.b16 %v603
    %v2201 = vunpack.c.l.b16 %v604
    %v2202 = vunpack.c.h.b16 %v604
    %v2203 = vunpack.c.l.b16 %v605
    %v2204 = vunpack.c.h.b16 %v605
    %v2205 = vunpack.c.l.b16 %v606
    %v2206 = vunpack.c.h.b16 %v606
    %v2207 = vunpack.c.l.b16 %v607
    %v2208 = vunpack.c.h.b16 %v607
    %v2209 = vunpack.c.l.b16 %v608
    %v2210 = vunpack.c.h.b16 %v608
    %v2211 = vunpack.c.l.b16 %v609
    %v2212 = vunpack.c.h.b16 %v609
    %v2213 = vunpack.c.l.b16 %v610
    %v2214 = vunpack.c.h.b16 %v610
    %v2215 = vunpack.c.l.b16 %v611
    %v2216 = vunpack.c.h.b16 %v611
    %v2217 = vunpack.c.l.b16 %v612
    %v2218 = vunpack.c.h.b16 %v612
    %v2219 = vunpack.c.l.b16 %v613
    %v2220 = vunpack.c.h.b16 %v613
    %v2221 = vunpack.c.l.b16 %v614
    %v2222 = vunpack.c.h.b16 %v614
    %v2223 = vunpack.c.l.b16 %v615
    %v2224 = vunpack.c.h.b16 %v615
    %v2225 = vunpack.c.l.b16 %v616
    %v2226 = vunpack.c.h.b16 %v616
    %v2227 = vunpack.c.l.b16 %v617
    %v2228 = vunpack.c.h.b16 %v617
    %v2229 = vunpack.c.l.b16 %v618
    %v2230 = vunpack.c.h.b16 %v618
    %v2231 = vunpack.c.l.b16 %v619
    %v2232 = vunpack.c.h.b16 %v619
    %v2233 = vunpack.c.l.b16 %v620
    %v2234 = vunpack.c.h.b16 %v620
    %v2235 = vunpack.c.l.b16 %v621
    %v2236 = vunpack.c.h.b16 %v621
    %v2237 = vunpack.c.l.b16 %v622
    %v2238 = vunpack.c.h.b16 %v622
    %v2239 = vunpack.c.l.b16 %v623
    %v2240 = vunpack.c.h.b16 %v623
    %v2241 = vunpack.c.l.b16 %v624
    %v2242 = vunpack.c.h.b16 %v624
    %v2243 = vpack.c.b16 %v1227, %v1219
    %v2244 = vpack.c.b16 %v1228, %v1220
    %v2245 = vpack.c.b16 %v1229, %v1221
    %v2246 = vpack.c.b16 %v1230, %v1222
    %v2247 = vpack.c.b16 %v1231, %v1223
    %v2248 = vpack.c.b16 %v1232, %v1224
    %v2249 = vpack.c.b16 %v1233, %v1225
    %v2250 = vpack.c.b16 %v1234, %v1226
    %v2251 = vpack.c.b16 %v1243, %v1235
    %v2252 = vpack.c.b16 %v1244, %v1236
    %v2253 = vpack.c.b16 %v1245, %v1237
    %v2254 = vpack.c.b16 %v1246, %v1238
    %v2255 = vpack.c.b16 %v1247, %v1239
    %v2256 = vpack.c.b16 %v1248, %v1240
    %v2257 = vpack.c.b16 %v1249, %v1241
    %v2258 = vpack.c.b16 %v1250, %v1242
    %v2259 = vpack.c.b16 %v1259, %v1251
    %v2260 = vpack.c.b16 %v1260, %v1252
    %v2261 = vpack.c.b16 %v1261, %v1253
    %v2262 = vpack.c.b16 %v1262, %v1254
    %v2263 = vpack.c.b16 %v1263, %v1255
    %v2264 = vpack.c.b16 %v1264, %v1256
    %v2265 = vpack.c.b16 %v1265, %v1257
    %v2266 = vpack.c.b16 %v1266, %v1258
    %v2267 = vpack.c.b16 %v1275, %v1267
    %v2268 = vpack.c.b16 %v1276, %v1268
    %v2269 = vpack.c.b16 %v1277, %v1269
    %v2270 = vpack.c.b16 %v1278, %v1270
    %v2271 = vpack.c.b16 %v1279, %v1271
    %v2272 = vpack.c.b16 %v1280, %v1272
    %v2273 = vpack.c.b16 %v1281, %v1273
    %v2274 = vpack.c.b16 %v1282, %v1274
    %v2275 = vpack.c.b16 %v1291, %v1283
    %v2276 = vpack.c.b16 %v1292, %v1284
    %v2277 = vpack.c.b16 %v1293, %v1285
    %v2278 = vpack.c.b16 %v1294, %v1286
    %v2279 = vpack.c.b16 %v1295, %v1287
    %v2280 = vpack.c.b16 %v1296, %v1288
    %v2281 = vpack.c.b16 %v1297, %v1289
    %v2282 = vpack.c.b16 %v1298, %v1290
    %v2283 = vpack.c.b16 %v1307, %v1299
    %v2284 = vpack.c.b16 %v1308, %v1300
    %v2285 = vpack.c.b16 %v1309, %v1301
    %v2286 = vpack.c.b16 %v1310, %v1302
    %v2287 = vpack.c.b16 %v1311, %v1303
    %v2288 = vpack.c.b16 %v1312, %v1304
    %v2289 = vpack.c.b16 %v1313, %v1305
    %v2290 = vpack.c.b16 %v1314, %v1306
    %v2291 = vpack.c.b16 %v1323, %v1315
    %v2292 = vpack.c.b16 %v1324, %v1316
    %v2293 = vpack.c.b16 %v1325, %v1317
    %v2294 = vpack.c.b16 %v1326, %v1318
    %v2295 = vpack.c.b16 %v1327, %v1319
    %v2296 = vpack.c.b16 %v1328, %v1320
    %v2297 = vpack.c.b16 %v1329, %v1321
    %v2298 = vpack.c.b16 %v1330, %v1322
    %v2299 = vpack.c.b16 %v1339, %v1331
    %v2300 = vpack.c.b16 %v1340, %v1332
    %v2301 = vpack.c.b16 %v1341, %v1333
    %v2302 = vpack.c.b16 %v1342, %v1334
    %v2303 = vpack.c.b16 %v1343, %v1335
    %v2304 = vpack.c.b16 %v1344, %v1336
    %v2305 = vpack.c.b16 %v1345, %v1337
    %v2306 = vpack.c.b16 %v1346, %v1338
    %v2307 = vpack.c.b16 %v1355, %v1347
    %v2308 = vpack.c.b16 %v1356, %v1348
    %v2309 = vpack.c.b16 %v1357, %v1349
    %v2310 = vpack.c.b16 %v1358, %v1350
    %v2311 = vpack.c.b16 %v1359, %v1351
    %v2312 = vpack.c.b16 %v1360, %v1352
    %v2313 = vpack.c.b16 %v1361, %v1353
    %v2314 = vpack.c.b16 %v1362, %v1354
    %v2315 = vpack.c.b16 %v1371, %v1363
    %v2316 = vpack.c.b16 %v1372, %v1364
    %v2317 = vpack.c.b16 %v1373, %v1365
    %v2318 = vpack.c.b16 %v1374, %v1366
    %v2319 = vpack.c.b16 %v1375, %v1367
    %v2320 = vpack.c.b16 %v1376, %v1368
    %v2321 = vpack.c.b16 %v1377, %v1369
    %v2322 = vpack.c.b16 %v1378, %v1370
    %v2323 = vpack.c.b16 %v1387, %v1379
    %v2324 = vpack.c.b16 %v1388, %v1380
    %v2325 = vpack.c.b16 %v1389, %v1381
    %v2326 = vpack.c.b16 %v1390, %v1382
    %v2327 = vpack.c.b16 %v1391, %v1383
    %v2328 = vpack.c.b16 %v1392, %v1384
    %v2329 = vpack.c.b16 %v1393, %v1385
    %v2330 = vpack.c.b16 %v1394, %v1386
    %v2331 = vpack.c.b16 %v1403, %v1395
    %v2332 = vpack.c.b16 %v1404, %v1396
    %v2333 = vpack.c.b16 %v1405, %v1397
    %v2334 = vpack.c.b16 %v1406, %v1398
    %v2335 = vpack.c.b16 %v1407, %v1399
    %v2336 = vpack.c.b16 %v1408, %v1400
    %v2337 = vpack.c.b16 %v1409, %v1401
    %v2338 = vpack.c.b16 %v1410, %v1402
    %v2339 = vpack.c.b16 %v1419, %v1411
    %v2340 = vpack.c.b16 %v1420, %v1412
    %v2341 = vpack.c.b16 %v1421, %v1413
    %v2342 = vpack.c.b16 %v1422, %v1414
    %v2343 = vpack.c.b16 %v1423, %v1415
    %v2344 = vpack.c.b16 %v1424, %v1416
    %v2345 = vpack.c.b16 %v1425, %v1417
    %v2346 = vpack.c.b16 %v1426, %v1418
    %v2347 = vpack.c.b16 %v1435, %v1427
    %v2348 = vpack.c.b16 %v1436, %v1428
    %v2349 = vpack.c.b16 %v1437, %v1429
    %v2350 = vpack.c.b16 %v1438, %v1430
    %v2351 = vpack.c.b16 %v1439, %v1431
    %v2352 = vpack.c.b16 %v1440, %v1432
    %v2353 = vpack.c.b16 %v1441, %v1433
    %v2354 = vpack.c.b16 %v1442, %v1434
    %v2355 = vpack.c.b16 %v1451, %v1443
    %v2356 = vpack.c.b16 %v1452, %v1444
    %v2357 = vpack.c.b16 %v1453, %v1445
    %v2358 = vpack.c.b16 %v1454, %v1446
    %v2359 = vpack.c.b16 %v1455, %v1447
    %v2360 = vpack.c.b16 %v1456, %v1448
    %v2361 = vpack.c.b16 %v1457, %v1449
    %v2362 = vpack.c.b16 %v1458, %v1450
    %v2363 = vpack.c.b16 %v1467, %v1459
    %v2364 = vpack.c.b16 %v1468, %v1460
    %v2365 = vpack.c.b16 %v1469, %v1461
    %v2366 = vpack.c.b16 %v1470, %v1462
    %v2367 = vpack.c.b16 %v1471, %v1463
    %v2368 = vpack.c.b16 %v1472, %v1464
    %v2369 = vpack.c.b16 %v1473, %v1465
    %v2370 = vpack.c.b16 %v1474, %v1466
    %v2371 = vpack.c.b16 %v1483, %v1475
    %v2372 = vpack.c.b16 %v1484, %v1476
    %v2373 = vpack.c.b16 %v1485, %v1477
    %v2374 = vpack.c.b16 %v1486, %v1478
    %v2375 = vpack.c.b16 %v1487, %v1479
    %v2376 = vpack.c.b16 %v1488, %v1480
    %v2377 = vpack.c.b16 %v1489, %v1481
    %v2378 = vpack.c.b16 %v1490, %v1482
    %v2379 = vpack.c.b16 %v1499, %v1491
    %v2380 = vpack.c.b16 %v1500, %v1492
    %v2381 = vpack.c.b16 %v1501, %v1493
    %v2382 = vpack.c.b16 %v1502, %v1494
    %v2383 = vpack.c.b16 %v1503, %v1495
    %v2384 = vpack.c.b16 %v1504, %v1496
    %v2385 = vpack.c.b16 %v1505, %v1497
    %v2386 = vpack.c.b16 %v1506, %v1498
    %v2387 = vpack.c.b16 %v1515, %v1507
    %v2388 = vpack.c.b16 %v1516, %v1508
    %v2389 = vpack.c.b16 %v1517, %v1509
    %v2390 = vpack.c.b16 %v1518, %v1510
    %v2391 = vpack.c.b16 %v1519, %v1511
    %v2392 = vpack.c.b16 %v1520, %v1512
    %v2393 = vpack.c.b16 %v1521, %v1513
    %v2394 = vpack.c.b16 %v1522, %v1514
    %v2395 = vpack.c.b16 %v1531, %v1523
    %v2396 = vpack.c.b16 %v1532, %v1524
    %v2397 = vpack.c.b16 %v1533, %v1525
    %v2398 = vpack.c.b16 %v1534, %v1526
    %v2399 = vpack.c.b16 %v1535, %v1527
    %v2400 = vpack.c.b16 %v1536, %v1528
    %v2401 = vpack.c.b16 %v1537, %v1529
    %v2402 = vpack.c.b16 %v1538, %v1530
    %v2403 = vpack.c.b16 %v1547, %v1539
    %v2404 = vpack.c.b16 %v1548, %v1540
    %v2405 = vpack.c.b16 %v1549, %v1541
    %v2406 = vpack.c.b16 %v1550, %v1542
    %v2407 = vpack.c.b16 %v1551, %v1543
    %v2408 = vpack.c.b16 %v1552, %v1544
    %v2409 = vpack.c.b16 %v1553, %v1545
    %v2410 = vpack.c.b16 %v1554, %v1546
    %v2411 = vpack.c.b16 %v1563, %v1555
    %v2412 = vpack.c.b16 %v1564, %v1556
    %v2413 = vpack.c.b16 %v1565, %v1557
    %v2414 = vpack.c.b16 %v1566, %v1558
    %v2415 = vpack.c.b16 %v1567, %v1559
    %v2416 = vpack.c.b16 %v1568, %v1560
    %v2417 = vpack.c.b16 %v1569, %v1561
    %v2418 = vpack.c.b16 %v1570, %v1562
    %v2419 = vpack.c.b16 %v1579, %v1571
    %v2420 = vpack.c.b16 %v1580, %v1572
    %v2421 = vpack.c.b16 %v1581, %v1573
    %v2422 = vpack.c.b16 %v1582, %v1574
    %v2423 = vpack.c.b16 %v1583, %v1575
    %v2424 = vpack.c.b16 %v1584, %v1576
    %v2425 = vpack.c.b16 %v1585, %v1577
    %v2426 = vpack.c.b16 %v1586, %v1578
    %v2427 = vpack.c.b16 %v1595, %v1587
    %v2428 = vpack.c.b16 %v1596, %v1588
    %v2429 = vpack.c.b16 %v1597, %v1589
    %v2430 = vpack.c.b16 %v1598, %v1590
    %v2431 = vpack.c.b16 %v1599, %v1591
    %v2432 = vpack.c.b16 %v1600, %v1592
    %v2433 = vpack.c.b16 %v1601, %v1593
    %v2434 = vpack.c.b16 %v1602, %v1594
    %v2435 = vpack.c.b16 %v1611, %v1603
    %v2436 = vpack.c.b16 %v1612, %v1604
    %v2437 = vpack.c.b16 %v1613, %v1605
    %v2438 = vpack.c.b16 %v1614, %v1606
    %v2439 = vpack.c.b16 %v1615, %v1607
    %v2440 = vpack.c.b16 %v1616, %v1608
    %v2441 = vpack.c.b16 %v1617, %v1609
    %v2442 = vpack.c.b16 %v1618, %v1610
    %v2443 = vpack.c.b16 %v1627, %v1619
    %v2444 = vpack.c.b16 %v1628, %v1620
    %v2445 = vpack.c.b16 %v1629, %v1621
    %v2446 = vpack.c.b16 %v1630, %v1622
    %v2447 = vpack.c.b16 %v1631, %v1623
    %v2448 = vpack.c.b16 %v1632, %v1624
    %v2449 = vpack.c.b16 %v1633, %v1625
    %v2450 = vpack.c.b16 %v1634, %v1626
    %v2451 = vpack.c.b16 %v1643, %v1635
    %v2452 = vpack.c.b16 %v1644, %v1636
    %v2453 = vpack.c.b16 %v1645, %v1637
    %v2454 = vpack.c.b16 %v1646, %v1638
    %v2455 = vpack.c.b16 %v1647, %v1639
    %v2456 = vpack.c.b16 %v1648, %v1640
    %v2457 = vpack.c.b16 %v1649, %v1641
    %v2458 = vpack.c.b16 %v1650, %v1642
    %v2459 = vpack.c.b16 %v1659, %v1651
    %v2460 = vpack.c.b16 %v1660, %v1652
    %v2461 = vpack.c.b16 %v1661, %v1653
    %v2462 = vpack.c.b16 %v1662, %v1654
    %v2463 = vpack.c.b16 %v1663, %v1655
    %v2464 = vpack.c.b16 %v1664, %v1656
    %v2465 = vpack.c.b16 %v1665, %v1657
    %v2466 = vpack.c.b16 %v1666, %v1658
    %v2467 = vpack.c.b16 %v1675, %v1667
    %v2468 = vpack.c.b16 %v1676, %v1668
    %v2469 = vpack.c.b16 %v1677, %v1669
    %v2470 = vpack.c.b16 %v1678, %v1670
    %v2471 = vpack.c.b16 %v1679, %v1671
    %v2472 = vpack.c.b16 %v1680, %v1672
    %v2473 = vpack.c.b16 %v1681, %v1673
    %v2474 = vpack.c.b16 %v1682, %v1674
    %v2475 = vpack.c.b16 %v1691, %v1683
    %v2476 = vpack.c.b16 %v1692, %v1684
    %v2477 = vpack.c.b16 %v1693, %v1685
    %v2478 = vpack.c.b16 %v1694, %v1686
    %v2479 = vpack.c.b16 %v1695, %v1687
    %v2480 = vpack.c.b16 %v1696, %v1688
    %v2481 = vpack.c.b16 %v1697, %v1689
    %v2482 = vpack.c.b16 %v1698, %v1690
    %v2483 = vpack.c.b16 %v1707, %v1699
    %v2484 = vpack.c.b16 %v1708, %v1700
    %v2485 = vpack.c.b16 %v1709, %v1701
    %v2486 = vpack.c.b16 %v1710, %v1702
    %v2487 = vpack.c.b16 %v1711, %v1703
    %v2488 = vpack.c.b16 %v1712, %v1704
    %v2489 = vpack.c.b16 %v1713, %v1705
    %v2490 = vpack.c.b16 %v1714, %v1706
    %v2491 = vpack.c.b16 %v1723, %v1715
    %v2492 = vpack.c.b16 %v1724, %v1716
    %v2493 = vpack.c.b16 %v1725, %v1717
    %v2494 = vpack.c.b16 %v1726, %v1718
    %v2495 = vpack.c.b16 %v1727, %v1719
    %v2496 = vpack.c.b16 %v1728, %v1720
    %v2497 = vpack.c.b16 %v1729, %v1721
    %v2498 = vpack.c.b16 %v1730, %v1722
    %v2499 = vpack.c.b16 %v1739, %v1731
    %v2500 = vpack.c.b16 %v1740, %v1732
    %v2501 = vpack.c.b16 %v1741, %v1733
    %v2502 = vpack.c.b16 %v1742, %v1734
    %v2503 = vpack.c.b16 %v1743, %v1735
    %v2504 = vpack.c.b16 %v1744, %v1736
    %v2505 = vpack.c.b16 %v1745, %v1737
    %v2506 = vpack.c.b16 %v1746, %v1738
    %v2507 = vpack.c.b16 %v1755, %v1747
    %v2508 = vpack.c.b16 %v1756, %v1748
    %v2509 = vpack.c.b16 %v1757, %v1749
    %v2510 = vpack.c.b16 %v1758, %v1750
    %v2511 = vpack.c.b16 %v1759, %v1751
    %v2512 = vpack.c.b16 %v1760, %v1752
    %v2513 = vpack.c.b16 %v1761, %v1753
    %v2514 = vpack.c.b16 %v1762, %v1754
    %v2515 = vpack.c.b16 %v1771, %v1763
    %v2516 = vpack.c.b16 %v1772, %v1764
    %v2517 = vpack.c.b16 %v1773, %v1765
    %v2518 = vpack.c.b16 %v1774, %v1766
    %v2519 = vpack.c.b16 %v1775, %v1767
    %v2520 = vpack.c.b16 %v1776, %v1768
    %v2521 = vpack.c.b16 %v1777, %v1769
    %v2522 = vpack.c.b16 %v1778, %v1770
    %v2523 = vpack.c.b16 %v1787, %v1779
    %v2524 = vpack.c.b16 %v1788, %v1780
    %v2525 = vpack.c.b16 %v1789, %v1781
    %v2526 = vpack.c.b16 %v1790, %v1782
    %v2527 = vpack.c.b16 %v1791, %v1783
    %v2528 = vpack.c.b16 %v1792, %v1784
    %v2529 = vpack.c.b16 %v1793, %v1785
    %v2530 = vpack.c.b16 %v1794, %v1786
    %v2531 = vpack.c.b16 %v1803, %v1795
    %v2532 = vpack.c.b16 %v1804, %v1796
    %v2533 = vpack.c.b16 %v1805, %v1797
    %v2534 = vpack.c.b16 %v1806, %v1798
    %v2535 = vpack.c.b16 %v1807, %v1799
    %v2536 = vpack.c.b16 %v1808, %v1800
    %v2537 = vpack.c.b16 %v1809, %v1801
    %v2538 = vpack.c.b16 %v1810, %v1802
    %v2539 = vpack.c.b16 %v1819, %v1811
    %v2540 = vpack.c.b16 %v1820, %v1812
    %v2541 = vpack.c.b16 %v1821, %v1813
    %v2542 = vpack.c.b16 %v1822, %v1814
    %v2543 = vpack.c.b16 %v1823, %v1815
    %v2544 = vpack.c.b16 %v1824, %v1816
    %v2545 = vpack.c.b16 %v1825, %v1817
    %v2546 = vpack.c.b16 %v1826, %v1818
    %v2547 = vpack.c.b16 %v1835, %v1827
    %v2548 = vpack.c.b16 %v1836, %v1828
    %v2549 = vpack.c.b16 %v1837, %v1829
    %v2550 = vpack.c.b16 %v1838, %v1830
    %v2551 = vpack.c.b16 %v1839, %v1831
    %v2552 = vpack.c.b16 %v1840, %v1832
    %v2553 = vpack.c.b16 %v1841, %v1833
    %v2554 = vpack.c.b16 %v1842, %v1834
    %v2555 = vpack.c.b16 %v1851, %v1843
    %v2556 = vpack.c.b16 %v1852, %v1844
    %v2557 = vpack.c.b16 %v1853, %v1845
    %v2558 = vpack.c.b16 %v1854, %v1846
    %v2559 = vpack.c.b16 %v1855, %v1847
    %v2560 = vpack.c.b16 %v1856, %v1848
    %v2561 = vpack.c.b16 %v1857, %v1849
    %v2562 = vpack.c.b16 %v1858, %v1850
    %v2563 = vpack.c.b16 %v1867, %v1859
    %v2564 = vpack.c.b16 %v1868, %v1860
    %v2565 = vpack.c.b16 %v1869, %v1861
    %v2566 = vpack.c.b16 %v1870, %v1862
    %v2567 = vpack.c.b16 %v1871, %v1863
    %v2568 = vpack.c.b16 %v1872, %v1864
    %v2569 = vpack.c.b16 %v1873, %v1865
    %v2570 = vpack.c.b16 %v1874, %v1866
    %v2571 = vpack.c.b16 %v1883, %v1875
    %v2572 = vpack.c.b16 %v1884, %v1876
    %v2573 = vpack.c.b16 %v1885, %v1877
    %v2574 = vpack.c.b16 %v1886, %v1878
    %v2575 = vpack.c.b16 %v1887, %v1879
    %v2576 = vpack.c.b16 %v1888, %v1880
    %v2577 = vpack.c.b16 %v1889, %v1881
    %v2578 = vpack.c.b16 %v1890, %v1882
    %v2579 = vpack.c.b16 %v1899, %v1891
    %v2580 = vpack.c.b16 %v1900, %v1892
    %v2581 = vpack.c.b16 %v1901, %v1893
    %v2582 = vpack.c.b16 %v1902, %v1894
    %v2583 = vpack.c.b16 %v1903, %v1895
    %v2584 = vpack.c.b16 %v1904, %v1896
    %v2585 = vpack.c.b16 %v1905, %v1897
    %v2586 = vpack.c.b16 %v1906, %v1898
    %v2587 = vpack.c.b16 %v1915, %v1907
    %v2588 = vpack.c.b16 %v1916, %v1908
    %v2589 = vpack.c.b16 %v1917, %v1909
    %v2590 = vpack.c.b16 %v1918, %v1910
    %v2591 = vpack.c.b16 %v1919, %v1911
    %v2592 = vpack.c.b16 %v1920, %v1912
    %v2593 = vpack.c.b16 %v1921, %v1913
    %v2594 = vpack.c.b16 %v1922, %v1914
    %v2595 = vpack.c.b16 %v1931, %v1923
    %v2596 = vpack.c.b16 %v1932, %v1924
    %v2597 = vpack.c.b16 %v1933, %v1925
    %v2598 = vpack.c.b16 %v1934, %v1926
    %v2599 = vpack.c.b16 %v1935, %v1927
    %v2600 = vpack.c.b16 %v1936, %v1928
    %v2601 = vpack.c.b16 %v1937, %v1929
    %v2602 = vpack.c.b16 %v1938, %v1930
    %v2603 = vpack.c.b16 %v1947, %v1939
    %v2604 = vpack.c.b16 %v1948, %v1940
    %v2605 = vpack.c.b16 %v1949, %v1941
    %v2606 = vpack.c.b16 %v1950, %v1942
    %v2607 = vpack.c.b16 %v1951, %v1943
    %v2608 = vpack.c.b16 %v1952, %v1944
    %v2609 = vpack.c.b16 %v1953, %v1945
    %v2610 = vpack.c.b16 %v1954, %v1946
    %v2611 = vpack.c.b16 %v1963, %v1955
    %v2612 = vpack.c.b16 %v1964, %v1956
    %v2613 = vpack.c.b16 %v1965, %v1957
    %v2614 = vpack.c.b16 %v1966, %v1958
    %v2615 = vpack.c.b16 %v1967, %v1959
    %v2616 = vpack.c.b16 %v1968, %v1960
    %v2617 = vpack.c.b16 %v1969, %v1961
    %v2618 = vpack.c.b16 %v1970, %v1962
    %v2619 = vpack.c.b16 %v1979, %v1971
    %v2620 = vpack.c.b16 %v1980, %v1972
    %v2621 = vpack.c.b16 %v1981, %v1973
    %v2622 = vpack.c.b16 %v1982, %v1974
    %v2623 = vpack.c.b16 %v1983, %v1975
    %v2624 = vpack.c.b16 %v1984, %v1976
    %v2625 = vpack.c.b16 %v1985, %v1977
    %v2626 = vpack.c.b16 %v1986, %v1978
    %v2627 = vpack.c.b16 %v1995, %v1987
    %v2628 = vpack.c.b16 %v1996, %v1988
    %v2629 = vpack.c.b16 %v1997, %v1989
    %v2630 = vpack.c.b16 %v1998, %v1990
    %v2631 = vpack.c.b16 %v1999, %v1991
    %v2632 = vpack.c.b16 %v2000, %v1992
    %v2633 = vpack.c.b16 %v2001, %v1993
    %v2634 = vpack.c.b16 %v2002, %v1994
    %v2635 = vpack.c.b16 %v2011, %v2003
    %v2636 = vpack.c.b16 %v2012, %v2004
    %v2637 = vpack.c.b16 %v2013, %v2005
    %v2638 = vpack.c.b16 %v2014, %v2006
    %v2639 = vpack.c.b16 %v2015, %v2007
    %v2640 = vpack.c.b16 %v2016, %v2008
    %v2641 = vpack.c.b16 %v2017, %v2009
    %v2642 = vpack.c.b16 %v2018, %v2010
    %v2643 = vpack.c.b16 %v2027, %v2019
    %v2644 = vpack.c.b16 %v2028, %v2020
    %v2645 = vpack.c.b16 %v2029, %v2021
    %v2646 = vpack.c.b16 %v2030, %v2022
    %v2647 = vpack.c.b16 %v2031, %v2023
    %v2648 = vpack.c.b16 %v2032, %v2024
    %v2649 = vpack.c.b16 %v2033, %v2025
    %v2650 = vpack.c.b16 %v2034, %v2026
    %v2651 = vpack.c.b16 %v2043, %v2035
    %v2652 = vpack.c.b16 %v2044, %v2036
    %v2653 = vpack.c.b16 %v2045, %v2037
    %v2654 = vpack.c.b16 %v2046, %v2038
    %v2655 = vpack.c.b16 %v2047, %v2039
    %v2656 = vpack.c.b16 %v2048, %v2040
    %v2657 = vpack.c.b16 %v2049, %v2041
    %v2658 = vpack.c.b16 %v2050, %v2042
    %v2659 = vpack.c.b16 %v2059, %v2051
    %v2660 = vpack.c.b16 %v2060, %v2052
    %v2661 = vpack.c.b16 %v2061, %v2053
    %v2662 = vpack.c.b16 %v2062, %v2054
    %v2663 = vpack.c.b16 %v2063, %v2055
    %v2664 = vpack.c.b16 %v2064, %v2056
    %v2665 = vpack.c.b16 %v2065, %v2057
    %v2666 = vpack.c.b16 %v2066, %v2058
    %v2667 = vpack.c.b16 %v2075, %v2067
    %v2668 = vpack.c.b16 %v2076, %v2068
    %v2669 = vpack.c.b16 %v2077, %v2069
    %v2670 = vpack.c.b16 %v2078, %v2070
    %v2671 = vpack.c.b16 %v2079, %v2071
    %v2672 = vpack.c.b16 %v2080, %v2072
    %v2673 = vpack.c.b16 %v2081, %v2073
    %v2674 = vpack.c.b16 %v2082, %v2074
    %v2675 = vpack.c.b16 %v2091, %v2083
    %v2676 = vpack.c.b16 %v2092, %v2084
    %v2677 = vpack.c.b16 %v2093, %v2085
    %v2678 = vpack.c.b16 %v2094, %v2086
    %v2679 = vpack.c.b16 %v2095, %v2087
    %v2680 = vpack.c.b16 %v2096, %v2088
    %v2681 = vpack.c.b16 %v2097, %v2089
    %v2682 = vpack.c.b16 %v2098, %v2090
    %v2683 = vpack.c.b16 %v2107, %v2099
    %v2684 = vpack.c.b16 %v2108, %v2100
    %v2685 = vpack.c.b16 %v2109, %v2101
    %v2686 = vpack.c.b16 %v2110, %v2102
    %v2687 = vpack.c.b16 %v2111, %v2103
    %v2688 = vpack.c.b16 %v2112, %v2104
    %v2689 = vpack.c.b16 %v2113, %v2105
    %v2690 = vpack.c.b16 %v2114, %v2106
    %v2691 = vpack.c.b16 %v2123, %v2115
    %v2692 = vpack.c.b16 %v2124, %v2116
    %v2693 = vpack.c.b16 %v2125, %v2117
    %v2694 = vpack.c.b16 %v2126, %v2118
    %v2695 = vpack.c.b16 %v2127, %v2119
    %v2696 = vpack.c.b16 %v2128, %v2120
    %v2697 = vpack.c.b16 %v2129, %v2121
    %v2698 = vpack.c.b16 %v2130, %v2122
    %v2699 = vpack.c.b16 %v2139, %v2131
    %v2700 = vpack.c.b16 %v2140, %v2132
    %v2701 = vpack.c.b16 %v2141, %v2133
    %v2702 = vpack.c.b16 %v2142, %v2134
    %v2703 = vpack.c.b16 %v2143, %v2135
    %v2704 = vpack.c.b16 %v2144, %v2136
    %v2705 = vpack.c.b16 %v2145, %v2137
    %v2706 = vpack.c.b16 %v2146, %v2138
    %v2707 = vpack.c.b16 %v2155, %v2147
    %v2708 = vpack.c.b16 %v2156, %v2148
    %v2709 = vpack.c.b16 %v2157, %v2149
    %v2710 = vpack.c.b16 %v2158, %v2150
    %v2711 = vpack.c.b16 %v2159, %v2151
    %v2712 = vpack.c.b16 %v2160, %v2152
    %v2713 = vpack.c.b16 %v2161, %v2153
    %v2714 = vpack.c.b16 %v2162, %v2154
    %v2715 = vpack.c.b16 %v2171, %v2163
    %v2716 = vpack.c.b16 %v2172, %v2164
    %v2717 = vpack.c.b16 %v2173, %v2165
    %v2718 = vpack.c.b16 %v2174, %v2166
    %v2719 = vpack.c.b16 %v2175, %v2167
    %v2720 = vpack.c.b16 %v2176, %v2168
    %v2721 = vpack.c.b16 %v2177, %v2169
    %v2722 = vpack.c.b16 %v2178, %v2170
    %v2723 = vpack.c.b16 %v2187, %v2179
    %v2724 = vpack.c.b16 %v2188, %v2180
    %v2725 = vpack.c.b16 %v2189, %v2181
    %v2726 = vpack.c.b16 %v2190, %v2182
    %v2727 = vpack.c.b16 %v2191, %v2183
    %v2728 = vpack.c.b16 %v2192, %v2184
    %v2729 = vpack.c.b16 %v2193, %v2185
    %v2730 = vpack.c.b16 %v2194, %v2186
    %v2731 = vpack.c.b16 %v2203, %v2195
    %v2732 = vpack.c.b16 %v2204, %v2196
    %v2733 = vpack.c.b16 %v2205, %v2197
    %v2734 = vpack.c.b16 %v2206, %v2198
    %v2735 = vpack.c.b16 %v2207, %v2199
    %v2736 = vpack.c.b16 %v2208, %v2200
    %v2737 = vpack.c.b16 %v2209, %v2201
    %v2738 = vpack.c.b16 %v2210, %v2202
    %v2739 = vpack.c.b16 %v2219, %v2211
    %v2740 = vpack.c.b16 %v2220, %v2212
    %v2741 = vpack.c.b16 %v2221, %v2213
    %v2742 = vpack.c.b16 %v2222, %v2214
    %v2743 = vpack.c.b16 %v2223, %v2215
    %v2744 = vpack.c.b16 %v2224, %v2216
    %v2745 = vpack.c.b16 %v2225, %v2217
    %v2746 = vpack.c.b16 %v2226, %v2218
    %v2747 = vpack.c.b16 %v2235, %v2227
    %v2748 = vpack.c.b16 %v2236, %v2228
    %v2749 = vpack.c.b16 %v2237, %v2229
    %v2750 = vpack.c.b16 %v2238, %v2230
    %v2751 = vpack.c.b16 %v2239, %v2231
    %v2752 = vpack.c.b16 %v2240, %v2232
    %v2753 = vpack.c.b16 %v2241, %v2233
    %v2754 = vpack.c.b16 %v2242, %v2234
    %3267 = vmatprep.subr.bf16.mxu0 %v2300
    %3268 = vmatpush1.bf16.msra.mxu0 %v2299
    %3269 = vmatprep.subr.bf16.mxu0 %v2292
    %3270 = vmatpush1.bf16.msra.mxu0 %v2291
    %3271 = vmatprep.subr.bf16.mxu0 %v2284
    %3272 = vmatpush1.bf16.msra.mxu0 %v2283
    %3273 = vmatprep.subr.bf16.mxu0 %v2276
    %3274 = vmatpush1.bf16.msra.mxu0 %v2275
    %3275 = vmatprep.subr.bf16.mxu0 %v2268
    %3276 = vmatpush1.bf16.msra.mxu0 %v2267
    %3277 = vmatprep.subr.bf16.mxu0 %v2260
    %3278 = vmatpush1.bf16.msra.mxu0 %v2259
    %3279 = vmatprep.subr.bf16.mxu0 %v2252
    %3280 = vmatpush1.bf16.msra.mxu0 %v2251
    %3281 = vmatprep.subr.bf16.mxu0 %v2244
    %3282 = vmatpush1.bf16.msra.mxu0 %v2243
    %3283 = vmatprep.subr.bf16.mxu0 %v2364
    %3284 = vmatpush2.bf16.msra.mxu0 %v2363
    %3285 = vmatprep.subr.bf16.mxu0 %v2356
    %3286 = vmatpush2.bf16.msra.mxu0 %v2355
    %3287 = vmatprep.subr.bf16.mxu0 %v2348
    %3288 = vmatpush2.bf16.msra.mxu0 %v2347
    %3289 = vmatprep.subr.bf16.mxu0 %v2340
    %3290 = vmatpush2.bf16.msra.mxu0 %v2339
    %3291 = vmatprep.subr.bf16.mxu0 %v2332
    %3292 = vmatpush2.bf16.msra.mxu0 %v2331
    %3293 = vmatprep.subr.bf16.mxu0 %v2324
    %3294 = vmatpush2.bf16.msra.mxu0 %v2323
    %3295 = vmatprep.subr.bf16.mxu0 %v2316
    %3296 = vmatpush2.bf16.msra.mxu0 %v2315
    %3297 = vmatprep.subr.bf16.mxu0 %v2308
    %3298 = vmatpush2.bf16.msra.mxu0 %v2307
    %3299 = vmatprep.mubr.bf16.mxu0 %v692
    %3300 = vmatmul.mubr.bf16.gmra.mxu0 %v691
    %v3301 = vpop.f32.mrf.mxu0
    %v3302 = vadd.f32 %v630, %v3301
    %v3303 = vpop.f32.mrf.mxu0
    %v3304 = vadd.f32 %v634, %v3303
    %v3305 = vpop.f32.mrf.mxu0
    %v3306 = vadd.f32 %v630, %v3305
    %v3307 = vpop.f32.mrf.mxu0
    %v3308 = vadd.f32 %v634, %v3307
    %3309 = vdwg.mxu0
    %3310 = vmatprep.subr.bf16.mxu0 %v2428
    %3311 = vmatpush1.bf16.msra.mxu0 %v2427
    %3312 = vmatprep.subr.bf16.mxu0 %v2420
    %3313 = vmatpush1.bf16.msra.mxu0 %v2419
    %3314 = vmatprep.subr.bf16.mxu0 %v2412
    %3315 = vmatpush1.bf16.msra.mxu0 %v2411
    %3316 = vmatprep.subr.bf16.mxu0 %v2404
    %3317 = vmatpush1.bf16.msra.mxu0 %v2403
    %3318 = vmatprep.subr.bf16.mxu0 %v2396
    %3319 = vmatpush1.bf16.msra.mxu0 %v2395
    %3320 = vmatprep.subr.bf16.mxu0 %v2388
    %3321 = vmatpush1.bf16.msra.mxu0 %v2387
    %3322 = vmatprep.subr.bf16.mxu0 %v2380
    %3323 = vmatpush1.bf16.msra.mxu0 %v2379
    %3324 = vmatprep.subr.bf16.mxu0 %v2372
    %3325 = vmatpush1.bf16.msra.mxu0 %v2371
    %3326 = vmatprep.subr.bf16.mxu0 %v2492
    %3327 = vmatpush2.bf16.msra.mxu0 %v2491
    %3328 = vmatprep.subr.bf16.mxu0 %v2484
    %3329 = vmatpush2.bf16.msra.mxu0 %v2483
    %3330 = vmatprep.subr.bf16.mxu0 %v2476
    %3331 = vmatpush2.bf16.msra.mxu0 %v2475
    %3332 = vmatprep.subr.bf16.mxu0 %v2468
    %3333 = vmatpush2.bf16.msra.mxu0 %v2467
    %3334 = vmatprep.subr.bf16.mxu0 %v2460
    %3335 = vmatpush2.bf16.msra.mxu0 %v2459
    %3336 = vmatprep.subr.bf16.mxu0 %v2452
    %3337 = vmatpush2.bf16.msra.mxu0 %v2451
    %3338 = vmatprep.subr.bf16.mxu0 %v2444
    %3339 = vmatpush2.bf16.msra.mxu0 %v2443
    %3340 = vmatprep.subr.bf16.mxu0 %v2436
    %3341 = vmatpush2.bf16.msra.mxu0 %v2435
    %3342 = vmatprep.mubr.bf16.mxu0 %v694
    %3343 = vmatmul.mubr.bf16.gmra.mxu0 %v693
    %v3344 = vpop.f32.mrf.mxu0
    %v3345 = vadd.f32 %v3302, %v3344
    %v3346 = vpop.f32.mrf.mxu0
    %v3347 = vadd.f32 %v3304, %v3346
    %v3348 = vpop.f32.mrf.mxu0
    %v3349 = vadd.f32 %v3306, %v3348
    %v3350 = vpop.f32.mrf.mxu0
    %v3351 = vadd.f32 %v3308, %v3350
    %3352 = vdwg.mxu0
    %3353 = vmatprep.subr.bf16.mxu0 %v2556
    %3354 = vmatpush1.bf16.msra.mxu0 %v2555
    %3355 = vmatprep.subr.bf16.mxu0 %v2548
    %3356 = vmatpush1.bf16.msra.mxu0 %v2547
    %3357 = vmatprep.subr.bf16.mxu0 %v2540
    %3358 = vmatpush1.bf16.msra.mxu0 %v2539
    %3359 = vmatprep.subr.bf16.mxu0 %v2532
    %3360 = vmatpush1.bf16.msra.mxu0 %v2531
    %3361 = vmatprep.subr.bf16.mxu0 %v2524
    %3362 = vmatpush1.bf16.msra.mxu0 %v2523
    %3363 = vmatprep.subr.bf16.mxu0 %v2516
    %3364 = vmatpush1.bf16.msra.mxu0 %v2515
    %3365 = vmatprep.subr.bf16.mxu0 %v2508
    %3366 = vmatpush1.bf16.msra.mxu0 %v2507
    %3367 = vmatprep.subr.bf16.mxu0 %v2500
    %3368 = vmatpush1.bf16.msra.mxu0 %v2499
    %3369 = vmatprep.subr.bf16.mxu0 %v2620
    %3370 = vmatpush2.bf16.msra.mxu0 %v2619
    %3371 = vmatprep.subr.bf16.mxu0 %v2612
    %3372 = vmatpush2.bf16.msra.mxu0 %v2611
    %3373 = vmatprep.subr.bf16.mxu0 %v2604
    %3374 = vmatpush2.bf16.msra.mxu0 %v2603
    %3375 = vmatprep.subr.bf16.mxu0 %v2596
    %3376 = vmatpush2.bf16.msra.mxu0 %v2595
    %3377 = vmatprep.subr.bf16.mxu0 %v2588
    %3378 = vmatpush2.bf16.msra.mxu0 %v2587
    %3379 = vmatprep.subr.bf16.mxu0 %v2580
    %3380 = vmatpush2.bf16.msra.mxu0 %v2579
    %3381 = vmatprep.subr.bf16.mxu0 %v2572
    %3382 = vmatpush2.bf16.msra.mxu0 %v2571
    %3383 = vmatprep.subr.bf16.mxu0 %v2564
    %3384 = vmatpush2.bf16.msra.mxu0 %v2563
    %3385 = vmatprep.mubr.bf16.mxu0 %v696
    %3386 = vmatmul.mubr.bf16.gmra.mxu0 %v695
    %v3387 = vpop.f32.mrf.mxu0
    %v3388 = vadd.f32 %v3345, %v3387
    %v3389 = vpop.f32.mrf.mxu0
    %v3390 = vadd.f32 %v3347, %v3389
    %v3391 = vpop.f32.mrf.mxu0
    %v3392 = vadd.f32 %v3349, %v3391
    %v3393 = vpop.f32.mrf.mxu0
    %v3394 = vadd.f32 %v3351, %v3393
    %3395 = vdwg.mxu0
    %3396 = vmatprep.subr.bf16.mxu0 %v2684
    %3397 = vmatpush1.bf16.msra.mxu0 %v2683
    %3398 = vmatprep.subr.bf16.mxu0 %v2676
    %3399 = vmatpush1.bf16.msra.mxu0 %v2675
    %3400 = vmatprep.subr.bf16.mxu0 %v2668
    %3401 = vmatpush1.bf16.msra.mxu0 %v2667
    %3402 = vmatprep.subr.bf16.mxu0 %v2660
    %3403 = vmatpush1.bf16.msra.mxu0 %v2659
    %3404 = vmatprep.subr.bf16.mxu0 %v2652
    %3405 = vmatpush1.bf16.msra.mxu0 %v2651
    %3406 = vmatprep.subr.bf16.mxu0 %v2644
    %3407 = vmatpush1.bf16.msra.mxu0 %v2643
    %3408 = vmatprep.subr.bf16.mxu0 %v2636
    %3409 = vmatpush1.bf16.msra.mxu0 %v2635
    %3410 = vmatprep.subr.bf16.mxu0 %v2628
    %3411 = vmatpush1.bf16.msra.mxu0 %v2627
    %3412 = vmatprep.subr.bf16.mxu0 %v2748
    %3413 = vmatpush2.bf16.msra.mxu0 %v2747
    %3414 = vmatprep.subr.bf16.mxu0 %v2740
    %3415 = vmatpush2.bf16.msra.mxu0 %v2739
    %3416 = vmatprep.subr.bf16.mxu0 %v2732
    %3417 = vmatpush2.bf16.msra.mxu0 %v2731
    %3418 = vmatprep.subr.bf16.mxu0 %v2724
    %3419 = vmatpush2.bf16.msra.mxu0 %v2723
    %3420 = vmatprep.subr.bf16.mxu0 %v2716
    %3421 = vmatpush2.bf16.msra.mxu0 %v2715
    %3422 = vmatprep.subr.bf16.mxu0 %v2708
    %3423 = vmatpush2.bf16.msra.mxu0 %v2707
    %3424 = vmatprep.subr.bf16.mxu0 %v2700
    %3425 = vmatpush2.bf16.msra.mxu0 %v2699
    %3426 = vmatprep.subr.bf16.mxu0 %v2692
    %3427 = vmatpush2.bf16.msra.mxu0 %v2691
    %3428 = vmatprep.mubr.bf16.mxu0 %v698
    %3429 = vmatmul.mubr.bf16.gmra.mxu0 %v697
    %v3430 = vpop.f32.mrf.mxu0
    %v3431 = vadd.f32 %v3388, %v3430
    %v3432 = vpop.f32.mrf.mxu0
    %v3433 = vadd.f32 %v3390, %v3432
    %v3434 = vpop.f32.mrf.mxu0
    %v3435 = vadd.f32 %v3392, %v3434
    %v3436 = vpop.f32.mrf.mxu0
    %v3437 = vadd.f32 %v3394, %v3436
    %3438 = vdwg.mxu0
    %3439 = vmatprep.subr.bf16.mxu0 %v2302
    %3440 = vmatpush1.bf16.msra.mxu0 %v2301
    %3441 = vmatprep.subr.bf16.mxu0 %v2294
    %3442 = vmatpush1.bf16.msra.mxu0 %v2293
    %3443 = vmatprep.subr.bf16.mxu0 %v2286
    %3444 = vmatpush1.bf16.msra.mxu0 %v2285
    %3445 = vmatprep.subr.bf16.mxu0 %v2278
    %3446 = vmatpush1.bf16.msra.mxu0 %v2277
    %3447 = vmatprep.subr.bf16.mxu0 %v2270
    %3448 = vmatpush1.bf16.msra.mxu0 %v2269
    %3449 = vmatprep.subr.bf16.mxu0 %v2262
    %3450 = vmatpush1.bf16.msra.mxu0 %v2261
    %3451 = vmatprep.subr.bf16.mxu0 %v2254
    %3452 = vmatpush1.bf16.msra.mxu0 %v2253
    %3453 = vmatprep.subr.bf16.mxu0 %v2246
    %3454 = vmatpush1.bf16.msra.mxu0 %v2245
    %3455 = vmatprep.subr.bf16.mxu0 %v2366
    %3456 = vmatpush2.bf16.msra.mxu0 %v2365
    %3457 = vmatprep.subr.bf16.mxu0 %v2358
    %3458 = vmatpush2.bf16.msra.mxu0 %v2357
    %3459 = vmatprep.subr.bf16.mxu0 %v2350
    %3460 = vmatpush2.bf16.msra.mxu0 %v2349
    %3461 = vmatprep.subr.bf16.mxu0 %v2342
    %3462 = vmatpush2.bf16.msra.mxu0 %v2341
    %3463 = vmatprep.subr.bf16.mxu0 %v2334
    %3464 = vmatpush2.bf16.msra.mxu0 %v2333
    %3465 = vmatprep.subr.bf16.mxu0 %v2326
    %3466 = vmatpush2.bf16.msra.mxu0 %v2325
    %3467 = vmatprep.subr.bf16.mxu0 %v2318
    %3468 = vmatpush2.bf16.msra.mxu0 %v2317
    %3469 = vmatprep.subr.bf16.mxu0 %v2310
    %3470 = vmatpush2.bf16.msra.mxu0 %v2309
    %3471 = vmatprep.mubr.bf16.mxu0 %v692
    %3472 = vmatmul.mubr.bf16.gmra.mxu0 %v691
    %v3473 = vpop.f32.mrf.mxu0
    %v3474 = vadd.f32 %v638, %v3473
    %v3475 = vpop.f32.mrf.mxu0
    %v3476 = vadd.f32 %v642, %v3475
    %v3477 = vpop.f32.mrf.mxu0
    %v3478 = vadd.f32 %v638, %v3477
    %v3479 = vpop.f32.mrf.mxu0
    %v3480 = vadd.f32 %v642, %v3479
    %3481 = vdwg.mxu0
    %3482 = vmatprep.subr.bf16.mxu0 %v2430
    %3483 = vmatpush1.bf16.msra.mxu0 %v2429
    %3484 = vmatprep.subr.bf16.mxu0 %v2422
    %3485 = vmatpush1.bf16.msra.mxu0 %v2421
    %3486 = vmatprep.subr.bf16.mxu0 %v2414
    %3487 = vmatpush1.bf16.msra.mxu0 %v2413
    %3488 = vmatprep.subr.bf16.mxu0 %v2406
    %3489 = vmatpush1.bf16.msra.mxu0 %v2405
    %3490 = vmatprep.subr.bf16.mxu0 %v2398
    %3491 = vmatpush1.bf16.msra.mxu0 %v2397
    %3492 = vmatprep.subr.bf16.mxu0 %v2390
    %3493 = vmatpush1.bf16.msra.mxu0 %v2389
    %3494 = vmatprep.subr.bf16.mxu0 %v2382
    %3495 = vmatpush1.bf16.msra.mxu0 %v2381
    %3496 = vmatprep.subr.bf16.mxu0 %v2374
    %3497 = vmatpush1.bf16.msra.mxu0 %v2373
    %3498 = vmatprep.subr.bf16.mxu0 %v2494
    %3499 = vmatpush2.bf16.msra.mxu0 %v2493
    %3500 = vmatprep.subr.bf16.mxu0 %v2486
    %3501 = vmatpush2.bf16.msra.mxu0 %v2485
    %3502 = vmatprep.subr.bf16.mxu0 %v2478
    %3503 = vmatpush2.bf16.msra.mxu0 %v2477
    %3504 = vmatprep.subr.bf16.mxu0 %v2470
    %3505 = vmatpush2.bf16.msra.mxu0 %v2469
    %3506 = vmatprep.subr.bf16.mxu0 %v2462
    %3507 = vmatpush2.bf16.msra.mxu0 %v2461
    %3508 = vmatprep.subr.bf16.mxu0 %v2454
    %3509 = vmatpush2.bf16.msra.mxu0 %v2453
    %3510 = vmatprep.subr.bf16.mxu0 %v2446
    %3511 = vmatpush2.bf16.msra.mxu0 %v2445
    %3512 = vmatprep.subr.bf16.mxu0 %v2438
    %3513 = vmatpush2.bf16.msra.mxu0 %v2437
    %3514 = vmatprep.mubr.bf16.mxu0 %v694
    %3515 = vmatmul.mubr.bf16.gmra.mxu0 %v693
    %v3516 = vpop.f32.mrf.mxu0
    %v3517 = vadd.f32 %v3474, %v3516
    %v3518 = vpop.f32.mrf.mxu0
    %v3519 = vadd.f32 %v3476, %v3518
    %v3520 = vpop.f32.mrf.mxu0
    %v3521 = vadd.f32 %v3478, %v3520
    %v3522 = vpop.f32.mrf.mxu0
    %v3523 = vadd.f32 %v3480, %v3522
    %3524 = vdwg.mxu0
    %3525 = vmatprep.subr.bf16.mxu0 %v2558
    %3526 = vmatpush1.bf16.msra.mxu0 %v2557
    %3527 = vmatprep.subr.bf16.mxu0 %v2550
    %3528 = vmatpush1.bf16.msra.mxu0 %v2549
    %3529 = vmatprep.subr.bf16.mxu0 %v2542
    %3530 = vmatpush1.bf16.msra.mxu0 %v2541
    %3531 = vmatprep.subr.bf16.mxu0 %v2534
    %3532 = vmatpush1.bf16.msra.mxu0 %v2533
    %3533 = vmatprep.subr.bf16.mxu0 %v2526
    %3534 = vmatpush1.bf16.msra.mxu0 %v2525
    %3535 = vmatprep.subr.bf16.mxu0 %v2518
    %3536 = vmatpush1.bf16.msra.mxu0 %v2517
    %3537 = vmatprep.subr.bf16.mxu0 %v2510
    %3538 = vmatpush1.bf16.msra.mxu0 %v2509
    %3539 = vmatprep.subr.bf16.mxu0 %v2502
    %3540 = vmatpush1.bf16.msra.mxu0 %v2501
    %3541 = vmatprep.subr.bf16.mxu0 %v2622
    %3542 = vmatpush2.bf16.msra.mxu0 %v2621
    %3543 = vmatprep.subr.bf16.mxu0 %v2614
    %3544 = vmatpush2.bf16.msra.mxu0 %v2613
    %3545 = vmatprep.subr.bf16.mxu0 %v2606
    %3546 = vmatpush2.bf16.msra.mxu0 %v2605
    %3547 = vmatprep.subr.bf16.mxu0 %v2598
    %3548 = vmatpush2.bf16.msra.mxu0 %v2597
    %3549 = vmatprep.subr.bf16.mxu0 %v2590
    %3550 = vmatpush2.bf16.msra.mxu0 %v2589
    %3551 = vmatprep.subr.bf16.mxu0 %v2582
    %3552 = vmatpush2.bf16.msra.mxu0 %v2581
    %3553 = vmatprep.subr.bf16.mxu0 %v2574
    %3554 = vmatpush2.bf16.msra.mxu0 %v2573
    %3555 = vmatprep.subr.bf16.mxu0 %v2566
    %3556 = vmatpush2.bf16.msra.mxu0 %v2565
    %3557 = vmatprep.mubr.bf16.mxu0 %v696
    %3558 = vmatmul.mubr.bf16.gmra.mxu0 %v695
    %v3559 = vpop.f32.mrf.mxu0
    %v3560 = vadd.f32 %v3517, %v3559
    %v3561 = vpop.f32.mrf.mxu0
    %v3562 = vadd.f32 %v3519, %v3561
    %v3563 = vpop.f32.mrf.mxu0
    %v3564 = vadd.f32 %v3521, %v3563
    %v3565 = vpop.f32.mrf.mxu0
    %v3566 = vadd.f32 %v3523, %v3565
    %3567 = vdwg.mxu0
    %3568 = vmatprep.subr.bf16.mxu0 %v2686
    %3569 = vmatpush1.bf16.msra.mxu0 %v2685
    %3570 = vmatprep.subr.bf16.mxu0 %v2678
    %3571 = vmatpush1.bf16.msra.mxu0 %v2677
    %3572 = vmatprep.subr.bf16.mxu0 %v2670
    %3573 = vmatpush1.bf16.msra.mxu0 %v2669
    %3574 = vmatprep.subr.bf16.mxu0 %v2662
    %3575 = vmatpush1.bf16.msra.mxu0 %v2661
    %3576 = vmatprep.subr.bf16.mxu0 %v2654
    %3577 = vmatpush1.bf16.msra.mxu0 %v2653
    %3578 = vmatprep.subr.bf16.mxu0 %v2646
    %3579 = vmatpush1.bf16.msra.mxu0 %v2645
    %3580 = vmatprep.subr.bf16.mxu0 %v2638
    %3581 = vmatpush1.bf16.msra.mxu0 %v2637
    %3582 = vmatprep.subr.bf16.mxu0 %v2630
    %3583 = vmatpush1.bf16.msra.mxu0 %v2629
    %3584 = vmatprep.subr.bf16.mxu0 %v2750
    %3585 = vmatpush2.bf16.msra.mxu0 %v2749
    %3586 = vmatprep.subr.bf16.mxu0 %v2742
    %3587 = vmatpush2.bf16.msra.mxu0 %v2741
    %3588 = vmatprep.subr.bf16.mxu0 %v2734
    %3589 = vmatpush2.bf16.msra.mxu0 %v2733
    %3590 = vmatprep.subr.bf16.mxu0 %v2726
    %3591 = vmatpush2.bf16.msra.mxu0 %v2725
    %3592 = vmatprep.subr.bf16.mxu0 %v2718
    %3593 = vmatpush2.bf16.msra.mxu0 %v2717
    %3594 = vmatprep.subr.bf16.mxu0 %v2710
    %3595 = vmatpush2.bf16.msra.mxu0 %v2709
    %3596 = vmatprep.subr.bf16.mxu0 %v2702
    %3597 = vmatpush2.bf16.msra.mxu0 %v2701
    %3598 = vmatprep.subr.bf16.mxu0 %v2694
    %3599 = vmatpush2.bf16.msra.mxu0 %v2693
    %3600 = vmatprep.mubr.bf16.mxu0 %v698
    %3601 = vmatmul.mubr.bf16.gmra.mxu0 %v697
    %v3602 = vpop.f32.mrf.mxu0
    %v3603 = vadd.f32 %v3560, %v3602
    %v3604 = vpop.f32.mrf.mxu0
    %v3605 = vadd.f32 %v3562, %v3604
    %v3606 = vpop.f32.mrf.mxu0
    %v3607 = vadd.f32 %v3564, %v3606
    %v3608 = vpop.f32.mrf.mxu0
    %v3609 = vadd.f32 %v3566, %v3608
    %3610 = vdwg.mxu0
    %3611 = vmatprep.subr.bf16.mxu0 %v2304
    %3612 = vmatpush1.bf16.msra.mxu0 %v2303
    %3613 = vmatprep.subr.bf16.mxu0 %v2296
    %3614 = vmatpush1.bf16.msra.mxu0 %v2295
    %3615 = vmatprep.subr.bf16.mxu0 %v2288
    %3616 = vmatpush1.bf16.msra.mxu0 %v2287
    %3617 = vmatprep.subr.bf16.mxu0 %v2280
    %3618 = vmatpush1.bf16.msra.mxu0 %v2279
    %3619 = vmatprep.subr.bf16.mxu0 %v2272
    %3620 = vmatpush1.bf16.msra.mxu0 %v2271
    %3621 = vmatprep.subr.bf16.mxu0 %v2264
    %3622 = vmatpush1.bf16.msra.mxu0 %v2263
    %3623 = vmatprep.subr.bf16.mxu0 %v2256
    %3624 = vmatpush1.bf16.msra.mxu0 %v2255
    %3625 = vmatprep.subr.bf16.mxu0 %v2248
    %3626 = vmatpush1.bf16.msra.mxu0 %v2247
    %3627 = vmatprep.subr.bf16.mxu0 %v2368
    %3628 = vmatpush2.bf16.msra.mxu0 %v2367
    %3629 = vmatprep.subr.bf16.mxu0 %v2360
    %3630 = vmatpush2.bf16.msra.mxu0 %v2359
    %3631 = vmatprep.subr.bf16.mxu0 %v2352
    %3632 = vmatpush2.bf16.msra.mxu0 %v2351
    %3633 = vmatprep.subr.bf16.mxu0 %v2344
    %3634 = vmatpush2.bf16.msra.mxu0 %v2343
    %3635 = vmatprep.subr.bf16.mxu0 %v2336
    %3636 = vmatpush2.bf16.msra.mxu0 %v2335
    %3637 = vmatprep.subr.bf16.mxu0 %v2328
    %3638 = vmatpush2.bf16.msra.mxu0 %v2327
    %3639 = vmatprep.subr.bf16.mxu0 %v2320
    %3640 = vmatpush2.bf16.msra.mxu0 %v2319
    %3641 = vmatprep.subr.bf16.mxu0 %v2312
    %3642 = vmatpush2.bf16.msra.mxu0 %v2311
    %3643 = vmatprep.mubr.bf16.mxu0 %v692
    %3644 = vmatmul.mubr.bf16.gmra.mxu0 %v691
    %v3645 = vpop.f32.mrf.mxu0
    %v3646 = vadd.f32 %v646, %v3645
    %v3647 = vpop.f32.mrf.mxu0
    %v3648 = vadd.f32 %v650, %v3647
    %v3649 = vpop.f32.mrf.mxu0
    %v3650 = vadd.f32 %v646, %v3649
    %v3651 = vpop.f32.mrf.mxu0
    %v3652 = vadd.f32 %v650, %v3651
    %3653 = vdwg.mxu0
    %3654 = vmatprep.subr.bf16.mxu0 %v2432
    %3655 = vmatpush1.bf16.msra.mxu0 %v2431
    %3656 = vmatprep.subr.bf16.mxu0 %v2424
    %3657 = vmatpush1.bf16.msra.mxu0 %v2423
    %3658 = vmatprep.subr.bf16.mxu0 %v2416
    %3659 = vmatpush1.bf16.msra.mxu0 %v2415
    %3660 = vmatprep.subr.bf16.mxu0 %v2408
    %3661 = vmatpush1.bf16.msra.mxu0 %v2407
    %3662 = vmatprep.subr.bf16.mxu0 %v2400
    %3663 = vmatpush1.bf16.msra.mxu0 %v2399
    %3664 = vmatprep.subr.bf16.mxu0 %v2392
    %3665 = vmatpush1.bf16.msra.mxu0 %v2391
    %3666 = vmatprep.subr.bf16.mxu0 %v2384
    %3667 = vmatpush1.bf16.msra.mxu0 %v2383
    %3668 = vmatprep.subr.bf16.mxu0 %v2376
    %3669 = vmatpush1.bf16.msra.mxu0 %v2375
    %3670 = vmatprep.subr.bf16.mxu0 %v2496
    %3671 = vmatpush2.bf16.msra.mxu0 %v2495
    %3672 = vmatprep.subr.bf16.mxu0 %v2488
    %3673 = vmatpush2.bf16.msra.mxu0 %v2487
    %3674 = vmatprep.subr.bf16.mxu0 %v2480
    %3675 = vmatpush2.bf16.msra.mxu0 %v2479
    %3676 = vmatprep.subr.bf16.mxu0 %v2472
    %3677 = vmatpush2.bf16.msra.mxu0 %v2471
    %3678 = vmatprep.subr.bf16.mxu0 %v2464
    %3679 = vmatpush2.bf16.msra.mxu0 %v2463
    %3680 = vmatprep.subr.bf16.mxu0 %v2456
    %3681 = vmatpush2.bf16.msra.mxu0 %v2455
    %3682 = vmatprep.subr.bf16.mxu0 %v2448
    %3683 = vmatpush2.bf16.msra.mxu0 %v2447
    %3684 = vmatprep.subr.bf16.mxu0 %v2440
    %3685 = vmatpush2.bf16.msra.mxu0 %v2439
    %3686 = vmatprep.mubr.bf16.mxu0 %v694
    %3687 = vmatmul.mubr.bf16.gmra.mxu0 %v693
    %v3688 = vpop.f32.mrf.mxu0
    %v3689 = vadd.f32 %v3646, %v3688
    %v3690 = vpop.f32.mrf.mxu0
    %v3691 = vadd.f32 %v3648, %v3690
    %v3692 = vpop.f32.mrf.mxu0
    %v3693 = vadd.f32 %v3650, %v3692
    %v3694 = vpop.f32.mrf.mxu0
    %v3695 = vadd.f32 %v3652, %v3694
    %3696 = vdwg.mxu0
    %3697 = vmatprep.subr.bf16.mxu0 %v2560
    %3698 = vmatpush1.bf16.msra.mxu0 %v2559
    %3699 = vmatprep.subr.bf16.mxu0 %v2552
    %3700 = vmatpush1.bf16.msra.mxu0 %v2551
    %3701 = vmatprep.subr.bf16.mxu0 %v2544
    %3702 = vmatpush1.bf16.msra.mxu0 %v2543
    %3703 = vmatprep.subr.bf16.mxu0 %v2536
    %3704 = vmatpush1.bf16.msra.mxu0 %v2535
    %3705 = vmatprep.subr.bf16.mxu0 %v2528
    %3706 = vmatpush1.bf16.msra.mxu0 %v2527
    %3707 = vmatprep.subr.bf16.mxu0 %v2520
    %3708 = vmatpush1.bf16.msra.mxu0 %v2519
    %3709 = vmatprep.subr.bf16.mxu0 %v2512
    %3710 = vmatpush1.bf16.msra.mxu0 %v2511
    %3711 = vmatprep.subr.bf16.mxu0 %v2504
    %3712 = vmatpush1.bf16.msra.mxu0 %v2503
    %3713 = vmatprep.subr.bf16.mxu0 %v2624
    %3714 = vmatpush2.bf16.msra.mxu0 %v2623
    %3715 = vmatprep.subr.bf16.mxu0 %v2616
    %3716 = vmatpush2.bf16.msra.mxu0 %v2615
    %3717 = vmatprep.subr.bf16.mxu0 %v2608
    %3718 = vmatpush2.bf16.msra.mxu0 %v2607
    %3719 = vmatprep.subr.bf16.mxu0 %v2600
    %3720 = vmatpush2.bf16.msra.mxu0 %v2599
    %3721 = vmatprep.subr.bf16.mxu0 %v2592
    %3722 = vmatpush2.bf16.msra.mxu0 %v2591
    %3723 = vmatprep.subr.bf16.mxu0 %v2584
    %3724 = vmatpush2.bf16.msra.mxu0 %v2583
    %3725 = vmatprep.subr.bf16.mxu0 %v2576
    %3726 = vmatpush2.bf16.msra.mxu0 %v2575
    %3727 = vmatprep.subr.bf16.mxu0 %v2568
    %3728 = vmatpush2.bf16.msra.mxu0 %v2567
    %3729 = vmatprep.mubr.bf16.mxu0 %v696
    %3730 = vmatmul.mubr.bf16.gmra.mxu0 %v695
    %v3731 = vpop.f32.mrf.mxu0
    %v3732 = vadd.f32 %v3689, %v3731
    %v3733 = vpop.f32.mrf.mxu0
    %v3734 = vadd.f32 %v3691, %v3733
    %v3735 = vpop.f32.mrf.mxu0
    %v3736 = vadd.f32 %v3693, %v3735
    %v3737 = vpop.f32.mrf.mxu0
    %v3738 = vadd.f32 %v3695, %v3737
    %3739 = vdwg.mxu0
    %3740 = vmatprep.subr.bf16.mxu0 %v2688
    %3741 = vmatpush1.bf16.msra.mxu0 %v2687
    %3742 = vmatprep.subr.bf16.mxu0 %v2680
    %3743 = vmatpush1.bf16.msra.mxu0 %v2679
    %3744 = vmatprep.subr.bf16.mxu0 %v2672
    %3745 = vmatpush1.bf16.msra.mxu0 %v2671
    %3746 = vmatprep.subr.bf16.mxu0 %v2664
    %3747 = vmatpush1.bf16.msra.mxu0 %v2663
    %3748 = vmatprep.subr.bf16.mxu0 %v2656
    %3749 = vmatpush1.bf16.msra.mxu0 %v2655
    %3750 = vmatprep.subr.bf16.mxu0 %v2648
    %3751 = vmatpush1.bf16.msra.mxu0 %v2647
    %3752 = vmatprep.subr.bf16.mxu0 %v2640
    %3753 = vmatpush1.bf16.msra.mxu0 %v2639
    %3754 = vmatprep.subr.bf16.mxu0 %v2632
    %3755 = vmatpush1.bf16.msra.mxu0 %v2631
    %3756 = vmatprep.subr.bf16.mxu0 %v2752
    %3757 = vmatpush2.bf16.msra.mxu0 %v2751
    %3758 = vmatprep.subr.bf16.mxu0 %v2744
    %3759 = vmatpush2.bf16.msra.mxu0 %v2743
    %3760 = vmatprep.subr.bf16.mxu0 %v2736
    %3761 = vmatpush2.bf16.msra.mxu0 %v2735
    %3762 = vmatprep.subr.bf16.mxu0 %v2728
    %3763 = vmatpush2.bf16.msra.mxu0 %v2727
    %3764 = vmatprep.subr.bf16.mxu0 %v2720
    %3765 = vmatpush2.bf16.msra.mxu0 %v2719
    %3766 = vmatprep.subr.bf16.mxu0 %v2712
    %3767 = vmatpush2.bf16.msra.mxu0 %v2711
    %3768 = vmatprep.subr.bf16.mxu0 %v2704
    %3769 = vmatpush2.bf16.msra.mxu0 %v2703
    %3770 = vmatprep.subr.bf16.mxu0 %v2696
    %3771 = vmatpush2.bf16.msra.mxu0 %v2695
    %3772 = vmatprep.mubr.bf16.mxu0 %v698
    %3773 = vmatmul.mubr.bf16.gmra.mxu0 %v697
    %v3774 = vpop.f32.mrf.mxu0
    %v3775 = vadd.f32 %v3732, %v3774
    %v3776 = vpop.f32.mrf.mxu0
    %v3777 = vadd.f32 %v3734, %v3776
    %v3778 = vpop.f32.mrf.mxu0
    %v3779 = vadd.f32 %v3736, %v3778
    %v3780 = vpop.f32.mrf.mxu0
    %v3781 = vadd.f32 %v3738, %v3780
    %3782 = vdwg.mxu0
    %3783 = vmatprep.subr.bf16.mxu0 %v2306
    %3784 = vmatpush1.bf16.msra.mxu0 %v2305
    %3785 = vmatprep.subr.bf16.mxu0 %v2298
    %3786 = vmatpush1.bf16.msra.mxu0 %v2297
    %3787 = vmatprep.subr.bf16.mxu0 %v2290
    %3788 = vmatpush1.bf16.msra.mxu0 %v2289
    %3789 = vmatprep.subr.bf16.mxu0 %v2282
    %3790 = vmatpush1.bf16.msra.mxu0 %v2281
    %3791 = vmatprep.subr.bf16.mxu0 %v2274
    %3792 = vmatpush1.bf16.msra.mxu0 %v2273
    %3793 = vmatprep.subr.bf16.mxu0 %v2266
    %3794 = vmatpush1.bf16.msra.mxu0 %v2265
    %3795 = vmatprep.subr.bf16.mxu0 %v2258
    %3796 = vmatpush1.bf16.msra.mxu0 %v2257
    %3797 = vmatprep.subr.bf16.mxu0 %v2250
    %3798 = vmatpush1.bf16.msra.mxu0 %v2249
    %3799 = vmatprep.subr.bf16.mxu0 %v2370
    %3800 = vmatpush2.bf16.msra.mxu0 %v2369
    %3801 = vmatprep.subr.bf16.mxu0 %v2362
    %3802 = vmatpush2.bf16.msra.mxu0 %v2361
    %3803 = vmatprep.subr.bf16.mxu0 %v2354
    %3804 = vmatpush2.bf16.msra.mxu0 %v2353
    %3805 = vmatprep.subr.bf16.mxu0 %v2346
    %3806 = vmatpush2.bf16.msra.mxu0 %v2345
    %3807 = vmatprep.subr.bf16.mxu0 %v2338
    %3808 = vmatpush2.bf16.msra.mxu0 %v2337
    %3809 = vmatprep.subr.bf16.mxu0 %v2330
    %3810 = vmatpush2.bf16.msra.mxu0 %v2329
    %3811 = vmatprep.subr.bf16.mxu0 %v2322
    %3812 = vmatpush2.bf16.msra.mxu0 %v2321
    %3813 = vmatprep.subr.bf16.mxu0 %v2314
    %3814 = vmatpush2.bf16.msra.mxu0 %v2313
    %3815 = vmatprep.mubr.bf16.mxu0 %v692
    %3816 = vmatmul.mubr.bf16.gmra.mxu0 %v691
    %v3817 = vpop.f32.mrf.mxu0
    %v3818 = vadd.f32 %v654, %v3817
    %v3819 = vpop.f32.mrf.mxu0
    %v3820 = vadd.f32 %v658, %v3819
    %v3821 = vpop.f32.mrf.mxu0
    %v3822 = vadd.f32 %v654, %v3821
    %v3823 = vpop.f32.mrf.mxu0
    %v3824 = vadd.f32 %v658, %v3823
    %3825 = vdwg.mxu0
    %3826 = vmatprep.subr.bf16.mxu0 %v2434
    %3827 = vmatpush1.bf16.msra.mxu0 %v2433
    %3828 = vmatprep.subr.bf16.mxu0 %v2426
    %3829 = vmatpush1.bf16.msra.mxu0 %v2425
    %3830 = vmatprep.subr.bf16.mxu0 %v2418
    %3831 = vmatpush1.bf16.msra.mxu0 %v2417
    %3832 = vmatprep.subr.bf16.mxu0 %v2410
    %3833 = vmatpush1.bf16.msra.mxu0 %v2409
    %3834 = vmatprep.subr.bf16.mxu0 %v2402
    %3835 = vmatpush1.bf16.msra.mxu0 %v2401
    %3836 = vmatprep.subr.bf16.mxu0 %v2394
    %3837 = vmatpush1.bf16.msra.mxu0 %v2393
    %3838 = vmatprep.subr.bf16.mxu0 %v2386
    %3839 = vmatpush1.bf16.msra.mxu0 %v2385
    %3840 = vmatprep.subr.bf16.mxu0 %v2378
    %3841 = vmatpush1.bf16.msra.mxu0 %v2377
    %3842 = vmatprep.subr.bf16.mxu0 %v2498
    %3843 = vmatpush2.bf16.msra.mxu0 %v2497
    %3844 = vmatprep.subr.bf16.mxu0 %v2490
    %3845 = vmatpush2.bf16.msra.mxu0 %v2489
    %3846 = vmatprep.subr.bf16.mxu0 %v2482
    %3847 = vmatpush2.bf16.msra.mxu0 %v2481
    %3848 = vmatprep.subr.bf16.mxu0 %v2474
    %3849 = vmatpush2.bf16.msra.mxu0 %v2473
    %3850 = vmatprep.subr.bf16.mxu0 %v2466
    %3851 = vmatpush2.bf16.msra.mxu0 %v2465
    %3852 = vmatprep.subr.bf16.mxu0 %v2458
    %3853 = vmatpush2.bf16.msra.mxu0 %v2457
    %3854 = vmatprep.subr.bf16.mxu0 %v2450
    %3855 = vmatpush2.bf16.msra.mxu0 %v2449
    %3856 = vmatprep.subr.bf16.mxu0 %v2442
    %3857 = vmatpush2.bf16.msra.mxu0 %v2441
    %3858 = vmatprep.mubr.bf16.mxu0 %v694
    %3859 = vmatmul.mubr.bf16.gmra.mxu0 %v693
    %v3860 = vpop.f32.mrf.mxu0
    %v3861 = vadd.f32 %v3818, %v3860
    %v3862 = vpop.f32.mrf.mxu0
    %v3863 = vadd.f32 %v3820, %v3862
    %v3864 = vpop.f32.mrf.mxu0
    %v3865 = vadd.f32 %v3822, %v3864
    %v3866 = vpop.f32.mrf.mxu0
    %v3867 = vadd.f32 %v3824, %v3866
    %3868 = vdwg.mxu0
    %3869 = vmatprep.subr.bf16.mxu0 %v2562
    %3870 = vmatpush1.bf16.msra.mxu0 %v2561
    %3871 = vmatprep.subr.bf16.mxu0 %v2554
    %3872 = vmatpush1.bf16.msra.mxu0 %v2553
    %3873 = vmatprep.subr.bf16.mxu0 %v2546
    %3874 = vmatpush1.bf16.msra.mxu0 %v2545
    %3875 = vmatprep.subr.bf16.mxu0 %v2538
    %3876 = vmatpush1.bf16.msra.mxu0 %v2537
    %3877 = vmatprep.subr.bf16.mxu0 %v2530
    %3878 = vmatpush1.bf16.msra.mxu0 %v2529
    %3879 = vmatprep.subr.bf16.mxu0 %v2522
    %3880 = vmatpush1.bf16.msra.mxu0 %v2521
    %3881 = vmatprep.subr.bf16.mxu0 %v2514
    %3882 = vmatpush1.bf16.msra.mxu0 %v2513
    %3883 = vmatprep.subr.bf16.mxu0 %v2506
    %3884 = vmatpush1.bf16.msra.mxu0 %v2505
    %3885 = vmatprep.subr.bf16.mxu0 %v2626
    %3886 = vmatpush2.bf16.msra.mxu0 %v2625
    %3887 = vmatprep.subr.bf16.mxu0 %v2618
    %3888 = vmatpush2.bf16.msra.mxu0 %v2617
    %3889 = vmatprep.subr.bf16.mxu0 %v2610
    %3890 = vmatpush2.bf16.msra.mxu0 %v2609
    %3891 = vmatprep.subr.bf16.mxu0 %v2602
    %3892 = vmatpush2.bf16.msra.mxu0 %v2601
    %3893 = vmatprep.subr.bf16.mxu0 %v2594
    %3894 = vmatpush2.bf16.msra.mxu0 %v2593
    %3895 = vmatprep.subr.bf16.mxu0 %v2586
    %3896 = vmatpush2.bf16.msra.mxu0 %v2585
    %3897 = vmatprep.subr.bf16.mxu0 %v2578
    %3898 = vmatpush2.bf16.msra.mxu0 %v2577
    %3899 = vmatprep.subr.bf16.mxu0 %v2570
    %3900 = vmatpush2.bf16.msra.mxu0 %v2569
    %3901 = vmatprep.mubr.bf16.mxu0 %v696
    %3902 = vmatmul.mubr.bf16.gmra.mxu0 %v695
    %v3903 = vpop.f32.mrf.mxu0
    %v3904 = vadd.f32 %v3861, %v3903
    %v3905 = vpop.f32.mrf.mxu0
    %v3906 = vadd.f32 %v3863, %v3905
    %v3907 = vpop.f32.mrf.mxu0
    %v3908 = vadd.f32 %v3865, %v3907
    %v3909 = vpop.f32.mrf.mxu0
    %v3910 = vadd.f32 %v3867, %v3909
    %3911 = vdwg.mxu0
    %3912 = vmatprep.subr.bf16.mxu0 %v2690
    %3913 = vmatpush1.bf16.msra.mxu0 %v2689
    %3914 = vmatprep.subr.bf16.mxu0 %v2682
    %3915 = vmatpush1.bf16.msra.mxu0 %v2681
    %3916 = vmatprep.subr.bf16.mxu0 %v2674
    %3917 = vmatpush1.bf16.msra.mxu0 %v2673
    %3918 = vmatprep.subr.bf16.mxu0 %v2666
    %3919 = vmatpush1.bf16.msra.mxu0 %v2665
    %3920 = vmatprep.subr.bf16.mxu0 %v2658
    %3921 = vmatpush1.bf16.msra.mxu0 %v2657
    %3922 = vmatprep.subr.bf16.mxu0 %v2650
    %3923 = vmatpush1.bf16.msra.mxu0 %v2649
    %3924 = vmatprep.subr.bf16.mxu0 %v2642
    %3925 = vmatpush1.bf16.msra.mxu0 %v2641
    %3926 = vmatprep.subr.bf16.mxu0 %v2634
    %3927 = vmatpush1.bf16.msra.mxu0 %v2633
    %3928 = vmatprep.subr.bf16.mxu0 %v2754
    %3929 = vmatpush2.bf16.msra.mxu0 %v2753
    %3930 = vmatprep.subr.bf16.mxu0 %v2746
    %3931 = vmatpush2.bf16.msra.mxu0 %v2745
    %3932 = vmatprep.subr.bf16.mxu0 %v2738
    %3933 = vmatpush2.bf16.msra.mxu0 %v2737
    %3934 = vmatprep.subr.bf16.mxu0 %v2730
    %3935 = vmatpush2.bf16.msra.mxu0 %v2729
    %3936 = vmatprep.subr.bf16.mxu0 %v2722
    %3937 = vmatpush2.bf16.msra.mxu0 %v2721
    %3938 = vmatprep.subr.bf16.mxu0 %v2714
    %3939 = vmatpush2.bf16.msra.mxu0 %v2713
    %3940 = vmatprep.subr.bf16.mxu0 %v2706
    %3941 = vmatpush2.bf16.msra.mxu0 %v2705
    %3942 = vmatprep.subr.bf16.mxu0 %v2698
    %3943 = vmatpush2.bf16.msra.mxu0 %v2697
    %3944 = vmatprep.mubr.bf16.mxu0 %v698
    %3945 = vmatmul.mubr.bf16.gmra.mxu0 %v697
    %v3946 = vpop.f32.mrf.mxu0
    %v3947 = vadd.f32 %v3904, %v3946
    %v3948 = vpop.f32.mrf.mxu0
    %v3949 = vadd.f32 %v3906, %v3948
    %v3950 = vpop.f32.mrf.mxu0
    %v3951 = vadd.f32 %v3908, %v3950
    %v3952 = vpop.f32.mrf.mxu0
    %v3953 = vadd.f32 %v3910, %v3952
    %3954 = vdwg.mxu0
    %v3955 = vmax.f32 %v3431, 0.0
    %v3956 = vmax.f32 %v3433, 0.0
    %v3957 = vmax.f32 %v3603, 0.0
    %v3958 = vmax.f32 %v3605, 0.0
    %v3959 = vmax.f32 %v3775, 0.0
    %v3960 = vmax.f32 %v3777, 0.0
    %v3961 = vmax.f32 %v3947, 0.0
    %v3962 = vmax.f32 %v3949, 0.0
    %v3963 = vmax.f32 %v3435, 0.0
    %v3964 = vmax.f32 %v3437, 0.0
    %v3965 = vmax.f32 %v3607, 0.0
    %v3966 = vmax.f32 %v3609, 0.0
    %v3967 = vmax.f32 %v3779, 0.0
    %v3968 = vmax.f32 %v3781, 0.0
    %v3969 = vmax.f32 %v3951, 0.0
    %v3970 = vmax.f32 %v3953, 0.0
    %v3971 = vpack.c.bf16 %v3963, %v3955
    %v3972 = vpack.c.bf16 %v3964, %v3956
    %v3973 = vpack.c.bf16 %v3965, %v3957
    %v3974 = vpack.c.bf16 %v3966, %v3958
    %v3975 = vpack.c.bf16 %v3967, %v3959
    %v3976 = vpack.c.bf16 %v3968, %v3960
    %v3977 = vpack.c.bf16 %v3969, %v3961
    %v3978 = vpack.c.bf16 %v3970, %v3962
    %v3979 = vld [vmem:[#allocation7] sm:$0xf]
    %v3980 = vld [vmem:[#allocation7 + $0x4] sm:$0xf]
    %v3981 = vld [vmem:[#allocation7 + $0x8] sm:$0xf]
    %v3982 = vld [vmem:[#allocation7 + $0xc] sm:$0xf]
    %v3983 = vld [vmem:[#allocation7 + $0x10] sm:$0xf]
    %v3984 = vld [vmem:[#allocation7 + $0x14] sm:$0xf]
    %v3985 = vld [vmem:[#allocation7 + $0x18] sm:$0xf]
    %v3986 = vld [vmem:[#allocation7 + $0x1c] sm:$0xf]
    %v3987 = vld [vmem:[#allocation7 + $0x20] sm:$0xf]
    %v3988 = vld [vmem:[#allocation7 + $0x24] sm:$0xf]
    %v3989 = vld [vmem:[#allocation7 + $0x28] sm:$0xf]
    %v3990 = vld [vmem:[#allocation7 + $0x2c] sm:$0xf]
    %v3991 = vld [vmem:[#allocation7 + $0x30] sm:$0xf]
    %v3992 = vld [vmem:[#allocation7 + $0x34] sm:$0xf]
    %v3993 = vld [vmem:[#allocation7 + $0x38] sm:$0xf]
    %v3994 = vld [vmem:[#allocation7 + $0x3c] sm:$0xf]
    %v3995 = vld [vmem:[#allocation7 + $0x40] sm:$0xf]
    %v3996 = vld [vmem:[#allocation7 + $0x44] sm:$0xf]
    %v3997 = vld [vmem:[#allocation7 + $0x48] sm:$0xf]
    %v3998 = vld [vmem:[#allocation7 + $0x4c] sm:$0xf]
    %v3999 = vld [vmem:[#allocation7 + $0x50] sm:$0xf]
    %v4000 = vld [vmem:[#allocation7 + $0x54] sm:$0xf]
    %v4001 = vld [vmem:[#allocation7 + $0x58] sm:$0xf]
    %v4002 = vld [vmem:[#allocation7 + $0x5c] sm:$0xf]
    %v4003 = vld [vmem:[#allocation7 + $0x60] sm:$0xf]
    %v4004 = vld [vmem:[#allocation7 + $0x64] sm:$0xf]
    %v4005 = vld [vmem:[#allocation7 + $0x68] sm:$0xf]
    %v4006 = vld [vmem:[#allocation7 + $0x6c] sm:$0xf]
    %v4007 = vld [vmem:[#allocation7 + $0x70] sm:$0xf]
    %v4008 = vld [vmem:[#allocation7 + $0x74] sm:$0xf]
    %v4009 = vld [vmem:[#allocation7 + $0x78] sm:$0xf]
    %v4010 = vld [vmem:[#allocation7 + $0x7c] sm:$0xf]
    %v4011 = vld [vmem:[#allocation7 + $0x80] sm:$0xf]
    %v4012 = vld [vmem:[#allocation7 + $0x84] sm:$0xf]
    %v4013 = vld [vmem:[#allocation7 + $0x88] sm:$0xf]
    %v4014 = vld [vmem:[#allocation7 + $0x8c] sm:$0xf]
    %v4015 = vld [vmem:[#allocation7 + $0x90] sm:$0xf]
    %v4016 = vld [vmem:[#allocation7 + $0x94] sm:$0xf]
    %v4017 = vld [vmem:[#allocation7 + $0x98] sm:$0xf]
    %v4018 = vld [vmem:[#allocation7 + $0x9c] sm:$0xf]
    %v4019 = vld [vmem:[#allocation7 + $0xa0] sm:$0xf]
    %v4020 = vld [vmem:[#allocation7 + $0xa4] sm:$0xf]
    %v4021 = vld [vmem:[#allocation7 + $0xa8] sm:$0xf]
    %v4022 = vld [vmem:[#allocation7 + $0xac] sm:$0xf]
    %v4023 = vld [vmem:[#allocation7 + $0xb0] sm:$0xf]
    %v4024 = vld [vmem:[#allocation7 + $0xb4] sm:$0xf]
    %v4025 = vld [vmem:[#allocation7 + $0xb8] sm:$0xf]
    %v4026 = vld [vmem:[#allocation7 + $0xbc] sm:$0xf]
    %v4027 = vld [vmem:[#allocation7 + $0xc0] sm:$0xf]
    %v4028 = vld [vmem:[#allocation7 + $0xc4] sm:$0xf]
    %v4029 = vld [vmem:[#allocation7 + $0xc8] sm:$0xf]
    %v4030 = vld [vmem:[#allocation7 + $0xcc] sm:$0xf]
    %v4031 = vld [vmem:[#allocation7 + $0xd0] sm:$0xf]
    %v4032 = vld [vmem:[#allocation7 + $0xd4] sm:$0xf]
    %v4033 = vld [vmem:[#allocation7 + $0xd8] sm:$0xf]
    %v4034 = vld [vmem:[#allocation7 + $0xdc] sm:$0xf]
    %v4035 = vld [vmem:[#allocation7 + $0xe0] sm:$0xf]
    %v4036 = vld [vmem:[#allocation7 + $0xe4] sm:$0xf]
    %v4037 = vld [vmem:[#allocation7 + $0xe8] sm:$0xf]
    %v4038 = vld [vmem:[#allocation7 + $0xec] sm:$0xf]
    %v4039 = vld [vmem:[#allocation7 + $0xf0] sm:$0xf]
    %v4040 = vld [vmem:[#allocation7 + $0xf4] sm:$0xf]
    %v4041 = vld [vmem:[#allocation7 + $0xf8] sm:$0xf]
    %v4042 = vld [vmem:[#allocation7 + $0xfc] sm:$0xf]
    %v4043 = vld [vmem:[#allocation7 + $0x100] sm:$0xf]
    %v4044 = vld [vmem:[#allocation7 + $0x104] sm:$0xf]
    %v4045 = vld [vmem:[#allocation7 + $0x108] sm:$0xf]
    %v4046 = vld [vmem:[#allocation7 + $0x10c] sm:$0xf]
    %v4047 = vld [vmem:[#allocation7 + $0x110] sm:$0xf]
    %v4048 = vld [vmem:[#allocation7 + $0x114] sm:$0xf]
    %v4049 = vld [vmem:[#allocation7 + $0x118] sm:$0xf]
    %v4050 = vld [vmem:[#allocation7 + $0x11c] sm:$0xf]
    %v4051 = vld [vmem:[#allocation7 + $0x120] sm:$0xf]
    %v4052 = vld [vmem:[#allocation7 + $0x124] sm:$0xf]
    %v4053 = vld [vmem:[#allocation7 + $0x128] sm:$0xf]
    %v4054 = vld [vmem:[#allocation7 + $0x12c] sm:$0xf]
    %v4055 = vld [vmem:[#allocation7 + $0x130] sm:$0xf]
    %v4056 = vld [vmem:[#allocation7 + $0x134] sm:$0xf]
    %v4057 = vld [vmem:[#allocation7 + $0x138] sm:$0xf]
    %v4058 = vld [vmem:[#allocation7 + $0x13c] sm:$0xf]
    %v4059 = vld [vmem:[#allocation7 + $0x140] sm:$0xf]
    %v4060 = vld [vmem:[#allocation7 + $0x144] sm:$0xf]
    %v4061 = vld [vmem:[#allocation7 + $0x148] sm:$0xf]
    %v4062 = vld [vmem:[#allocation7 + $0x14c] sm:$0xf]
    %v4063 = vld [vmem:[#allocation7 + $0x150] sm:$0xf]
    %v4064 = vld [vmem:[#allocation7 + $0x154] sm:$0xf]
    %v4065 = vld [vmem:[#allocation7 + $0x158] sm:$0xf]
    %v4066 = vld [vmem:[#allocation7 + $0x15c] sm:$0xf]
    %v4067 = vld [vmem:[#allocation7 + $0x160] sm:$0xf]
    %v4068 = vld [vmem:[#allocation7 + $0x164] sm:$0xf]
    %v4069 = vld [vmem:[#allocation7 + $0x168] sm:$0xf]
    %v4070 = vld [vmem:[#allocation7 + $0x16c] sm:$0xf]
    %v4071 = vld [vmem:[#allocation7 + $0x170] sm:$0xf]
    %v4072 = vld [vmem:[#allocation7 + $0x174] sm:$0xf]
    %v4073 = vld [vmem:[#allocation7 + $0x178] sm:$0xf]
    %v4074 = vld [vmem:[#allocation7 + $0x17c] sm:$0xf]
    %v4075 = vld [vmem:[#allocation7 + $0x180] sm:$0xf]
    %v4076 = vld [vmem:[#allocation7 + $0x184] sm:$0xf]
    %v4077 = vld [vmem:[#allocation7 + $0x188] sm:$0xf]
    %v4078 = vld [vmem:[#allocation7 + $0x18c] sm:$0xf]
    %v4079 = vld [vmem:[#allocation7 + $0x190] sm:$0xf]
    %v4080 = vld [vmem:[#allocation7 + $0x194] sm:$0xf]
    %v4081 = vld [vmem:[#allocation7 + $0x198] sm:$0xf]
    %v4082 = vld [vmem:[#allocation7 + $0x19c] sm:$0xf]
    %v4083 = vld [vmem:[#allocation7 + $0x1a0] sm:$0xf]
    %v4084 = vld [vmem:[#allocation7 + $0x1a4] sm:$0xf]
    %v4085 = vld [vmem:[#allocation7 + $0x1a8] sm:$0xf]
    %v4086 = vld [vmem:[#allocation7 + $0x1ac] sm:$0xf]
    %v4087 = vld [vmem:[#allocation7 + $0x1b0] sm:$0xf]
    %v4088 = vld [vmem:[#allocation7 + $0x1b4] sm:$0xf]
    %v4089 = vld [vmem:[#allocation7 + $0x1b8] sm:$0xf]
    %v4090 = vld [vmem:[#allocation7 + $0x1bc] sm:$0xf]
    %v4091 = vld [vmem:[#allocation7 + $0x1c0] sm:$0xf]
    %v4092 = vld [vmem:[#allocation7 + $0x1c4] sm:$0xf]
    %v4093 = vld [vmem:[#allocation7 + $0x1c8] sm:$0xf]
    %v4094 = vld [vmem:[#allocation7 + $0x1cc] sm:$0xf]
    %v4095 = vld [vmem:[#allocation7 + $0x1d0] sm:$0xf]
    %v4096 = vld [vmem:[#allocation7 + $0x1d4] sm:$0xf]
    %v4097 = vld [vmem:[#allocation7 + $0x1d8] sm:$0xf]
    %v4098 = vld [vmem:[#allocation7 + $0x1dc] sm:$0xf]
    %v4099 = vld [vmem:[#allocation7 + $0x1e0] sm:$0xf]
    %v4100 = vld [vmem:[#allocation7 + $0x1e4] sm:$0xf]
    %v4101 = vld [vmem:[#allocation7 + $0x1e8] sm:$0xf]
    %v4102 = vld [vmem:[#allocation7 + $0x1ec] sm:$0xf]
    %v4103 = vld [vmem:[#allocation7 + $0x1f0] sm:$0xf]
    %v4104 = vld [vmem:[#allocation7 + $0x1f4] sm:$0xf]
    %v4105 = vld [vmem:[#allocation7 + $0x1f8] sm:$0xf]
    %v4106 = vld [vmem:[#allocation7 + $0x1fc] sm:$0xf]
    %v4235 = vunpack.c.l.b16 %v3979
    %v4236 = vunpack.c.l.b16 %v3980
    %v4237 = vunpack.c.l.b16 %v3981
    %v4238 = vunpack.c.l.b16 %v3982
    %v4239 = vunpack.c.l.b16 %v3983
    %v4240 = vunpack.c.l.b16 %v3984
    %v4241 = vunpack.c.l.b16 %v3985
    %v4242 = vunpack.c.l.b16 %v3986
    %v4243 = vunpack.c.l.b16 %v3987
    %v4244 = vunpack.c.l.b16 %v3988
    %v4245 = vunpack.c.l.b16 %v3989
    %v4246 = vunpack.c.l.b16 %v3990
    %v4247 = vunpack.c.l.b16 %v3991
    %v4248 = vunpack.c.l.b16 %v3992
    %v4249 = vunpack.c.l.b16 %v3993
    %v4250 = vunpack.c.l.b16 %v3994
    %v4251 = vunpack.c.l.b16 %v3995
    %v4252 = vunpack.c.l.b16 %v3996
    %v4253 = vunpack.c.l.b16 %v3997
    %v4254 = vunpack.c.l.b16 %v3998
    %v4255 = vunpack.c.l.b16 %v3999
    %v4256 = vunpack.c.l.b16 %v4000
    %v4257 = vunpack.c.l.b16 %v4001
    %v4258 = vunpack.c.l.b16 %v4002
    %v4259 = vunpack.c.l.b16 %v4003
    %v4260 = vunpack.c.l.b16 %v4004
    %v4261 = vunpack.c.l.b16 %v4005
    %v4262 = vunpack.c.l.b16 %v4006
    %v4263 = vunpack.c.l.b16 %v4007
    %v4264 = vunpack.c.l.b16 %v4008
    %v4265 = vunpack.c.l.b16 %v4009
    %v4266 = vunpack.c.l.b16 %v4010
    %v4267 = vunpack.c.l.b16 %v4011
    %v4268 = vunpack.c.l.b16 %v4012
    %v4269 = vunpack.c.l.b16 %v4013
    %v4270 = vunpack.c.l.b16 %v4014
    %v4271 = vunpack.c.l.b16 %v4015
    %v4272 = vunpack.c.l.b16 %v4016
    %v4273 = vunpack.c.l.b16 %v4017
    %v4274 = vunpack.c.l.b16 %v4018
    %v4275 = vunpack.c.l.b16 %v4019
    %v4276 = vunpack.c.l.b16 %v4020
    %v4277 = vunpack.c.l.b16 %v4021
    %v4278 = vunpack.c.l.b16 %v4022
    %v4279 = vunpack.c.l.b16 %v4023
    %v4280 = vunpack.c.l.b16 %v4024
    %v4281 = vunpack.c.l.b16 %v4025
    %v4282 = vunpack.c.l.b16 %v4026
    %v4283 = vunpack.c.l.b16 %v4027
    %v4284 = vunpack.c.l.b16 %v4028
    %v4285 = vunpack.c.l.b16 %v4029
    %v4286 = vunpack.c.l.b16 %v4030
    %v4287 = vunpack.c.l.b16 %v4031
    %v4288 = vunpack.c.l.b16 %v4032
    %v4289 = vunpack.c.l.b16 %v4033
    %v4290 = vunpack.c.l.b16 %v4034
    %v4291 = vunpack.c.l.b16 %v4035
    %v4292 = vunpack.c.l.b16 %v4036
    %v4293 = vunpack.c.l.b16 %v4037
    %v4294 = vunpack.c.l.b16 %v4038
    %v4295 = vunpack.c.l.b16 %v4039
    %v4296 = vunpack.c.l.b16 %v4040
    %v4297 = vunpack.c.l.b16 %v4041
    %v4298 = vunpack.c.l.b16 %v4042
    %v4299 = vunpack.c.l.b16 %v4043
    %v4300 = vunpack.c.l.b16 %v4044
    %v4301 = vunpack.c.l.b16 %v4045
    %v4302 = vunpack.c.l.b16 %v4046
    %v4303 = vunpack.c.l.b16 %v4047
    %v4304 = vunpack.c.l.b16 %v4048
    %v4305 = vunpack.c.l.b16 %v4049
    %v4306 = vunpack.c.l.b16 %v4050
    %v4307 = vunpack.c.l.b16 %v4051
    %v4308 = vunpack.c.l.b16 %v4052
    %v4309 = vunpack.c.l.b16 %v4053
    %v4310 = vunpack.c.l.b16 %v4054
    %v4311 = vunpack.c.l.b16 %v4055
    %v4312 = vunpack.c.l.b16 %v4056
    %v4313 = vunpack.c.l.b16 %v4057
    %v4314 = vunpack.c.l.b16 %v4058
    %v4315 = vunpack.c.l.b16 %v4059
    %v4316 = vunpack.c.l.b16 %v4060
    %v4317 = vunpack.c.l.b16 %v4061
    %v4318 = vunpack.c.l.b16 %v4062
    %v4319 = vunpack.c.l.b16 %v4063
    %v4320 = vunpack.c.l.b16 %v4064
    %v4321 = vunpack.c.l.b16 %v4065
    %v4322 = vunpack.c.l.b16 %v4066
    %v4323 = vunpack.c.l.b16 %v4067
    %v4324 = vunpack.c.l.b16 %v4068
    %v4325 = vunpack.c.l.b16 %v4069
    %v4326 = vunpack.c.l.b16 %v4070
    %v4327 = vunpack.c.l.b16 %v4071
    %v4328 = vunpack.c.l.b16 %v4072
    %v4329 = vunpack.c.l.b16 %v4073
    %v4330 = vunpack.c.l.b16 %v4074
    %v4331 = vunpack.c.l.b16 %v4075
    %v4332 = vunpack.c.l.b16 %v4076
    %v4333 = vunpack.c.l.b16 %v4077
    %v4334 = vunpack.c.l.b16 %v4078
    %v4335 = vunpack.c.l.b16 %v4079
    %v4336 = vunpack.c.l.b16 %v4080
    %v4337 = vunpack.c.l.b16 %v4081
    %v4338 = vunpack.c.l.b16 %v4082
    %v4339 = vunpack.c.l.b16 %v4083
    %v4340 = vunpack.c.l.b16 %v4084
    %v4341 = vunpack.c.l.b16 %v4085
    %v4342 = vunpack.c.l.b16 %v4086
    %v4343 = vunpack.c.l.b16 %v4087
    %v4344 = vunpack.c.l.b16 %v4088
    %v4345 = vunpack.c.l.b16 %v4089
    %v4346 = vunpack.c.l.b16 %v4090
    %v4347 = vunpack.c.l.b16 %v4091
    %v4348 = vunpack.c.l.b16 %v4092
    %v4349 = vunpack.c.l.b16 %v4093
    %v4350 = vunpack.c.l.b16 %v4094
    %v4351 = vunpack.c.l.b16 %v4095
    %v4352 = vunpack.c.l.b16 %v4096
    %v4353 = vunpack.c.l.b16 %v4097
    %v4354 = vunpack.c.l.b16 %v4098
    %v4355 = vunpack.c.l.b16 %v4099
    %v4356 = vunpack.c.l.b16 %v4100
    %v4357 = vunpack.c.l.b16 %v4101
    %v4358 = vunpack.c.l.b16 %v4102
    %v4359 = vunpack.c.l.b16 %v4103
    %v4360 = vunpack.c.l.b16 %v4104
    %v4361 = vunpack.c.l.b16 %v4105
    %v4362 = vunpack.c.l.b16 %v4106
    %v4363 = vpack.c.b16 %v4236, %v4235
    %v4364 = vpack.c.b16 %v4238, %v4237
    %v4365 = vpack.c.b16 %v4240, %v4239
    %v4366 = vpack.c.b16 %v4242, %v4241
    %v4367 = vpack.c.b16 %v4244, %v4243
    %v4368 = vpack.c.b16 %v4246, %v4245
    %v4369 = vpack.c.b16 %v4248, %v4247
    %v4370 = vpack.c.b16 %v4250, %v4249
    %v4371 = vpack.c.b16 %v4252, %v4251
    %v4372 = vpack.c.b16 %v4254, %v4253
    %v4373 = vpack.c.b16 %v4256, %v4255
    %v4374 = vpack.c.b16 %v4258, %v4257
    %v4375 = vpack.c.b16 %v4260, %v4259
    %v4376 = vpack.c.b16 %v4262, %v4261
    %v4377 = vpack.c.b16 %v4264, %v4263
    %v4378 = vpack.c.b16 %v4266, %v4265
    %v4379 = vpack.c.b16 %v4268, %v4267
    %v4380 = vpack.c.b16 %v4270, %v4269
    %v4381 = vpack.c.b16 %v4272, %v4271
    %v4382 = vpack.c.b16 %v4274, %v4273
    %v4383 = vpack.c.b16 %v4276, %v4275
    %v4384 = vpack.c.b16 %v4278, %v4277
    %v4385 = vpack.c.b16 %v4280, %v4279
    %v4386 = vpack.c.b16 %v4282, %v4281
    %v4387 = vpack.c.b16 %v4284, %v4283
    %v4388 = vpack.c.b16 %v4286, %v4285
    %v4389 = vpack.c.b16 %v4288, %v4287
    %v4390 = vpack.c.b16 %v4290, %v4289
    %v4391 = vpack.c.b16 %v4292, %v4291
    %v4392 = vpack.c.b16 %v4294, %v4293
    %v4393 = vpack.c.b16 %v4296, %v4295
    %v4394 = vpack.c.b16 %v4298, %v4297
    %v4395 = vpack.c.b16 %v4300, %v4299
    %v4396 = vpack.c.b16 %v4302, %v4301
    %v4397 = vpack.c.b16 %v4304, %v4303
    %v4398 = vpack.c.b16 %v4306, %v4305
    %v4399 = vpack.c.b16 %v4308, %v4307
    %v4400 = vpack.c.b16 %v4310, %v4309
    %v4401 = vpack.c.b16 %v4312, %v4311
    %v4402 = vpack.c.b16 %v4314, %v4313
    %v4403 = vpack.c.b16 %v4316, %v4315
    %v4404 = vpack.c.b16 %v4318, %v4317
    %v4405 = vpack.c.b16 %v4320, %v4319
    %v4406 = vpack.c.b16 %v4322, %v4321
    %v4407 = vpack.c.b16 %v4324, %v4323
    %v4408 = vpack.c.b16 %v4326, %v4325
    %v4409 = vpack.c.b16 %v4328, %v4327
    %v4410 = vpack.c.b16 %v4330, %v4329
    %v4411 = vpack.c.b16 %v4332, %v4331
    %v4412 = vpack.c.b16 %v4334, %v4333
    %v4413 = vpack.c.b16 %v4336, %v4335
    %v4414 = vpack.c.b16 %v4338, %v4337
    %v4415 = vpack.c.b16 %v4340, %v4339
    %v4416 = vpack.c.b16 %v4342, %v4341
    %v4417 = vpack.c.b16 %v4344, %v4343
    %v4418 = vpack.c.b16 %v4346, %v4345
    %v4419 = vpack.c.b16 %v4348, %v4347
    %v4420 = vpack.c.b16 %v4350, %v4349
    %v4421 = vpack.c.b16 %v4352, %v4351
    %v4422 = vpack.c.b16 %v4354, %v4353
    %v4423 = vpack.c.b16 %v4356, %v4355
    %v4424 = vpack.c.b16 %v4358, %v4357
    %v4425 = vpack.c.b16 %v4360, %v4359
    %v4426 = vpack.c.b16 %v4362, %v4361
    %4491 = vmatprep.subr.bf16.mxu0 0
    %4492 = vmatpush1.bf16.msra.mxu0 %v4370
    %4493 = vmatprep.subr.bf16.mxu0 0
    %4494 = vmatpush1.bf16.msra.mxu0 %v4369
    %4495 = vmatprep.subr.bf16.mxu0 0
    %4496 = vmatpush1.bf16.msra.mxu0 %v4368
    %4497 = vmatprep.subr.bf16.mxu0 0
    %4498 = vmatpush1.bf16.msra.mxu0 %v4367
    %4499 = vmatprep.subr.bf16.mxu0 0
    %4500 = vmatpush1.bf16.msra.mxu0 %v4366
    %4501 = vmatprep.subr.bf16.mxu0 0
    %4502 = vmatpush1.bf16.msra.mxu0 %v4365
    %4503 = vmatprep.subr.bf16.mxu0 0
    %4504 = vmatpush1.bf16.msra.mxu0 %v4364
    %4505 = vmatprep.subr.bf16.mxu0 0
    %4506 = vmatpush1.bf16.msra.mxu0 %v4363
    %4507 = vmatprep.subr.bf16.mxu0 0
    %4508 = vmatpush2.bf16.msra.mxu0 %v4378
    %4509 = vmatprep.subr.bf16.mxu0 0
    %4510 = vmatpush2.bf16.msra.mxu0 %v4377
    %4511 = vmatprep.subr.bf16.mxu0 0
    %4512 = vmatpush2.bf16.msra.mxu0 %v4376
    %4513 = vmatprep.subr.bf16.mxu0 0
    %4514 = vmatpush2.bf16.msra.mxu0 %v4375
    %4515 = vmatprep.subr.bf16.mxu0 0
    %4516 = vmatpush2.bf16.msra.mxu0 %v4374
    %4517 = vmatprep.subr.bf16.mxu0 0
    %4518 = vmatpush2.bf16.msra.mxu0 %v4373
    %4519 = vmatprep.subr.bf16.mxu0 0
    %4520 = vmatpush2.bf16.msra.mxu0 %v4372
    %4521 = vmatprep.subr.bf16.mxu0 0
    %4522 = vmatpush2.bf16.msra.mxu0 %v4371
    %4523 = vmatprep.mubr.bf16.mxu0 %v3972
    %4524 = vmatmul.mubr.bf16.gmra.mxu0 %v3971
    %v4525 = vpop.f32.mrf.mxu0
    %v4526 = vadd.f32 0.0, %v4525
    %v4527 = vpop.f32.mrf.mxu0
    %v4528 = vpop.f32.mrf.mxu0
    %v4529 = vadd.f32 0.0, %v4528
    %v4530 = vpop.f32.mrf.mxu0
    %4531 = vdwg.mxu0
    %4532 = vmatprep.subr.bf16.mxu0 0
    %4533 = vmatpush1.bf16.msra.mxu0 %v4386
    %4534 = vmatprep.subr.bf16.mxu0 0
    %4535 = vmatpush1.bf16.msra.mxu0 %v4385
    %4536 = vmatprep.subr.bf16.mxu0 0
    %4537 = vmatpush1.bf16.msra.mxu0 %v4384
    %4538 = vmatprep.subr.bf16.mxu0 0
    %4539 = vmatpush1.bf16.msra.mxu0 %v4383
    %4540 = vmatprep.subr.bf16.mxu0 0
    %4541 = vmatpush1.bf16.msra.mxu0 %v4382
    %4542 = vmatprep.subr.bf16.mxu0 0
    %4543 = vmatpush1.bf16.msra.mxu0 %v4381
    %4544 = vmatprep.subr.bf16.mxu0 0
    %4545 = vmatpush1.bf16.msra.mxu0 %v4380
    %4546 = vmatprep.subr.bf16.mxu0 0
    %4547 = vmatpush1.bf16.msra.mxu0 %v4379
    %4548 = vmatprep.subr.bf16.mxu0 0
    %4549 = vmatpush2.bf16.msra.mxu0 %v4394
    %4550 = vmatprep.subr.bf16.mxu0 0
    %4551 = vmatpush2.bf16.msra.mxu0 %v4393
    %4552 = vmatprep.subr.bf16.mxu0 0
    %4553 = vmatpush2.bf16.msra.mxu0 %v4392
    %4554 = vmatprep.subr.bf16.mxu0 0
    %4555 = vmatpush2.bf16.msra.mxu0 %v4391
    %4556 = vmatprep.subr.bf16.mxu0 0
    %4557 = vmatpush2.bf16.msra.mxu0 %v4390
    %4558 = vmatprep.subr.bf16.mxu0 0
    %4559 = vmatpush2.bf16.msra.mxu0 %v4389
    %4560 = vmatprep.subr.bf16.mxu0 0
    %4561 = vmatpush2.bf16.msra.mxu0 %v4388
    %4562 = vmatprep.subr.bf16.mxu0 0
    %4563 = vmatpush2.bf16.msra.mxu0 %v4387
    %4564 = vmatprep.mubr.bf16.mxu0 %v3974
    %4565 = vmatmul.mubr.bf16.gmra.mxu0 %v3973
    %v4566 = vpop.f32.mrf.mxu0
    %v4567 = vadd.f32 %v4526, %v4566
    %v4568 = vpop.f32.mrf.mxu0
    %v4569 = vpop.f32.mrf.mxu0
    %v4570 = vadd.f32 %v4529, %v4569
    %v4571 = vpop.f32.mrf.mxu0
    %4572 = vdwg.mxu0
    %4573 = vmatprep.subr.bf16.mxu0 0
    %4574 = vmatpush1.bf16.msra.mxu0 %v4402
    %4575 = vmatprep.subr.bf16.mxu0 0
    %4576 = vmatpush1.bf16.msra.mxu0 %v4401
    %4577 = vmatprep.subr.bf16.mxu0 0
    %4578 = vmatpush1.bf16.msra.mxu0 %v4400
    %4579 = vmatprep.subr.bf16.mxu0 0
    %4580 = vmatpush1.bf16.msra.mxu0 %v4399
    %4581 = vmatprep.subr.bf16.mxu0 0
    %4582 = vmatpush1.bf16.msra.mxu0 %v4398
    %4583 = vmatprep.subr.bf16.mxu0 0
    %4584 = vmatpush1.bf16.msra.mxu0 %v4397
    %4585 = vmatprep.subr.bf16.mxu0 0
    %4586 = vmatpush1.bf16.msra.mxu0 %v4396
    %4587 = vmatprep.subr.bf16.mxu0 0
    %4588 = vmatpush1.bf16.msra.mxu0 %v4395
    %4589 = vmatprep.subr.bf16.mxu0 0
    %4590 = vmatpush2.bf16.msra.mxu0 %v4410
    %4591 = vmatprep.subr.bf16.mxu0 0
    %4592 = vmatpush2.bf16.msra.mxu0 %v4409
    %4593 = vmatprep.subr.bf16.mxu0 0
    %4594 = vmatpush2.bf16.msra.mxu0 %v4408
    %4595 = vmatprep.subr.bf16.mxu0 0
    %4596 = vmatpush2.bf16.msra.mxu0 %v4407
    %4597 = vmatprep.subr.bf16.mxu0 0
    %4598 = vmatpush2.bf16.msra.mxu0 %v4406
    %4599 = vmatprep.subr.bf16.mxu0 0
    %4600 = vmatpush2.bf16.msra.mxu0 %v4405
    %4601 = vmatprep.subr.bf16.mxu0 0
    %4602 = vmatpush2.bf16.msra.mxu0 %v4404
    %4603 = vmatprep.subr.bf16.mxu0 0
    %4604 = vmatpush2.bf16.msra.mxu0 %v4403
    %4605 = vmatprep.mubr.bf16.mxu0 %v3976
    %4606 = vmatmul.mubr.bf16.gmra.mxu0 %v3975
    %v4607 = vpop.f32.mrf.mxu0
    %v4608 = vadd.f32 %v4567, %v4607
    %v4609 = vpop.f32.mrf.mxu0
    %v4610 = vpop.f32.mrf.mxu0
    %v4611 = vadd.f32 %v4570, %v4610
    %v4612 = vpop.f32.mrf.mxu0
    %4613 = vdwg.mxu0
    %4614 = vmatprep.subr.bf16.mxu0 0
    %4615 = vmatpush1.bf16.msra.mxu0 %v4418
    %4616 = vmatprep.subr.bf16.mxu0 0
    %4617 = vmatpush1.bf16.msra.mxu0 %v4417
    %4618 = vmatprep.subr.bf16.mxu0 0
    %4619 = vmatpush1.bf16.msra.mxu0 %v4416
    %4620 = vmatprep.subr.bf16.mxu0 0
    %4621 = vmatpush1.bf16.msra.mxu0 %v4415
    %4622 = vmatprep.subr.bf16.mxu0 0
    %4623 = vmatpush1.bf16.msra.mxu0 %v4414
    %4624 = vmatprep.subr.bf16.mxu0 0
    %4625 = vmatpush1.bf16.msra.mxu0 %v4413
    %4626 = vmatprep.subr.bf16.mxu0 0
    %4627 = vmatpush1.bf16.msra.mxu0 %v4412
    %4628 = vmatprep.subr.bf16.mxu0 0
    %4629 = vmatpush1.bf16.msra.mxu0 %v4411
    %4630 = vmatprep.subr.bf16.mxu0 0
    %4631 = vmatpush2.bf16.msra.mxu0 %v4426
    %4632 = vmatprep.subr.bf16.mxu0 0
    %4633 = vmatpush2.bf16.msra.mxu0 %v4425
    %4634 = vmatprep.subr.bf16.mxu0 0
    %4635 = vmatpush2.bf16.msra.mxu0 %v4424
    %4636 = vmatprep.subr.bf16.mxu0 0
    %4637 = vmatpush2.bf16.msra.mxu0 %v4423
    %4638 = vmatprep.subr.bf16.mxu0 0
    %4639 = vmatpush2.bf16.msra.mxu0 %v4422
    %4640 = vmatprep.subr.bf16.mxu0 0
    %4641 = vmatpush2.bf16.msra.mxu0 %v4421
    %4642 = vmatprep.subr.bf16.mxu0 0
    %4643 = vmatpush2.bf16.msra.mxu0 %v4420
    %4644 = vmatprep.subr.bf16.mxu0 0
    %4645 = vmatpush2.bf16.msra.mxu0 %v4419
    %4646 = vmatprep.mubr.bf16.mxu0 %v3978
    %4647 = vmatmul.mubr.bf16.gmra.mxu0 %v3977
    %v4648 = vpop.f32.mrf.mxu0
    %v4649 = vadd.f32 %v4608, %v4648
    %v4650 = vpop.f32.mrf.mxu0
    %v4651 = vpop.f32.mrf.mxu0
    %v4652 = vadd.f32 %v4611, %v4651
    %v4653 = vpop.f32.mrf.mxu0
    %4654 = vdwg.mxu0
    %v4655 = vld [vmem:[#allocation8] sm:$0x1]
    %v4657 = vlaneseq
    %v4658 = vshrl.u32 %v4657, 7
    %v4659 = vsub.s32 0, %v4658
    %v4660 = vrot.slane %v4655, %v4659
    %v4662 = vadd.f32 %v4649, %v4660
    %v4663 = vadd.f32 %v4652, %v4660
    %vm4664 = vcmask 1043968
    %v4665 = vsel %vm4664, %v4663, 0.0
    %v4666 = vrot.slane %v4665, 4
    %v4667 = vadd.f32 %v4665, %v4666
    %v4668 = vrot.slane %v4667, 2
    %v4669 = vadd.f32 %v4667, %v4668
    %v4670 = vrot.slane %v4669, 1
    %v4671 = vadd.f32 %v4669, %v4670
    %v4672 = vrcp.pop 4.0
    %v4673 = vmul.f32 %v4671, %v4672
    %4675 = vrot.lane.b32.xlu0 %v4673, 64
    %v4676 = vpop.permute.xlu0 %4675
    %vm4677 = vcmask 523264
    %v4678 = vsel %vm4677, %v4676, 0
    %v4681 = vsel %vm4677, %v4662, 0
    %4683 = vmatprep.subr.mxu0 0.0
    %4684 = vmatpush1.xpose.msra.mxu0 0.0
    %4685 = vmatprep.subr.mxu0 0.0
    %4686 = vmatpush1.xpose.msra.mxu0 0.0
    %4687 = vmatprep.subr.mxu0 0.0
    %4688 = vmatpush1.xpose.msra.mxu0 0.0
    %4689 = vmatprep.subr.mxu0 0.0
    %4690 = vmatpush1.xpose.msra.mxu0 0.0
    %4691 = vmatprep.subr.mxu0 0.0
    %4692 = vmatpush1.xpose.msra.mxu0 0.0
    %4693 = vmatprep.subr.mxu0 0.0
    %4694 = vmatpush1.xpose.msra.mxu0 0.0
    %4695 = vmatprep.subr.mxu0 0.0
    %4696 = vmatpush1.xpose.msra.mxu0 0.0
    %4697 = vmatprep.subr.mxu0 0.0
    %4698 = vmatpush1.xpose.msra.mxu0 0.0
    %4699 = vmatprep.subr.mxu0 0.0
    %4700 = vmatpush1.xpose.msra.mxu0 0.0
    %4701 = vmatprep.subr.mxu0 0.0
    %4702 = vmatpush1.xpose.msra.mxu0 0.0
    %4703 = vmatprep.subr.mxu0 0.0
    %4704 = vmatpush1.xpose.msra.mxu0 0.0
    %4705 = vmatprep.subr.mxu0 0.0
    %4706 = vmatpush1.xpose.msra.mxu0 0.0
    %4707 = vmatprep.subr.mxu0 0.0
    %4708 = vmatpush1.xpose.msra.mxu0 0.0
    %4709 = vmatprep.subr.mxu0 0.0
    %4710 = vmatpush1.xpose.msra.mxu0 0.0
    %4711 = vmatprep.subr.mxu0 0.0
    %4712 = vmatpush1.xpose.msra.mxu0 0.0
    %4713 = vmatprep.subr.mxu0 0.0
    %4714 = vmatpush1.xpose.msra.mxu0 %v4681
    %4715 = vmatprep.subr.mxu0 0.0
    %4716 = vmatpush2.xpose.msra.mxu0 0.0
    %4717 = vmatprep.subr.mxu0 0.0
    %4718 = vmatpush2.xpose.msra.mxu0 0.0
    %4719 = vmatprep.subr.mxu0 0.0
    %4720 = vmatpush2.xpose.msra.mxu0 0.0
    %4721 = vmatprep.subr.mxu0 0.0
    %4722 = vmatpush2.xpose.msra.mxu0 0.0
    %4723 = vmatprep.subr.mxu0 0.0
    %4724 = vmatpush2.xpose.msra.mxu0 0.0
    %4725 = vmatprep.subr.mxu0 0.0
    %4726 = vmatpush2.xpose.msra.mxu0 0.0
    %4727 = vmatprep.subr.mxu0 0.0
    %4728 = vmatpush2.xpose.msra.mxu0 0.0
    %4729 = vmatprep.subr.mxu0 0.0
    %4730 = vmatpush2.xpose.msra.mxu0 0.0
    %4731 = vmatprep.subr.mxu0 0.0
    %4732 = vmatpush2.xpose.msra.mxu0 0.0
    %4733 = vmatprep.subr.mxu0 0.0
    %4734 = vmatpush2.xpose.msra.mxu0 0.0
    %4735 = vmatprep.subr.mxu0 0.0
    %4736 = vmatpush2.xpose.msra.mxu0 0.0
    %4737 = vmatprep.subr.mxu0 0.0
    %4738 = vmatpush2.xpose.msra.mxu0 0.0
    %4739 = vmatprep.subr.mxu0 0.0
    %4740 = vmatpush2.xpose.msra.mxu0 0.0
    %4741 = vmatprep.subr.mxu0 0.0
    %4742 = vmatpush2.xpose.msra.mxu0 0.0
    %4743 = vmatprep.subr.mxu0 0.0
    %4744 = vmatpush2.xpose.msra.mxu0 0.0
    %4745 = vmatprep.subr.mxu0 0.0
    %4746 = vmatpush2.xpose.msra.mxu0 0.0
    %4747 = vmatprep.mubr.f32.mxu0 0.0
    %4748 = vmatmul.mubr.f32.gmra.mxu0 %v4678
    %v4749 = vpop.f32.mrf.mxu0
    %v4750 = vadd.f32 0.0, %v4749
    %v4751 = vpop.f32.mrf.mxu0
    %4752 = vdwg.mxu0
    %vm4753 = vcmask 57344
    %v4754 = vsel %vm4753, %v4750, -inf
    %4755 = vmax.xlane.f32.xlu0 %v4754
    %v4756 = vpop.xlane.xlu0 %4755
    %v4757 = vsub.f32 %v4750, %v4756
    %v4758 = vmul.f32 %v4757, 1.442695
    %v4759 = vpow.pop %v4758
    %v4760 = vsel %vm4753, %v4759, 0.0
    %4761 = vadd.xlane.f32.xlu0 %v4760
    %v4762 = vpop.xlane.xlu0 %4761
    %v4763 = vrcp.pop %v4762
    %v4764 = vmul.f32 %v4759, %v4763
    %v4765 = vpack.c.bf16 %v4764, %v4764
    %v4766 = vld [vmem:[%s5] sm:$0xff]
    %v4767 = vld [vmem:[%s5 + $0x8] sm:$0xff]
    %v4768 = vld [vmem:[%s5 + $0x10] sm:$0xff]
    %v4769 = vld [vmem:[%s5 + $0x18] sm:$0xff]
    %v4774 = vunpack.c.l.b16 %v4766
    %v4775 = vunpack.c.h.b16 %v4766
    %v4776 = vunpack.c.l.b16 %v4767
    %v4777 = vunpack.c.h.b16 %v4767
    %v4778 = vunpack.c.l.b16 %v4768
    %v4779 = vunpack.c.h.b16 %v4768
    %v4780 = vunpack.c.l.b16 %v4769
    %v4781 = vunpack.c.h.b16 %v4769
    %v4782 = vpack.c.b16 %v4774, %v4774
    %v4783 = vpack.c.b16 %v4775, %v4775
    %v4784 = vpack.c.b16 %v4776, %v4776
    %v4785 = vpack.c.b16 %v4777, %v4777
    %v4786 = vpack.c.b16 %v4778, %v4778
    %v4787 = vpack.c.b16 %v4779, %v4779
    %v4788 = vpack.c.b16 %v4780, %v4780
    %v4789 = vpack.c.b16 %v4781, %v4781
    %vm4790 = vcmask 64512
    %v4792 = vsel %vm4790, %v4765, 0
    %vm4794 = vcmask 1043456
    %v4796 = vsel %vm4794, %v4782, 0
    %v4799 = vsel %vm4794, %v4783, 0
    %v4802 = vsel %vm4794, %v4784, 0
    %v4805 = vsel %vm4794, %v4785, 0
    %v4808 = vsel %vm4794, %v4786, 0
    %v4811 = vsel %vm4794, %v4787, 0
    %v4814 = vsel %vm4794, %v4788, 0
    %v4817 = vsel %vm4794, %v4789, 0
    %4819 = vmatprep.subr.bf16.mxu0 0
    %4820 = vmatpush1.bf16.msra.mxu0 0
    %4821 = vmatprep.subr.bf16.mxu0 0
    %4822 = vmatpush1.bf16.msra.mxu0 0
    %4823 = vmatprep.subr.bf16.mxu0 0
    %4824 = vmatpush1.bf16.msra.mxu0 0
    %4825 = vmatprep.subr.bf16.mxu0 0
    %4826 = vmatpush1.bf16.msra.mxu0 0
    %4827 = vmatprep.subr.bf16.mxu0 0
    %4828 = vmatpush1.bf16.msra.mxu0 0
    %4829 = vmatprep.subr.bf16.mxu0 0
    %4830 = vmatpush1.bf16.msra.mxu0 0
    %4831 = vmatprep.subr.bf16.mxu0 0
    %4832 = vmatpush1.bf16.msra.mxu0 0
    %4833 = vmatprep.subr.bf16.mxu0 %v4799
    %4834 = vmatpush1.bf16.msra.mxu0 %v4796
    %4835 = vmatprep.subr.bf16.mxu0 0
    %4836 = vmatpush2.bf16.msra.mxu0 0
    %4837 = vmatprep.subr.bf16.mxu0 0
    %4838 = vmatpush2.bf16.msra.mxu0 0
    %4839 = vmatprep.subr.bf16.mxu0 0
    %4840 = vmatpush2.bf16.msra.mxu0 0
    %4841 = vmatprep.subr.bf16.mxu0 0
    %4842 = vmatpush2.bf16.msra.mxu0 0
    %4843 = vmatprep.subr.bf16.mxu0 0
    %4844 = vmatpush2.bf16.msra.mxu0 0
    %4845 = vmatprep.subr.bf16.mxu0 0
    %4846 = vmatpush2.bf16.msra.mxu0 0
    %4847 = vmatprep.subr.bf16.mxu0 0
    %4848 = vmatpush2.bf16.msra.mxu0 0
    %4849 = vmatprep.subr.bf16.mxu0 0
    %4850 = vmatpush2.bf16.msra.mxu0 0
    %4851 = vmatprep.mubr.bf16.mxu0 0
    %4852 = vmatmul.mubr.bf16.gmra.mxu0 %v4792
    %v4853 = vpop.f32.mrf.mxu0
    %v4854 = vadd.f32 0.0, %v4853
    %v4855 = vpop.f32.mrf.mxu0
    %v4856 = vadd.f32 0.0, %v4855
    %v4857 = vpop.f32.mrf.mxu0
    %v4858 = vpop.f32.mrf.mxu0
    %4859 = vdwg.mxu0
    %4860 = vmatprep.subr.bf16.mxu0 0
    %4861 = vmatpush1.bf16.msra.mxu0 0
    %4862 = vmatprep.subr.bf16.mxu0 0
    %4863 = vmatpush1.bf16.msra.mxu0 0
    %4864 = vmatprep.subr.bf16.mxu0 0
    %4865 = vmatpush1.bf16.msra.mxu0 0
    %4866 = vmatprep.subr.bf16.mxu0 0
    %4867 = vmatpush1.bf16.msra.mxu0 0
    %4868 = vmatprep.subr.bf16.mxu0 0
    %4869 = vmatpush1.bf16.msra.mxu0 0
    %4870 = vmatprep.subr.bf16.mxu0 0
    %4871 = vmatpush1.bf16.msra.mxu0 0
    %4872 = vmatprep.subr.bf16.mxu0 0
    %4873 = vmatpush1.bf16.msra.mxu0 0
    %4874 = vmatprep.subr.bf16.mxu0 %v4805
    %4875 = vmatpush1.bf16.msra.mxu0 %v4802
    %4876 = vmatprep.subr.bf16.mxu0 0
    %4877 = vmatpush2.bf16.msra.mxu0 0
    %4878 = vmatprep.subr.bf16.mxu0 0
    %4879 = vmatpush2.bf16.msra.mxu0 0
    %4880 = vmatprep.subr.bf16.mxu0 0
    %4881 = vmatpush2.bf16.msra.mxu0 0
    %4882 = vmatprep.subr.bf16.mxu0 0
    %4883 = vmatpush2.bf16.msra.mxu0 0
    %4884 = vmatprep.subr.bf16.mxu0 0
    %4885 = vmatpush2.bf16.msra.mxu0 0
    %4886 = vmatprep.subr.bf16.mxu0 0
    %4887 = vmatpush2.bf16.msra.mxu0 0
    %4888 = vmatprep.subr.bf16.mxu0 0
    %4889 = vmatpush2.bf16.msra.mxu0 0
    %4890 = vmatprep.subr.bf16.mxu0 0
    %4891 = vmatpush2.bf16.msra.mxu0 0
    %4892 = vmatprep.mubr.bf16.mxu0 0
    %4893 = vmatmul.mubr.bf16.gmra.mxu0 %v4792
    %v4894 = vpop.f32.mrf.mxu0
    %v4895 = vadd.f32 0.0, %v4894
    %v4896 = vpop.f32.mrf.mxu0
    %v4897 = vadd.f32 0.0, %v4896
    %v4898 = vpop.f32.mrf.mxu0
    %v4899 = vpop.f32.mrf.mxu0
    %4900 = vdwg.mxu0
    %4901 = vmatprep.subr.bf16.mxu0 0
    %4902 = vmatpush1.bf16.msra.mxu0 0
    %4903 = vmatprep.subr.bf16.mxu0 0
    %4904 = vmatpush1.bf16.msra.mxu0 0
    %4905 = vmatprep.subr.bf16.mxu0 0
    %4906 = vmatpush1.bf16.msra.mxu0 0
    %4907 = vmatprep.subr.bf16.mxu0 0
    %4908 = vmatpush1.bf16.msra.mxu0 0
    %4909 = vmatprep.subr.bf16.mxu0 0
    %4910 = vmatpush1.bf16.msra.mxu0 0
    %4911 = vmatprep.subr.bf16.mxu0 0
    %4912 = vmatpush1.bf16.msra.mxu0 0
    %4913 = vmatprep.subr.bf16.mxu0 0
    %4914 = vmatpush1.bf16.msra.mxu0 0
    %4915 = vmatprep.subr.bf16.mxu0 %v4811
    %4916 = vmatpush1.bf16.msra.mxu0 %v4808
    %4917 = vmatprep.subr.bf16.mxu0 0
    %4918 = vmatpush2.bf16.msra.mxu0 0
    %4919 = vmatprep.subr.bf16.mxu0 0
    %4920 = vmatpush2.bf16.msra.mxu0 0
    %4921 = vmatprep.subr.bf16.mxu0 0
    %4922 = vmatpush2.bf16.msra.mxu0 0
    %4923 = vmatprep.subr.bf16.mxu0 0
    %4924 = vmatpush2.bf16.msra.mxu0 0
    %4925 = vmatprep.subr.bf16.mxu0 0
    %4926 = vmatpush2.bf16.msra.mxu0 0
    %4927 = vmatprep.subr.bf16.mxu0 0
    %4928 = vmatpush2.bf16.msra.mxu0 0
    %4929 = vmatprep.subr.bf16.mxu0 0
    %4930 = vmatpush2.bf16.msra.mxu0 0
    %4931 = vmatprep.subr.bf16.mxu0 0
    %4932 = vmatpush2.bf16.msra.mxu0 0
    %4933 = vmatprep.mubr.bf16.mxu0 0
    %4934 = vmatmul.mubr.bf16.gmra.mxu0 %v4792
    %v4935 = vpop.f32.mrf.mxu0
    %v4936 = vadd.f32 0.0, %v4935
    %v4937 = vpop.f32.mrf.mxu0
    %v4938 = vadd.f32 0.0, %v4937
    %v4939 = vpop.f32.mrf.mxu0
    %v4940 = vpop.f32.mrf.mxu0
    %4941 = vdwg.mxu0
    %4942 = vmatprep.subr.bf16.mxu0 0
    %4943 = vmatpush1.bf16.msra.mxu0 0
    %4944 = vmatprep.subr.bf16.mxu0 0
    %4945 = vmatpush1.bf16.msra.mxu0 0
    %4946 = vmatprep.subr.bf16.mxu0 0
    %4947 = vmatpush1.bf16.msra.mxu0 0
    %4948 = vmatprep.subr.bf16.mxu0 0
    %4949 = vmatpush1.bf16.msra.mxu0 0
    %4950 = vmatprep.subr.bf16.mxu0 0
    %4951 = vmatpush1.bf16.msra.mxu0 0
    %4952 = vmatprep.subr.bf16.mxu0 0
    %4953 = vmatpush1.bf16.msra.mxu0 0
    %4954 = vmatprep.subr.bf16.mxu0 0
    %4955 = vmatpush1.bf16.msra.mxu0 0
    %4956 = vmatprep.subr.bf16.mxu0 %v4817
    %4957 = vmatpush1.bf16.msra.mxu0 %v4814
    %4958 = vmatprep.subr.bf16.mxu0 0
    %4959 = vmatpush2.bf16.msra.mxu0 0
    %4960 = vmatprep.subr.bf16.mxu0 0
    %4961 = vmatpush2.bf16.msra.mxu0 0
    %4962 = vmatprep.subr.bf16.mxu0 0
    %4963 = vmatpush2.bf16.msra.mxu0 0
    %4964 = vmatprep.subr.bf16.mxu0 0
    %4965 = vmatpush2.bf16.msra.mxu0 0
    %4966 = vmatprep.subr.bf16.mxu0 0
    %4967 = vmatpush2.bf16.msra.mxu0 0
    %4968 = vmatprep.subr.bf16.mxu0 0
    %4969 = vmatpush2.bf16.msra.mxu0 0
    %4970 = vmatprep.subr.bf16.mxu0 0
    %4971 = vmatpush2.bf16.msra.mxu0 0
    %4972 = vmatprep.subr.bf16.mxu0 0
    %4973 = vmatpush2.bf16.msra.mxu0 0
    %4974 = vmatprep.mubr.bf16.mxu0 0
    %4975 = vmatmul.mubr.bf16.gmra.mxu0 %v4792
    %v4976 = vpop.f32.mrf.mxu0
    %v4977 = vadd.f32 0.0, %v4976
    %v4978 = vpop.f32.mrf.mxu0
    %v4979 = vadd.f32 0.0, %v4978
    %v4980 = vpop.f32.mrf.mxu0
    %v4981 = vpop.f32.mrf.mxu0
    %4982 = vdwg.mxu0
    %v4983 = vpack.c.bf16 %v4854, %v4854
    %v4984 = vpack.c.bf16 %v4856, %v4856
    %v4985 = vpack.c.bf16 %v4895, %v4895
    %v4986 = vpack.c.bf16 %v4897, %v4897
    %v4987 = vpack.c.bf16 %v4936, %v4936
    %v4988 = vpack.c.bf16 %v4938, %v4938
    %v4989 = vpack.c.bf16 %v4977, %v4977
    %v4990 = vpack.c.bf16 %v4979, %v4979
    %v4991 = vld [vmem:[#allocation10] sm:$0xff]
    %v4992 = vld [vmem:[#allocation10 + $0x8] sm:$0xff]
    %v4993 = vld [vmem:[#allocation10 + $0x10] sm:$0xff]
    %v4994 = vld [vmem:[#allocation10 + $0x18] sm:$0xff]
    %v4995 = vld [vmem:[#allocation11] sm:$0x1]
    %v5000 = vunpack.c.l.b16 %v4991
    %v5001 = vunpack.c.h.b16 %v4991
    %v5002 = vunpack.c.l.b16 %v4992
    %v5003 = vunpack.c.h.b16 %v4992
    %v5004 = vunpack.c.l.b16 %v4993
    %v5005 = vunpack.c.h.b16 %v4993
    %v5006 = vunpack.c.l.b16 %v4994
    %v5007 = vunpack.c.h.b16 %v4994
    %v5008 = vpack.c.b16 %v5000, %v5000
    %v5009 = vpack.c.b16 %v5001, %v5001
    %v5010 = vpack.c.b16 %v5002, %v5002
    %v5011 = vpack.c.b16 %v5003, %v5003
    %v5012 = vpack.c.b16 %v5004, %v5004
    %v5013 = vpack.c.b16 %v5005, %v5005
    %v5014 = vpack.c.b16 %v5006, %v5006
    %v5015 = vpack.c.b16 %v5007, %v5007
    %5024 = vmatprep.subr.bf16.mxu0 0
    %5025 = vmatpush1.bf16.xpose.msra.mxu0 0
    %5026 = vmatprep.subr.bf16.mxu0 0
    %5027 = vmatpush1.bf16.xpose.msra.mxu0 0
    %5028 = vmatprep.subr.bf16.mxu0 0
    %5029 = vmatpush1.bf16.xpose.msra.mxu0 0
    %5030 = vmatprep.subr.bf16.mxu0 0
    %5031 = vmatpush1.bf16.xpose.msra.mxu0 0
    %5032 = vmatprep.subr.bf16.mxu0 0
    %5033 = vmatpush1.bf16.xpose.msra.mxu0 0
    %5034 = vmatprep.subr.bf16.mxu0 0
    %5035 = vmatpush1.bf16.xpose.msra.mxu0 0
    %5036 = vmatprep.subr.bf16.mxu0 0
    %5037 = vmatpush1.bf16.xpose.msra.mxu0 0
    %5038 = vmatprep.subr.bf16.mxu0 %v5009
    %5039 = vmatpush1.bf16.xpose.msra.mxu0 %v5008
    %5040 = vmatprep.subr.bf16.mxu0 0
    %5041 = vmatpush2.bf16.xpose.msra.mxu0 0
    %5042 = vmatprep.subr.bf16.mxu0 0
    %5043 = vmatpush2.bf16.xpose.msra.mxu0 0
    %5044 = vmatprep.subr.bf16.mxu0 0
    %5045 = vmatpush2.bf16.xpose.msra.mxu0 0
    %5046 = vmatprep.subr.bf16.mxu0 0
    %5047 = vmatpush2.bf16.xpose.msra.mxu0 0
    %5048 = vmatprep.subr.bf16.mxu0 0
    %5049 = vmatpush2.bf16.xpose.msra.mxu0 0
    %5050 = vmatprep.subr.bf16.mxu0 0
    %5051 = vmatpush2.bf16.xpose.msra.mxu0 0
    %5052 = vmatprep.subr.bf16.mxu0 0
    %5053 = vmatpush2.bf16.xpose.msra.mxu0 0
    %5054 = vmatprep.subr.bf16.mxu0 0
    %5055 = vmatpush2.bf16.xpose.msra.mxu0 0
    %5056 = vmatprep.mubr.bf16.mxu0 %v4984
    %5057 = vmatmul.mubr.bf16.gmra.mxu0 %v4983
    %v5058 = vpop.f32.mrf.mxu0
    %v5059 = vadd.f32 %v4995, %v5058
    %v5060 = vpop.f32.mrf.mxu0
    %v5061 = vpop.f32.mrf.mxu0
    %v5062 = vpop.f32.mrf.mxu0
    %5063 = vdwg.mxu0
    %5064 = vmatprep.subr.bf16.mxu0 0
    %5065 = vmatpush1.bf16.xpose.msra.mxu0 0
    %5066 = vmatprep.subr.bf16.mxu0 0
    %5067 = vmatpush1.bf16.xpose.msra.mxu0 0
    %5068 = vmatprep.subr.bf16.mxu0 0
    %5069 = vmatpush1.bf16.xpose.msra.mxu0 0
    %5070 = vmatprep.subr.bf16.mxu0 0
    %5071 = vmatpush1.bf16.xpose.msra.mxu0 0
    %5072 = vmatprep.subr.bf16.mxu0 0
    %5073 = vmatpush1.bf16.xpose.msra.mxu0 0
    %5074 = vmatprep.subr.bf16.mxu0 0
    %5075 = vmatpush1.bf16.xpose.msra.mxu0 0
    %5076 = vmatprep.subr.bf16.mxu0 0
    %5077 = vmatpush1.bf16.xpose.msra.mxu0 0
    %5078 = vmatprep.subr.bf16.mxu0 %v5011
    %5079 = vmatpush1.bf16.xpose.msra.mxu0 %v5010
    %5080 = vmatprep.subr.bf16.mxu0 0
    %5081 = vmatpush2.bf16.xpose.msra.mxu0 0
    %5082 = vmatprep.subr.bf16.mxu0 0
    %5083 = vmatpush2.bf16.xpose.msra.mxu0 0
    %5084 = vmatprep.subr.bf16.mxu0 0
    %5085 = vmatpush2.bf16.xpose.msra.mxu0 0
    %5086 = vmatprep.subr.bf16.mxu0 0
    %5087 = vmatpush2.bf16.xpose.msra.mxu0 0
    %5088 = vmatprep.subr.bf16.mxu0 0
    %5089 = vmatpush2.bf16.xpose.msra.mxu0 0
    %5090 = vmatprep.subr.bf16.mxu0 0
    %5091 = vmatpush2.bf16.xpose.msra.mxu0 0
    %5092 = vmatprep.subr.bf16.mxu0 0
    %5093 = vmatpush2.bf16.xpose.msra.mxu0 0
    %5094 = vmatprep.subr.bf16.mxu0 0
    %5095 = vmatpush2.bf16.xpose.msra.mxu0 0
    %5096 = vmatprep.mubr.bf16.mxu0 %v4986
    %5097 = vmatmul.mubr.bf16.gmra.mxu0 %v4985
    %v5098 = vpop.f32.mrf.mxu0
    %v5099 = vadd.f32 %v5059, %v5098
    %v5100 = vpop.f32.mrf.mxu0
    %v5101 = vpop.f32.mrf.mxu0
    %v5102 = vpop.f32.mrf.mxu0
    %5103 = vdwg.mxu0
    %5104 = vmatprep.subr.bf16.mxu0 0
    %5105 = vmatpush1.bf16.xpose.msra.mxu0 0
    %5106 = vmatprep.subr.bf16.mxu0 0
    %5107 = vmatpush1.bf16.xpose.msra.mxu0 0
    %5108 = vmatprep.subr.bf16.mxu0 0
    %5109 = vmatpush1.bf16.xpose.msra.mxu0 0
    %5110 = vmatprep.subr.bf16.mxu0 0
    %5111 = vmatpush1.bf16.xpose.msra.mxu0 0
    %5112 = vmatprep.subr.bf16.mxu0 0
    %5113 = vmatpush1.bf16.xpose.msra.mxu0 0
    %5114 = vmatprep.subr.bf16.mxu0 0
    %5115 = vmatpush1.bf16.xpose.msra.mxu0 0
    %5116 = vmatprep.subr.bf16.mxu0 0
    %5117 = vmatpush1.bf16.xpose.msra.mxu0 0
    %5118 = vmatprep.subr.bf16.mxu0 %v5013
    %5119 = vmatpush1.bf16.xpose.msra.mxu0 %v5012
    %5120 = vmatprep.subr.bf16.mxu0 0
    %5121 = vmatpush2.bf16.xpose.msra.mxu0 0
    %5122 = vmatprep.subr.bf16.mxu0 0
    %5123 = vmatpush2.bf16.xpose.msra.mxu0 0
    %5124 = vmatprep.subr.bf16.mxu0 0
    %5125 = vmatpush2.bf16.xpose.msra.mxu0 0
    %5126 = vmatprep.subr.bf16.mxu0 0
    %5127 = vmatpush2.bf16.xpose.msra.mxu0 0
    %5128 = vmatprep.subr.bf16.mxu0 0
    %5129 = vmatpush2.bf16.xpose.msra.mxu0 0
    %5130 = vmatprep.subr.bf16.mxu0 0
    %5131 = vmatpush2.bf16.xpose.msra.mxu0 0
    %5132 = vmatprep.subr.bf16.mxu0 0
    %5133 = vmatpush2.bf16.xpose.msra.mxu0 0
    %5134 = vmatprep.subr.bf16.mxu0 0
    %5135 = vmatpush2.bf16.xpose.msra.mxu0 0
    %5136 = vmatprep.mubr.bf16.mxu0 %v4988
    %5137 = vmatmul.mubr.bf16.gmra.mxu0 %v4987
    %v5138 = vpop.f32.mrf.mxu0
    %v5139 = vadd.f32 %v5099, %v5138
    %v5140 = vpop.f32.mrf.mxu0
    %v5141 = vpop.f32.mrf.mxu0
    %v5142 = vpop.f32.mrf.mxu0
    %5143 = vdwg.mxu0
    %5144 = vmatprep.subr.bf16.mxu0 0
    %5145 = vmatpush1.bf16.xpose.msra.mxu0 0
    %5146 = vmatprep.subr.bf16.mxu0 0
    %5147 = vmatpush1.bf16.xpose.msra.mxu0 0
    %5148 = vmatprep.subr.bf16.mxu0 0
    %5149 = vmatpush1.bf16.xpose.msra.mxu0 0
    %5150 = vmatprep.subr.bf16.mxu0 0
    %5151 = vmatpush1.bf16.xpose.msra.mxu0 0
    %5152 = vmatprep.subr.bf16.mxu0 0
    %5153 = vmatpush1.bf16.xpose.msra.mxu0 0
    %5154 = vmatprep.subr.bf16.mxu0 0
    %5155 = vmatpush1.bf16.xpose.msra.mxu0 0
    %5156 = vmatprep.subr.bf16.mxu0 0
    %5157 = vmatpush1.bf16.xpose.msra.mxu0 0
    %5158 = vmatprep.subr.bf16.mxu0 %v5015
    %5159 = vmatpush1.bf16.xpose.msra.mxu0 %v5014
    %5160 = vmatprep.subr.bf16.mxu0 0
    %5161 = vmatpush2.bf16.xpose.msra.mxu0 0
    %5162 = vmatprep.subr.bf16.mxu0 0
    %5163 = vmatpush2.bf16.xpose.msra.mxu0 0
    %5164 = vmatprep.subr.bf16.mxu0 0
    %5165 = vmatpush2.bf16.xpose.msra.mxu0 0
    %5166 = vmatprep.subr.bf16.mxu0 0
    %5167 = vmatpush2.bf16.xpose.msra.mxu0 0
    %5168 = vmatprep.subr.bf16.mxu0 0
    %5169 = vmatpush2.bf16.xpose.msra.mxu0 0
    %5170 = vmatprep.subr.bf16.mxu0 0
    %5171 = vmatpush2.bf16.xpose.msra.mxu0 0
    %5172 = vmatprep.subr.bf16.mxu0 0
    %5173 = vmatpush2.bf16.xpose.msra.mxu0 0
    %5174 = vmatprep.subr.bf16.mxu0 0
    %5175 = vmatpush2.bf16.xpose.msra.mxu0 0
    %5176 = vmatprep.mubr.bf16.mxu0 %v4990
    %5177 = vmatmul.mubr.bf16.gmra.mxu0 %v4989
    %v5178 = vpop.f32.mrf.mxu0
    %v5179 = vadd.f32 %v5139, %v5178
    %v5180 = vpop.f32.mrf.mxu0
    %v5181 = vpop.f32.mrf.mxu0
    %v5182 = vpop.f32.mrf.mxu0
    %5183 = vdwg.mxu0
    %5184 = vst.msk [vmem:[#allocation13] sm:$0x1] %vm4753, %v5179
    // Predicated region
    $region58: #{deit_attn1.1} parent=1 // pred_check
      _
    $region59: #{deit_attn1.1} parent=1 // pred_check_branch
      %5186 = sbr.rel (0) target = $region61
    $region60: #{deit_attn1.1} parent=1 // pred_region
      %s5188 = ssub.s32 16, 16
      %5189 = vsyncadd [#allocation4], %s5188
      %s5191 = sshll.u32 [#allocation13], 4
      %s5192 = int_to_ptr.vmem [resolvable:$true] %s5191
      %5194 = dma.vmem_to_hbm [thread:$0]  %s5192, 16, %s8, [#allocation4]
    $region61: #{deit_attn1.1} parent=1 // pred_fallthru
      _
    // Predicated region
    $region62: #{deit_attn1.1} parent=1 // pred_check
      _
    $region63: #{deit_attn1.1} parent=1 // pred_check_branch
      %5196 = sbr.rel (0) target = $region65
    $region64: #{deit_attn1.1} parent=1 // pred_region
      %5197 = dma.done [#allocation4], 16
    $region65: #{deit_attn1.1} parent=1 // pred_fallthru
      _
    %5198 = vsyncpa [#allocation3], 1
    %5199 = vsyncpa [#allocation6], 1
    %5200 = vsyncpa [#allocation9], 1
    %5201 = vsyncpa [#allocation12], 1
    %5202 = vsyncpa [#allocation4], 1

</llo_original>
